<compile_context>
chip_gen: v6e
topology: v6e:2x2x1
jax: 0.10.0
libtpu: 0.0.40
codegen_flags: <defaults>
</compile_context>

<pallas_src>
import functools

import jax
import jax.numpy as jnp
from jax import lax
from jax.experimental import pallas as pl
from jax.experimental.pallas import tpu as pltpu


def _round_up(x, m):
    return (x + m - 1) // m * m


# ---------------------------------------------------------------------------
# Fused kernel: per row band
#   conv (ONE matmul, K = 3*(W+2)*C) + bias + ReLU + pooled-sum accumulate,
#   and at the last band: scale + Linear head + store logits.
#
# x_ref    : (NB, H+2, (W+2)*C)     mean-shifted, zero-halo, lane-dense (bf16)
# wt_ref   : (3*(W+2)*C, W*F_pad)   block-Toeplitz conv weights, 1/std folded (bf16)
# bc_ref   : (1, W*F_pad)           conv bias tiled over W (f32)
# wfc_ref  : (F_pad, NC_pad)        FC weights (bf16)
# bfc_ref  : (1, NC_pad)            FC bias (f32)
# o_ref    : (NB, NC_pad)           logits (f32), lane-dense output block
# pool_acc : (NB, F_pad) f32        per-image pooled-sum accumulator (scratch)
# ---------------------------------------------------------------------------
def _fused_conv_pool_fc_kernel(x_ref, wt_ref, bc_ref, wfc_ref, bfc_ref,
                               o_ref, pool_acc, *, band, w, inv_hw):
    nb, _, wc2 = x_ref.shape              # wc2 = (W+2)*C
    f_pad = wfc_ref.shape[0]
    j = pl.program_id(1)

    @pl.when(j == 0)
    def _init():
        pool_acc[...] = jnp.zeros_like(pool_acc)

    # Rows [j*band, j*band + band + 2) = this band's outputs plus the +-1 row
    # halo (the array already carries the zero halo).
    row0 = pl.multiple_of(j * band, band)
    xw = x_ref[:, pl.ds(row0, band + 2), :]          # (NB, band+2, (W+2)*C)

    # K axis ordered (kh, w_in, c): three row-shifted copies of the lane-dense
    # band concatenated along lanes -> ONE matmul; the MXU accumulates all
    # nine 3x3 taps internally in f32 (no per-tap relayouts / f32 VPU passes).
    xcat = jnp.concatenate(
        [xw[:, kh:kh + band, :].reshape(nb * band, wc2) for kh in range(3)],
        axis=-1)                                      # (NB*band, 3*(W+2)*C)

    # Block-Toeplitz weights: columns are (w_out, f), so the result is the
    # whole band's conv output, lane-dense along W*F_pad.
    hidden = jnp.dot(xcat, wt_ref[...],
                     preferred_element_type=jnp.float32)   # (NB*band, W*F_pad)
    hidden = jnp.maximum(hidden + bc_ref[...], 0.0)        # bias + ReLU (f32)

    # Global-average-pool contribution of this band.  F_pad == 128*k is the
    # lane width, so the reshape is layout-free and the reduce is VPU adds.
    pool_acc[...] += jnp.sum(hidden.reshape(nb, band * w, f_pad), axis=1)

    @pl.when(j == pl.num_programs(1) - 1)
    def _finalize():
        pooled = (pool_acc[...] * inv_hw).astype(wfc_ref.dtype)   # (NB, F_pad)
        logits = jnp.dot(pooled, wfc_ref[...],
                         preferred_element_type=jnp.float32) + bfc_ref[...]
        o_ref[...] = logits.astype(o_ref.dtype)


def fused_forward(xp, wtoe, bconv_row, wfc_p, bfc_p, *, nb, band, h, w):
    n_pad, hp2, wc2 = xp.shape
    wf = wtoe.shape[1]                    # W * F_pad
    f_pad, nc_pad = wfc_p.shape
    n_bands = h // band

    # Rough VMEM budget: x block (double-buffered) + resident Toeplitz weights
    # + a few copies of the per-band f32 hidden tile.  Clamp so we stay well
    # inside v7x's 64 MiB physical VMEM; v5e/v6e (128 MiB) have headroom.
    x_blk = nb * hp2 * _round_up(wc2, 128) * 2
    wt_bytes = _round_up(3 * wc2, 16) * wf * 2
    hid = nb * band * wf * 4
    est = 2 * x_blk + wt_bytes + 3 * hid + (wf + 2 * f_pad * nc_pad) * 4
    vmem_limit = int(min(max(2 * est, 32 * 1024 * 1024), 48 * 1024 * 1024))

    kernel = functools.partial(_fused_conv_pool_fc_kernel,
                               band=band, w=w, inv_hw=1.0 / float(h * w))
    return pl.pallas_call(
        kernel,
        out_shape=jax.ShapeDtypeStruct((n_pad, nc_pad), jnp.float32),
        grid_spec=pltpu.PrefetchScalarGridSpec(
            num_scalar_prefetch=0,
            grid=(n_pad // nb, n_bands),
            in_specs=[
                # x: one lane-dense image block per batch tile; the block index
                # is constant over the band axis, so it is DMA'd once per tile.
                pl.BlockSpec((nb, hp2, wc2), lambda i, j: (i, 0, 0)),
                pl.BlockSpec((3 * wc2, wf), lambda i, j: (0, 0)),
                pl.BlockSpec((1, wf), lambda i, j: (0, 0)),
                pl.BlockSpec((f_pad, nc_pad), lambda i, j: (0, 0)),
                pl.BlockSpec((1, nc_pad), lambda i, j: (0, 0)),
            ],
            out_specs=pl.BlockSpec((nb, nc_pad), lambda i, j: (i, 0)),
            scratch_shapes=[pltpu.VMEM((nb, f_pad), jnp.float32)],
        ),
        compiler_params=pltpu.CompilerParams(
            dimension_semantics=("parallel", "arbitrary"),
            vmem_limit_bytes=vmem_limit,
        ),
    )(xp, wtoe, bconv_row, wfc_p, bfc_p)


# ---------------------------------------------------------------------------
# Full forward pass = ModelTransformWrapper.forward
# ---------------------------------------------------------------------------
def model_transform_wrapper_forward(x_nchw, params, *, nb=8, band=None,
                                    compute_dtype=jnp.bfloat16):
    """x_nchw: (N, C, H, W) float32, as the PyTorch module would receive."""
    mean, std = params["mean"], params["std"]
    wconv, bconv = params["wconv"], params["bconv"]
    wfc, bfc = params["wfc"], params["bfc"]

    n, c, h, w = x_nchw.shape
    f = wconv.shape[0]
    nc = wfc.shape[1]
    f_pad = _round_up(f, 128)
    nc_pad = _round_up(nc, 128)
    if band is None:
        band = 8 if h % 8 == 0 else h          # conv output rows per grid step
    assert h % band == 0, "band must divide H"
    # >= 2 batch tiles on the "parallel" axis so v7x's two TensorCores both work.
    n_pad = max(_round_up(n, nb), 2 * nb)

    # --- fold the transform's 1/std into the conv weights (no normalize pass),
    #     then expand to a block-Toeplitz matrix over W so the conv is a single
    #     lane-dense matmul per band. ---
    inv_std = (1.0 / std).astype(jnp.float32)
    w_hwio = jnp.transpose(wconv, (2, 3, 1, 0)) * inv_std[None, None, :, None]
    w_hwio = jnp.pad(w_hwio, ((0, 0), (0, 0), (0, 0), (0, f_pad - f)))  # (3,3,C,F_pad)
    kw_i = jnp.arange(3)[:, None, None]
    w_in = jnp.arange(w + 2)[None, :, None]
    w_out = jnp.arange(w)[None, None, :]
    shift = (w_in == w_out + kw_i).astype(jnp.float32)                 # (3, W+2, W)
    # wtoe[(kh, w_in, c), (w_out, f)] = w_hwio[kh, kw, c, f]  iff  w_in == w_out + kw
    wtoe = jnp.einsum("kio,hkcf->hicof", shift, w_hwio)                # (3, W+2, C, W, F_pad)
    wtoe = wtoe.reshape(3 * (w + 2) * c, w * f_pad).astype(compute_dtype)

    bconv_row = jnp.tile(jnp.pad(bconv, (0, f_pad - f)), (w,))
    bconv_row = bconv_row.reshape(1, w * f_pad).astype(jnp.float32)
    wfc_p = jnp.pad(wfc, ((0, f_pad - f), (0, nc_pad - nc))).astype(compute_dtype)
    bfc_p = jnp.pad(bfc, (0, nc_pad - nc)).reshape(1, nc_pad).astype(jnp.float32)

    # --- glue (one fused XLA pass): NCHW->NHWC with the mean shift folded in,
    #     zero halo pad (exactly matches the reference SAME conv when the 1/std
    #     is folded into the weights), lane-dense repack, bf16 cast, batch pad.
    x = jnp.transpose(x_nchw, (0, 2, 3, 1)) - mean.reshape(1, 1, 1, c)
    xp = jnp.pad(x, ((0, n_pad - n), (1, 1), (1, 1), (0, 0)))
    xp = xp.reshape(n_pad, h + 2, (w + 2) * c).astype(compute_dtype)

    logits = fused_forward(xp, wtoe, bconv_row, wfc_p, bfc_p,
                           nb=nb, band=band, h=h, w=w)
    return logits[:n, :nc]


# ---------------------------------------------------------------------------
# Pure-JAX f32 reference for verification
# ---------------------------------------------------------------------------
def reference_forward(x_nchw, params):
    mean, std = params["mean"], params["std"]
    wconv, bconv = params["wconv"], params["bconv"]
    wfc, bfc = params["wfc"], params["bfc"]
    x = jnp.transpose(x_nchw, (0, 2, 3, 1))  # NHWC
    xn = (x - mean.reshape(1, 1, 1, -1)) / std.reshape(1, 1, 1, -1)
    w_hwio = jnp.transpose(wconv, (2, 3, 1, 0))  # (3,3,C,F)
    y = lax.conv_general_dilated(
        xn, w_hwio, window_strides=(1, 1), padding="SAME",
        dimension_numbers=("NHWC", "HWIO", "NHWC"),
    ) + bconv.reshape(1, 1, 1, -1)
    y = jnp.maximum(y, 0.0)
    pooled = jnp.mean(y, axis=(1, 2))  # (N, F)
    return pooled @ wfc + bfc.reshape(1, -1)


if __name__ == "__main__":
    N, C, H, W = 2, 4, 16, 16
    F, NUM_CLASSES = 32, 16

    key = jax.random.PRNGKey(0)
    kx, kw1, kb1, kw2, kb2 = jax.random.split(key, 5)

    x = jax.random.normal(kx, (N, C, H, W), dtype=jnp.float32)

    params = {
        "mean": jnp.array([0.5, 0.4, 0.3, 0.2], dtype=jnp.float32),
        "std": jnp.array([0.25, 0.25, 0.20, 0.20], dtype=jnp.float32),
        "wconv": 0.1 * jax.random.normal(kw1, (F, C, 3, 3), dtype=jnp.float32),
        "bconv": 0.1 * jax.random.normal(kb1, (F,), dtype=jnp.float32),
        "wfc": 0.1 * jax.random.normal(kw2, (F, NUM_CLASSES), dtype=jnp.float32),
        "bfc": 0.1 * jax.random.normal(kb2, (NUM_CLASSES,), dtype=jnp.float32),
    }

    out = jax.jit(model_transform_wrapper_forward)(x, params)
    out = jax.block_until_ready(out)

    ref = reference_forward(x, params)
    assert out.shape == (N, NUM_CLASSES)
    assert jnp.allclose(out, ref, rtol=2e-2, atol=2e-2), "mismatch vs reference"

    print("KERNEL_OK")
</pallas_src>

<mosaic_0001>
module attributes {stable_mosaic.version = 11 : i64} {
  func.func @_fused_conv_pool_fc_kernel(%arg0: i32, %arg1: i32, %arg2: memref<8x18x72xbf16, #tpu.memory_space<vmem>>, %arg3: memref<216x2048xbf16, #tpu.memory_space<vmem>>, %arg4: memref<1x2048xf32, #tpu.memory_space<vmem>>, %arg5: memref<128x128xbf16, #tpu.memory_space<vmem>>, %arg6: memref<1x128xf32, #tpu.memory_space<vmem>>, %arg7: memref<8x128xf32, #tpu.memory_space<vmem>>, %arg8: memref<8x128xf32, #tpu.memory_space<vmem>>) attributes {dimension_semantics = [#tpu.dimension_semantics<parallel>, #tpu.dimension_semantics<arbitrary>], iteration_bounds = array<i64: 2, 2>, scalar_prefetch = 0 : i64, scratch_operands = 1 : i64, tpu.core_type = #tpu.core_type<tc>, window_params = [{transform_indices = @transform_0, window_bounds = array<i64: 8, 18, 72>}, {pipeline_mode = #tpu.pipeline_mode<synchronous>, transform_indices = @transform_1, window_bounds = array<i64: 216, 2048>}, {pipeline_mode = #tpu.pipeline_mode<synchronous>, transform_indices = @transform_2, window_bounds = array<i64: 1, 2048>}, {pipeline_mode = #tpu.pipeline_mode<synchronous>, transform_indices = @transform_3, window_bounds = array<i64: 128, 128>}, {pipeline_mode = #tpu.pipeline_mode<synchronous>, transform_indices = @transform_4, window_bounds = array<i64: 1, 128>}, {transform_indices = @transform_5, window_bounds = array<i64: 8, 128>}]} {
    %c0_i32 = arith.constant 0 : i32
    %0 = arith.cmpi eq, %arg1, %c0_i32 : i32
    %1 = arith.extui %0 : i1 to i32
    %c0_i32_0 = arith.constant 0 : i32
    %2 = arith.cmpi ne, %1, %c0_i32_0 : i32
    scf.if %2 {
      %cst_13 = arith.constant 0.000000e+00 : f32
      %29 = vector.broadcast %cst_13 : f32 to vector<8x128xf32>
      %c0_14 = arith.constant 0 : index
      %c0_15 = arith.constant 0 : index
      %30 = vector.load %arg8[%c0_14, %c0_15] : memref<8x128xf32, #tpu.memory_space<vmem>>, vector<8x128xf32>
      tpu.vector_store %arg8[%c0_14, %c0_15], %29 {strides = array<i32>} : memref<8x128xf32, #tpu.memory_space<vmem>>, vector<8x128xf32>,
    } else {
    }
    %c8_i32 = arith.constant 8 : i32
    %3 = arith.muli %arg1, %c8_i32 : i32
    %4 = tpu.assume_multiple %3, 8 : i32
    %c0 = arith.constant 0 : index
    %5 = arith.index_cast %4 : i32 to index
    %c0_1 = arith.constant 0 : index
    %6 = vector.load %arg2[%c0, %5, %c0_1] : memref<8x18x72xbf16, #tpu.memory_space<vmem>>, vector<8x10x72xbf16>
    %7 = vector.extract_strided_slice %6 {offsets = [0, 0, 0], sizes = [8, 8, 72], strides = [1, 1, 1]} : vector<8x10x72xbf16> to vector<8x8x72xbf16>
    %8 = vector.shape_cast %7 : vector<8x8x72xbf16> to vector<64x72xbf16>
    %9 = vector.extract_strided_slice %6 {offsets = [0, 1, 0], sizes = [8, 8, 72], strides = [1, 1, 1]} : vector<8x10x72xbf16> to vector<8x8x72xbf16>
    %10 = vector.shape_cast %9 : vector<8x8x72xbf16> to vector<64x72xbf16>
    %11 = vector.extract_strided_slice %6 {offsets = [0, 2, 0], sizes = [8, 8, 72], strides = [1, 1, 1]} : vector<8x10x72xbf16> to vector<8x8x72xbf16>
    %12 = vector.shape_cast %11 : vector<8x8x72xbf16> to vector<64x72xbf16>
    %13 = tpu.concatenate %8, %10, %12 in 1 : vector<64x72xbf16>, vector<64x72xbf16>, vector<64x72xbf16> -> vector<64x216xbf16>
    %c0_2 = arith.constant 0 : index
    %c0_3 = arith.constant 0 : index
    %14 = vector.load %arg3[%c0_2, %c0_3] : memref<216x2048xbf16, #tpu.memory_space<vmem>>, vector<216x2048xbf16>
    %cst = arith.constant dense<0.000000e+00> : vector<64x2048xf32>
    %15 = tpu.matmul %13, %14, %cst {dimension_numbers = #tpu.dot_dimension_numbers<[1], [0], [0], [1], [0, 0, 1, 1], [], []>} : vector<64x216xbf16>, vector<216x2048xbf16>, vector<64x2048xf32> -> vector<64x2048xf32>
    %c0_4 = arith.constant 0 : index
    %c0_5 = arith.constant 0 : index
    %16 = vector.load %arg4[%c0_4, %c0_5] : memref<1x2048xf32, #tpu.memory_space<vmem>>, vector<1x2048xf32>
    %17 = vector.broadcast %16 : vector<1x2048xf32> to vector<64x2048xf32>
    %18 = arith.addf %15, %17 : vector<64x2048xf32>
    %cst_6 = arith.constant 0.000000e+00 : f32
    %19 = vector.broadcast %cst_6 : f32 to vector<64x2048xf32>
    %20 = arith.maximumf %18, %19 : vector<64x2048xf32>
    %c0_7 = arith.constant 0 : index
    %c0_8 = arith.constant 0 : index
    %21 = vector.load %arg8[%c0_7, %c0_8] : memref<8x128xf32, #tpu.memory_space<vmem>>, vector<8x128xf32>
    %22 = vector.shape_cast %20 : vector<64x2048xf32> to vector<8x128x128xf32>
    %cst_9 = arith.constant dense<0.000000e+00> : vector<8x128xf32>
    %23 = vector.multi_reduction <add>, %22, %cst_9 [1] : vector<8x128x128xf32> to vector<8x128xf32>
    %24 = arith.addf %21, %23 : vector<8x128xf32>
    %c0_10 = arith.constant 0 : index
    %c0_11 = arith.constant 0 : index
    %25 = vector.load %arg8[%c0_10, %c0_11] : memref<8x128xf32, #tpu.memory_space<vmem>>, vector<8x128xf32>
    tpu.vector_store %arg8[%c0_10, %c0_11], %24 {strides = array<i32>} : memref<8x128xf32, #tpu.memory_space<vmem>>, vector<8x128xf32>,
    %c1_i32 = arith.constant 1 : i32
    %26 = arith.cmpi eq, %arg1, %c1_i32 : i32
    %27 = arith.extui %26 : i1 to i32
    %c0_i32_12 = arith.constant 0 : i32
    %28 = arith.cmpi ne, %27, %c0_i32_12 : i32
    scf.if %28 {
      %c0_13 = arith.constant 0 : index
      %c0_14 = arith.constant 0 : index
      %29 = vector.load %arg8[%c0_13, %c0_14] : memref<8x128xf32, #tpu.memory_space<vmem>>, vector<8x128xf32>
      %cst_15 = arith.constant 3.906250e-03 : f32
      %30 = vector.broadcast %cst_15 : f32 to vector<8x128xf32>
      %31 = arith.mulf %29, %30 : vector<8x128xf32>
      %32 = arith.truncf %31 : vector<8x128xf32> to vector<8x128xbf16>
      %c0_16 = arith.constant 0 : index
      %c0_17 = arith.constant 0 : index
      %33 = vector.load %arg5[%c0_16, %c0_17] : memref<128x128xbf16, #tpu.memory_space<vmem>>, vector<128x128xbf16>
      %cst_18 = arith.constant dense<0.000000e+00> : vector<8x128xf32>
      %34 = tpu.matmul %32, %33, %cst_18 {dimension_numbers = #tpu.dot_dimension_numbers<[1], [0], [0], [1], [0, 0, 1, 1], [], []>} : vector<8x128xbf16>, vector<128x128xbf16>, vector<8x128xf32> -> vector<8x128xf32>
      %c0_19 = arith.constant 0 : index
      %c0_20 = arith.constant 0 : index
      %35 = vector.load %arg6[%c0_19, %c0_20] : memref<1x128xf32, #tpu.memory_space<vmem>>, vector<1x128xf32>
      %36 = vector.broadcast %35 : vector<1x128xf32> to vector<8x128xf32>
      %37 = arith.addf %34, %36 : vector<8x128xf32>
      %c0_21 = arith.constant 0 : index
      %c0_22 = arith.constant 0 : index
      %38 = vector.load %arg7[%c0_21, %c0_22] : memref<8x128xf32, #tpu.memory_space<vmem>>, vector<8x128xf32>
      tpu.vector_store %arg7[%c0_21, %c0_22], %37 {strides = array<i32>} : memref<8x128xf32, #tpu.memory_space<vmem>>, vector<8x128xf32>,
    } else {
    }
    return
  }
  func.func @transform_0(%arg0: i32, %arg1: i32) -> (i32, i32, i32) {
    %c0_i32 = arith.constant 0 : i32
    %c0_i32_0 = arith.constant 0 : i32
    %c0_i32_1 = arith.constant 0 : i32
    return %arg0, %c0_i32, %c0_i32_0 : i32, i32, i32
  }
  func.func @transform_1(%arg0: i32, %arg1: i32) -> (i32, i32) {
    %c0_i32 = arith.constant 0 : i32
    %c0_i32_0 = arith.constant 0 : i32
    %c0_i32_1 = arith.constant 0 : i32
    return %c0_i32, %c0_i32_0 : i32, i32
  }
  func.func @transform_2(%arg0: i32, %arg1: i32) -> (i32, i32) {
    %c0_i32 = arith.constant 0 : i32
    %c0_i32_0 = arith.constant 0 : i32
    %c0_i32_1 = arith.constant 0 : i32
    return %c0_i32, %c0_i32_0 : i32, i32
  }
  func.func @transform_3(%arg0: i32, %arg1: i32) -> (i32, i32) {
    %c0_i32 = arith.constant 0 : i32
    %c0_i32_0 = arith.constant 0 : i32
    %c0_i32_1 = arith.constant 0 : i32
    return %c0_i32, %c0_i32_0 : i32, i32
  }
  func.func @transform_4(%arg0: i32, %arg1: i32) -> (i32, i32) {
    %c0_i32 = arith.constant 0 : i32
    %c0_i32_0 = arith.constant 0 : i32
    %c0_i32_1 = arith.constant 0 : i32
    return %c0_i32, %c0_i32_0 : i32, i32
  }
  func.func @transform_5(%arg0: i32, %arg1: i32) -> (i32, i32) {
    %c0_i32 = arith.constant 0 : i32
    %c0_i32_0 = arith.constant 0 : i32
    return %arg0, %c0_i32 : i32, i32
  }
}

</mosaic_0001>

<llo_original>
// kernel: tile.8
$region0: #{tile.8}
  #allocation0 [shape = 's32[1]{0}', space=sflag, size = 0x4, scoped, tag = 'scoped memory for tile.8']
  %s0 = inlined_call_operand.vmem [shape: f32[128], index: 0, kind: input, shape index: {}]
  %s1 = inlined_call_operand.vmem [shape: f32[16,128], index: 1, kind: output, shape index: {}]
  // Predicated region
  $region2: #{tile.8} parent=0 // pred_check
    _
  $region3: #{tile.8} parent=0 // pred_check_branch
    %3 = sbr.rel (0) target = $region5
  $region4: #{tile.8} parent=0 // pred_region
    _
  $region5: #{tile.8} parent=0 // pred_fallthru
    _
  %v4 = vld [vmem:[%s0] ss:$0 sm:$0xff]
  %5 = vst [vmem:[%s1] sm:$0xff] %v4
  %s6 = scalar_lea.vmem %s1, 8
  %7 = vst [vmem:[%s6] sm:$0xff] %v4

// kernel: model_transform_wrapper_forward.1
$region0: #{model_transform_wrapper_forward.1}
  #allocation0 [shape = 'u32[]', space=smem, size = 0x4, offset = 0x4, fixed_abs, tag = 'smem constant byte address 0x4 - core index']
  #allocation1 [shape = 'u32[144,128]{1,0:T(1,128)}', space=vmem, size = 0x12000, scoped, tag = 'internal scratch']
  #allocation2 [shape = 'f32[8,128]{1,0:T(8,128)}', space=vmem, size = 0x1000, scoped, tag = 'scratch operand']
  %s0 = inlined_call_operand.vmem [shape: bf16[16,18,72], index: 0, kind: input, shape index: {}]
  %s1 = inlined_call_operand.vmem [shape: bf16[216,2048], index: 1, kind: input, shape index: {}]
  %s2 = inlined_call_operand.vmem [shape: f32[1,2048], index: 2, kind: input, shape index: {}]
  %s3 = inlined_call_operand.vmem [shape: bf16[128,128], index: 3, kind: input, shape index: {}]
  %s4 = inlined_call_operand.vmem [shape: f32[1,128], index: 4, kind: input, shape index: {}]
  %s5 = inlined_call_operand.vmem [shape: f32[16,128], index: 5, kind: output, shape index: {}]
  %s6 = sld [smem:[#allocation0]]
  $region61: #{model_transform_wrapper_forward.1} parent=0
    _
  %s8 = ssub.s32 1, %s6
  %s9 = scalar_select 0, %s8, %s6
  loop: start=0, step=1, limit=6
  $region2: #{model_transform_wrapper_forward.1} parent=0 // loop_pre_header
    _
  $region3: #{model_transform_wrapper_forward.1} parent=0 // loop_header
    %s11 = sphi 0, %s15
    %p12 = scmp.ge.s32.totalorder %s11, 6
    %s18 = sphi 0, %s30
    %s19 = sphi 0, %s26
    %s20 = sphi 0, %s18
    %s21 = sphi 0, %s19
    %s22 = sphi 0, %s20
    %s23 = sphi 0, %s21
    %s33 = sphi 0, %s35
    %s36 = sphi 0, %s33
    %s37 = sphi 0, %s36
    %s53 = sphi 0, %s37
    %s57 = sphi 0, %s57
    %s59 = sphi 0, %s57
    %s60 = sphi 0, %s59
    %s74 = sphi 0, %s60
    %s78 = sphi 0, %s78
    %s80 = sphi 0, %s78
    %s81 = sphi 0, %s80
    %s95 = sphi 0, %s81
    %s99 = sphi 0, %s99
    %s101 = sphi 0, %s99
    %s102 = sphi 0, %s101
    %s116 = sphi 0, %s102
    %s120 = sphi 0, %s120
    %s122 = sphi 0, %s120
    %s123 = sphi 0, %s122
    %s137 = sphi 0, %s123
    %s143 = sphi 0, %s145
    %s146 = sphi 0, %s143
    %s147 = sphi 0, %s146
    %s163 = sphi 0, %s147
  $region4: #{model_transform_wrapper_forward.1} parent=0 // loop_header_branch
    %14 = sbr.rel (%p12) target = $region8
  $region5: #{model_transform_wrapper_forward.1} parent=0 // loop_body
    %s16 = ssub.s32 %s11, 1
    %s17 = ssub.s32 %s11, 2
    %s24 = sadd.s32 1, %s19
    %p25 = scmp.ge.s32.totalorder %s24, 2
    %s26 = scalar_select %p25, 0, %s24
    %s27 = sadd.s32 1, %s18
    %s28 = scalar_select %p25, %s27, %s18
    %p29 = scmp.ge.s32.totalorder %s28, 2
    %s30 = scalar_select %p29, 0, %s28
    %s31 = ssub.s32 %s18, %s30
    %p32 = scmp.eq.s32.totalorder %s31, 0
    %s34 = sadd.s32 %s33, 1
    %s35 = scalar_select %p32, %s33, %s34
    %p38 = pneg %p32
    %p39 = scmp.eq.s32.totalorder %s11, 3
    %p40 = por %p38, %p39
    %p41 = scmp.ne.s32.totalorder %s33, %s36
    %p42 = scmp.eq.s32.totalorder %s11, 0
    %p43 = por %p41, %p42
    %p44 = scmp.ne.s32.totalorder %s33, %s36
    %p45 = scmp.eq.s32.totalorder %s16, 3
    %p46 = por %p44, %p45
    %p47 = scmp.ne.s32.totalorder %s36, %s37
    %p48 = scmp.eq.s32.totalorder %s16, 0
    %p49 = por %p47, %p48
    %p50 = scmp.ne.s32.totalorder %s36, %s37
    %p51 = scmp.eq.s32.totalorder %s17, 3
    %p52 = por %p50, %p51
    %p54 = scmp.ne.s32.totalorder %s37, %s53
    %p55 = scmp.eq.s32.totalorder %s17, 0
    %p56 = por %p54, %p55
    %s58 = sadd.s32 %s57, 1
    %p61 = scmp.eq.s32.totalorder %s11, 3
    %p62 = scmp.ne.s32.totalorder %s57, %s59
    %p63 = scmp.eq.s32.totalorder %s11, 0
    %p64 = por %p62, %p63
    %p65 = scmp.ne.s32.totalorder %s57, %s59
    %p66 = scmp.eq.s32.totalorder %s16, 3
    %p67 = por %p65, %p66
    %p68 = scmp.ne.s32.totalorder %s59, %s60
    %p69 = scmp.eq.s32.totalorder %s16, 0
    %p70 = por %p68, %p69
    %p71 = scmp.ne.s32.totalorder %s59, %s60
    %p72 = scmp.eq.s32.totalorder %s17, 3
    %p73 = por %p71, %p72
    %p75 = scmp.ne.s32.totalorder %s60, %s74
    %p76 = scmp.eq.s32.totalorder %s17, 0
    %p77 = por %p75, %p76
    %s79 = sadd.s32 %s78, 1
    %p82 = scmp.eq.s32.totalorder %s11, 3
    %p83 = scmp.ne.s32.totalorder %s78, %s80
    %p84 = scmp.eq.s32.totalorder %s11, 0
    %p85 = por %p83, %p84
    %p86 = scmp.ne.s32.totalorder %s78, %s80
    %p87 = scmp.eq.s32.totalorder %s16, 3
    %p88 = por %p86, %p87
    %p89 = scmp.ne.s32.totalorder %s80, %s81
    %p90 = scmp.eq.s32.totalorder %s16, 0
    %p91 = por %p89, %p90
    %p92 = scmp.ne.s32.totalorder %s80, %s81
    %p93 = scmp.eq.s32.totalorder %s17, 3
    %p94 = por %p92, %p93
    %p96 = scmp.ne.s32.totalorder %s81, %s95
    %p97 = scmp.eq.s32.totalorder %s17, 0
    %p98 = por %p96, %p97
    %s100 = sadd.s32 %s99, 1
    %p103 = scmp.eq.s32.totalorder %s11, 3
    %p104 = scmp.ne.s32.totalorder %s99, %s101
    %p105 = scmp.eq.s32.totalorder %s11, 0
    %p106 = por %p104, %p105
    %p107 = scmp.ne.s32.totalorder %s99, %s101
    %p108 = scmp.eq.s32.totalorder %s16, 3
    %p109 = por %p107, %p108
    %p110 = scmp.ne.s32.totalorder %s101, %s102
    %p111 = scmp.eq.s32.totalorder %s16, 0
    %p112 = por %p110, %p111
    %p113 = scmp.ne.s32.totalorder %s101, %s102
    %p114 = scmp.eq.s32.totalorder %s17, 3
    %p115 = por %p113, %p114
    %p117 = scmp.ne.s32.totalorder %s102, %s116
    %p118 = scmp.eq.s32.totalorder %s17, 0
    %p119 = por %p117, %p118
    %s121 = sadd.s32 %s120, 1
    %p124 = scmp.eq.s32.totalorder %s11, 3
    %p125 = scmp.ne.s32.totalorder %s120, %s122
    %p126 = scmp.eq.s32.totalorder %s11, 0
    %p127 = por %p125, %p126
    %p128 = scmp.ne.s32.totalorder %s120, %s122
    %p129 = scmp.eq.s32.totalorder %s16, 3
    %p130 = por %p128, %p129
    %p131 = scmp.ne.s32.totalorder %s122, %s123
    %p132 = scmp.eq.s32.totalorder %s16, 0
    %p133 = por %p131, %p132
    %p134 = scmp.ne.s32.totalorder %s122, %s123
    %p135 = scmp.eq.s32.totalorder %s17, 3
    %p136 = por %p134, %p135
    %p138 = scmp.ne.s32.totalorder %s123, %s137
    %p139 = scmp.eq.s32.totalorder %s17, 0
    %p140 = por %p138, %p139
    %s141 = ssub.s32 %s18, %s30
    %p142 = scmp.eq.s32.totalorder %s141, 0
    %s144 = sadd.s32 %s143, 1
    %s145 = scalar_select %p142, %s143, %s144
    %p148 = pneg %p142
    %p149 = scmp.eq.s32.totalorder %s11, 3
    %p150 = por %p148, %p149
    %p151 = scmp.ne.s32.totalorder %s143, %s146
    %p152 = scmp.eq.s32.totalorder %s11, 0
    %p153 = por %p151, %p152
    %p154 = scmp.ne.s32.totalorder %s143, %s146
    %p155 = scmp.eq.s32.totalorder %s16, 3
    %p156 = por %p154, %p155
    %p157 = scmp.ne.s32.totalorder %s146, %s147
    %p158 = scmp.eq.s32.totalorder %s16, 0
    %p159 = por %p157, %p158
    %p160 = scmp.ne.s32.totalorder %s146, %s147
    %p161 = scmp.eq.s32.totalorder %s17, 3
    %p162 = por %p160, %p161
    %p164 = scmp.ne.s32.totalorder %s147, %s163
    %p165 = scmp.eq.s32.totalorder %s17, 0
    %p166 = por %p164, %p165
    %p167 = scmp.le.s32.totalorder 1, %s11
    %p168 = scmp.lt.s32.totalorder %s11, 5
    %p169 = pnand %p167, %p168
    %p170 = pneg %p169
    // Predicated region
    $region9: #{model_transform_wrapper_forward.1} parent=5 // pred_check
      _
    $region10: #{model_transform_wrapper_forward.1} parent=5 // pred_check_branch
      %172 = sbr.rel (%p169) target = $region12
    $region11: #{model_transform_wrapper_forward.1} parent=5 // pred_region
      %s173 = ssub.s32 %s11, 1
      // Predicated region
      $region13: #{model_transform_wrapper_forward.1} parent=11 // pred_check
        %p174 = pneg %p70
      $region14: #{model_transform_wrapper_forward.1} parent=11 // pred_check_branch
        %176 = sbr.rel (%p174) target = $region16
      $region15: #{model_transform_wrapper_forward.1} parent=11 // pred_region
        _
      $region16: #{model_transform_wrapper_forward.1} parent=11 // pred_fallthru
        _
      // Predicated region
      $region17: #{model_transform_wrapper_forward.1} parent=11 // pred_check
        %p177 = pneg %p91
      $region18: #{model_transform_wrapper_forward.1} parent=11 // pred_check_branch
        %179 = sbr.rel (%p177) target = $region20
      $region19: #{model_transform_wrapper_forward.1} parent=11 // pred_region
        _
      $region20: #{model_transform_wrapper_forward.1} parent=11 // pred_fallthru
        _
      // Predicated region
      $region21: #{model_transform_wrapper_forward.1} parent=11 // pred_check
        %p180 = pneg %p112
      $region22: #{model_transform_wrapper_forward.1} parent=11 // pred_check_branch
        %182 = sbr.rel (%p180) target = $region24
      $region23: #{model_transform_wrapper_forward.1} parent=11 // pred_region
        _
      $region24: #{model_transform_wrapper_forward.1} parent=11 // pred_fallthru
        _
      // Predicated region
      $region25: #{model_transform_wrapper_forward.1} parent=11 // pred_check
        %p183 = pneg %p133
      $region26: #{model_transform_wrapper_forward.1} parent=11 // pred_check_branch
        %185 = sbr.rel (%p183) target = $region28
      $region27: #{model_transform_wrapper_forward.1} parent=11 // pred_region
        _
      $region28: #{model_transform_wrapper_forward.1} parent=11 // pred_fallthru
        _
    $region12: #{model_transform_wrapper_forward.1} parent=5 // pred_fallthru
      _
    %p186 = scmp.lt.s32.totalorder %s11, 4
    // Predicated region
    $region29: #{model_transform_wrapper_forward.1} parent=5 // pred_check
      %p187 = pneg %p186
    $region30: #{model_transform_wrapper_forward.1} parent=5 // pred_check_branch
      %189 = sbr.rel (%p187) target = $region32
    $region31: #{model_transform_wrapper_forward.1} parent=5 // pred_region
      // Predicated region
      $region33: #{model_transform_wrapper_forward.1} parent=31 // pred_check
        %p190 = pneg %p43
      $region34: #{model_transform_wrapper_forward.1} parent=31 // pred_check_branch
        %192 = sbr.rel (%p190) target = $region36
      $region35: #{model_transform_wrapper_forward.1} parent=31 // pred_region
        %s193 = smul.u32 8, %s18
        %p194 = scmp.lt.s32.totalorder %s193, 15
        %s195 = scalar_select %p194, %s193, 15
        %s196 = smul.addr %s195, 3
        %s197 = smul.addr %s196, 4
        %s198 = scalar_lea.vmem %s0, %s197
        %s199 = smul.u32 8, %s18
      $region36: #{model_transform_wrapper_forward.1} parent=31 // pred_fallthru
        _
    $region32: #{model_transform_wrapper_forward.1} parent=5 // pred_fallthru
      _
    %p200 = scmp.le.s32.totalorder 1, %s11
    %p201 = scmp.lt.s32.totalorder %s11, 5
    %p202 = pnand %p200, %p201
    %p203 = pneg %p202
    // Predicated region
    $region37: #{model_transform_wrapper_forward.1} parent=5 // pred_check
      _
    $region38: #{model_transform_wrapper_forward.1} parent=5 // pred_check_branch
      %205 = sbr.rel (%p202) target = $region40
    $region39: #{model_transform_wrapper_forward.1} parent=5 // pred_region
      %s206 = ssub.s32 %s11, 1
      %s207 = smul.u32 8, %s20
      %p208 = scmp.lt.s32.totalorder %s207, 15
      %s209 = scalar_select %p208, %s207, 15
      %s210 = smul.addr %s209, 3
      %s211 = smul.addr %s210, 4
      %s212 = scalar_lea.vmem %s0, %s211
      %p213 = pneg %p49
      %p214 = pneg %p46
      %p215 = pneg %p70
      %p216 = pneg %p67
      %p217 = pneg %p91
      %p218 = pneg %p88
      %p219 = pneg %p112
      %p220 = pneg %p109
      %p221 = pneg %p133
      %p222 = pneg %p130
      %p223 = pneg %p159
      %p224 = pneg %p156
      %p225 = scmp.lt.s32.totalorder %s20, 1
      %s226 = scalar_select %p225, %s20, 1
      %s227 = smul.addr %s226, 8
      %s228 = scalar_lea.vmem %s5, %s227
      %s229 = smul.u32 8, %s20
      %p230 = scmp.lt.s32.totalorder %s229, 15
      %s231 = scalar_select %p230, %s229, 15
      %s232 = smul.addr %s231, 3
      %s233 = smul.addr %s232, 4
      %s234 = scalar_lea.vmem %s0, %s233
      %s235 = smul.u32 8, %s20
      %p236 = scmp.lt.s32.totalorder %s20, 1
      %s237 = scalar_select %p236, %s20, 1
      %s238 = smul.addr %s237, 8
      %s239 = scalar_lea.vmem %s5, %s238
      %p241 = scmp.eq.s32.totalorder %s21, 0
      // Predicated region
      $region41: #{model_transform_wrapper_forward.1} parent=39 // pred_check
        %p242 = pneg %p241
      $region42: #{model_transform_wrapper_forward.1} parent=39 // pred_check_branch
        %244 = sbr.rel (%p242) target = $region44
      $region43: #{model_transform_wrapper_forward.1} parent=39 // pred_region
        %245 = vst [vmem:[#allocation2] sm:$0xff] 0.0
      $region44: #{model_transform_wrapper_forward.1} parent=39 // pred_fallthru
        _
      %s246 = smul.u32 %s21, 8
      %s247 = sshra.s32 %s246, 3
      %s248 = sand.u32 %s246, 7
      %s249 = smul.addr %s247, 4
      %s250 = scalar_lea.vmem %s234, %s249
      %v251 = vld [vmem:[%s250] sm:$0xf]
      %v252 = vld [vmem:[%s250 + $0x4] sm:$0x1]
      %v253 = vld [vmem:[%s250 + $0xc] sm:$0xf]
      %v254 = vld [vmem:[%s250 + $0x10] sm:$0x1]
      %v255 = vld [vmem:[%s250 + $0x18] sm:$0xf]
      %v256 = vld [vmem:[%s250 + $0x1c] sm:$0x1]
      %v257 = vld [vmem:[%s250 + $0x24] sm:$0xf]
      %v258 = vld [vmem:[%s250 + $0x28] sm:$0x1]
      %v259 = vld [vmem:[%s250 + $0x30] sm:$0xf]
      %v260 = vld [vmem:[%s250 + $0x34] sm:$0x1]
      %v261 = vld [vmem:[%s250 + $0x3c] sm:$0xf]
      %v262 = vld [vmem:[%s250 + $0x40] sm:$0x1]
      %v263 = vld [vmem:[%s250 + $0x48] sm:$0xf]
      %v264 = vld [vmem:[%s250 + $0x4c] sm:$0x1]
      %v265 = vld [vmem:[%s250 + $0x54] sm:$0xf]
      %v266 = vld [vmem:[%s250 + $0x58] sm:$0x1]
      %vm267 = vsmask.f32 3328
      %vm268 = vsmask.f32 7440
      %vm269 = vmor %vm267, %vm268
      %v271 = vshrl.u32 %v251, 16
      %v273 = vrot.slane %v271, 4
      %v274 = vshll.u32 %v251, 16
      %v276 = vrot.slane %v274, 5
      %v277 = vor.u32 %v273, %v276
      %v278 = vrot.slane %v277, 4
      %v280 = vshll.u32 %v252, 16
      %v282 = vrot.slane %v280, 5
      %v283 = vsel %vm269, %v278, %v282
      %v285 = vshrl.u32 %v253, 16
      %v287 = vrot.slane %v285, 4
      %v288 = vshll.u32 %v253, 16
      %v290 = vrot.slane %v288, 5
      %v291 = vor.u32 %v287, %v290
      %v292 = vrot.slane %v291, 4
      %v294 = vshll.u32 %v254, 16
      %v296 = vrot.slane %v294, 5
      %v297 = vsel %vm269, %v292, %v296
      %v299 = vshrl.u32 %v255, 16
      %v301 = vrot.slane %v299, 4
      %v302 = vshll.u32 %v255, 16
      %v304 = vrot.slane %v302, 5
      %v305 = vor.u32 %v301, %v304
      %v306 = vrot.slane %v305, 4
      %v308 = vshll.u32 %v256, 16
      %v310 = vrot.slane %v308, 5
      %v311 = vsel %vm269, %v306, %v310
      %v313 = vshrl.u32 %v257, 16
      %v315 = vrot.slane %v313, 4
      %v316 = vshll.u32 %v257, 16
      %v318 = vrot.slane %v316, 5
      %v319 = vor.u32 %v315, %v318
      %v320 = vrot.slane %v319, 4
      %v322 = vshll.u32 %v258, 16
      %v324 = vrot.slane %v322, 5
      %v325 = vsel %vm269, %v320, %v324
      %v327 = vshrl.u32 %v259, 16
      %v329 = vrot.slane %v327, 4
      %v330 = vshll.u32 %v259, 16
      %v332 = vrot.slane %v330, 5
      %v333 = vor.u32 %v329, %v332
      %v334 = vrot.slane %v333, 4
      %v336 = vshll.u32 %v260, 16
      %v338 = vrot.slane %v336, 5
      %v339 = vsel %vm269, %v334, %v338
      %v341 = vshrl.u32 %v261, 16
      %v343 = vrot.slane %v341, 4
      %v344 = vshll.u32 %v261, 16
      %v346 = vrot.slane %v344, 5
      %v347 = vor.u32 %v343, %v346
      %v348 = vrot.slane %v347, 4
      %v350 = vshll.u32 %v262, 16
      %v352 = vrot.slane %v350, 5
      %v353 = vsel %vm269, %v348, %v352
      %v355 = vshrl.u32 %v263, 16
      %v357 = vrot.slane %v355, 4
      %v358 = vshll.u32 %v263, 16
      %v360 = vrot.slane %v358, 5
      %v361 = vor.u32 %v357, %v360
      %v362 = vrot.slane %v361, 4
      %v364 = vshll.u32 %v264, 16
      %v366 = vrot.slane %v364, 5
      %v367 = vsel %vm269, %v362, %v366
      %v369 = vshrl.u32 %v265, 16
      %v371 = vrot.slane %v369, 4
      %v372 = vshll.u32 %v265, 16
      %v374 = vrot.slane %v372, 5
      %v375 = vor.u32 %v371, %v374
      %v376 = vrot.slane %v375, 4
      %v378 = vshll.u32 %v266, 16
      %v380 = vrot.slane %v378, 5
      %v381 = vsel %vm269, %v376, %v380
      %vm398 = vcmask 1042432
      %vm399 = vcmask 1046532
      %vm400 = vmor %vm398, %vm399
      %v401 = vrot.slane %v251, 5
      %v402 = vrot.slane %v401, 4
      %v403 = vrot.slane %v252, 5
      %v404 = vsel %vm400, %v402, %v403
      %v405 = vrot.slane %v253, 5
      %v406 = vrot.slane %v405, 4
      %v407 = vrot.slane %v254, 5
      %v408 = vsel %vm400, %v406, %v407
      %v409 = vrot.slane %v255, 5
      %v410 = vrot.slane %v409, 4
      %v411 = vrot.slane %v256, 5
      %v412 = vsel %vm400, %v410, %v411
      %v413 = vrot.slane %v257, 5
      %v414 = vrot.slane %v413, 4
      %v415 = vrot.slane %v258, 5
      %v416 = vsel %vm400, %v414, %v415
      %v417 = vrot.slane %v259, 5
      %v418 = vrot.slane %v417, 4
      %v419 = vrot.slane %v260, 5
      %v420 = vsel %vm400, %v418, %v419
      %v421 = vrot.slane %v261, 5
      %v422 = vrot.slane %v421, 4
      %v423 = vrot.slane %v262, 5
      %v424 = vsel %vm400, %v422, %v423
      %v425 = vrot.slane %v263, 5
      %v426 = vrot.slane %v425, 4
      %v427 = vrot.slane %v264, 5
      %v428 = vsel %vm400, %v426, %v427
      %v429 = vrot.slane %v265, 5
      %v430 = vrot.slane %v429, 4
      %v431 = vrot.slane %v266, 5
      %v432 = vsel %vm400, %v430, %v431
      %v433 = vunpack.c.l.b16 %v251
      %v434 = vunpack.c.l.b16 %v253
      %v435 = vunpack.c.l.b16 %v255
      %v436 = vunpack.c.l.b16 %v257
      %v437 = vunpack.c.l.b16 %v259
      %v438 = vunpack.c.l.b16 %v261
      %v439 = vunpack.c.l.b16 %v263
      %v440 = vunpack.c.l.b16 %v265
      %v441 = vpack.c.b16 %v434, %v433
      %v442 = vpack.c.b16 %v436, %v435
      %v443 = vpack.c.b16 %v438, %v437
      %v444 = vpack.c.b16 %v440, %v439
      %v445 = vunpack.c.l.b16 %v283
      %v446 = vunpack.c.l.b16 %v297
      %v447 = vunpack.c.l.b16 %v311
      %v448 = vunpack.c.l.b16 %v325
      %v449 = vunpack.c.l.b16 %v339
      %v450 = vunpack.c.l.b16 %v353
      %v451 = vunpack.c.l.b16 %v367
      %v452 = vunpack.c.l.b16 %v381
      %v453 = vpack.c.b16 %v446, %v445
      %v454 = vpack.c.b16 %v448, %v447
      %v455 = vpack.c.b16 %v450, %v449
      %v456 = vpack.c.b16 %v452, %v451
      %457 = vrot.lane.b32.xlu0 %v453, 72
      %v458 = vpop.permute.xlu0 %457
      %459 = vrot.lane.b32.xlu0 %v454, 72
      %v460 = vpop.permute.xlu0 %459
      %461 = vrot.lane.b32.xlu0 %v455, 72
      %v462 = vpop.permute.xlu0 %461
      %463 = vrot.lane.b32.xlu0 %v456, 72
      %v464 = vpop.permute.xlu0 %463
      %v465 = vunpack.c.l.b16 %v404
      %v466 = vunpack.c.l.b16 %v408
      %v467 = vunpack.c.l.b16 %v412
      %v468 = vunpack.c.l.b16 %v416
      %v469 = vunpack.c.l.b16 %v420
      %v470 = vunpack.c.l.b16 %v424
      %v471 = vunpack.c.l.b16 %v428
      %v472 = vunpack.c.l.b16 %v432
      %v473 = vpack.c.b16 %v466, %v465
      %v474 = vpack.c.b16 %v468, %v467
      %v475 = vpack.c.b16 %v470, %v469
      %v476 = vpack.c.b16 %v472, %v471
      %477 = vrot.lane.b32.xlu0 %v473, 16
      %v478 = vpop.permute.xlu0 %477
      %479 = vrot.lane.b32.xlu0 %v474, 16
      %v480 = vpop.permute.xlu0 %479
      %481 = vrot.lane.b32.xlu0 %v475, 16
      %v482 = vpop.permute.xlu0 %481
      %483 = vrot.lane.b32.xlu0 %v476, 16
      %v484 = vpop.permute.xlu0 %483
      %vm485 = vcmask 588800
      %v488 = vsel %vm485, %v441, %v458
      %v492 = vsel %vm485, %v442, %v460
      %v496 = vsel %vm485, %v443, %v462
      %v500 = vsel %vm485, %v444, %v464
      %vm502 = vcmask 130048
      %v504 = vsel %vm502, %v458, %v478
      %v506 = vsel %vm502, %v460, %v480
      %v508 = vsel %vm502, %v462, %v482
      %v510 = vsel %vm502, %v464, %v484
      %v511 = vld [vmem:[%s1] sm:$0xff]
      %v512 = vld [vmem:[%s1 + $0x8] sm:$0xff]
      %v513 = vld [vmem:[%s1 + $0x10] sm:$0xff]
      %v514 = vld [vmem:[%s1 + $0x18] sm:$0xff]
      %v515 = vld [vmem:[%s1 + $0x20] sm:$0xff]
      %v516 = vld [vmem:[%s1 + $0x28] sm:$0xff]
      %v517 = vld [vmem:[%s1 + $0x30] sm:$0xff]
      %v518 = vld [vmem:[%s1 + $0x38] sm:$0xff]
      %v519 = vld [vmem:[%s1 + $0x40] sm:$0xff]
      %v520 = vld [vmem:[%s1 + $0x48] sm:$0xff]
      %v521 = vld [vmem:[%s1 + $0x50] sm:$0xff]
      %v522 = vld [vmem:[%s1 + $0x58] sm:$0xff]
      %v523 = vld [vmem:[%s1 + $0x60] sm:$0xff]
      %v524 = vld [vmem:[%s1 + $0x68] sm:$0xff]
      %v525 = vld [vmem:[%s1 + $0x70] sm:$0xff]
      %v526 = vld [vmem:[%s1 + $0x78] sm:$0xff]
      %v527 = vld [vmem:[%s1 + $0x80] sm:$0xff]
      %v528 = vld [vmem:[%s1 + $0x88] sm:$0xff]
      %v529 = vld [vmem:[%s1 + $0x90] sm:$0xff]
      %v530 = vld [vmem:[%s1 + $0x98] sm:$0xff]
      %v531 = vld [vmem:[%s1 + $0xa0] sm:$0xff]
      %v532 = vld [vmem:[%s1 + $0xa8] sm:$0xff]
      %v533 = vld [vmem:[%s1 + $0xb0] sm:$0xff]
      %v534 = vld [vmem:[%s1 + $0xb8] sm:$0xff]
      %v535 = vld [vmem:[%s1 + $0xc0] sm:$0xff]
      %v536 = vld [vmem:[%s1 + $0xc8] sm:$0xff]
      %v537 = vld [vmem:[%s1 + $0xd0] sm:$0xff]
      %v538 = vld [vmem:[%s1 + $0xd8] sm:$0xff]
      %v539 = vld [vmem:[%s1 + $0xe0] sm:$0xff]
      %v540 = vld [vmem:[%s1 + $0xe8] sm:$0xff]
      %v541 = vld [vmem:[%s1 + $0xf0] sm:$0xff]
      %v542 = vld [vmem:[%s1 + $0xf8] sm:$0xff]
      %v543 = vld [vmem:[%s1 + $0x100] sm:$0xff]
      %v544 = vld [vmem:[%s1 + $0x108] sm:$0xff]
      %v545 = vld [vmem:[%s1 + $0x110] sm:$0xff]
      %v546 = vld [vmem:[%s1 + $0x118] sm:$0xff]
      %v547 = vld [vmem:[%s1 + $0x120] sm:$0xff]
      %v548 = vld [vmem:[%s1 + $0x128] sm:$0xff]
      %v549 = vld [vmem:[%s1 + $0x130] sm:$0xff]
      %v550 = vld [vmem:[%s1 + $0x138] sm:$0xff]
      %v551 = vld [vmem:[%s1 + $0x140] sm:$0xff]
      %v552 = vld [vmem:[%s1 + $0x148] sm:$0xff]
      %v553 = vld [vmem:[%s1 + $0x150] sm:$0xff]
      %v554 = vld [vmem:[%s1 + $0x158] sm:$0xff]
      %v555 = vld [vmem:[%s1 + $0x160] sm:$0xff]
      %v556 = vld [vmem:[%s1 + $0x168] sm:$0xff]
      %v557 = vld [vmem:[%s1 + $0x170] sm:$0xff]
      %v558 = vld [vmem:[%s1 + $0x178] sm:$0xff]
      %v559 = vld [vmem:[%s1 + $0x180] sm:$0xff]
      %v560 = vld [vmem:[%s1 + $0x188] sm:$0xff]
      %v561 = vld [vmem:[%s1 + $0x190] sm:$0xff]
      %v562 = vld [vmem:[%s1 + $0x198] sm:$0xff]
      %v563 = vld [vmem:[%s1 + $0x1a0] sm:$0xff]
      %v564 = vld [vmem:[%s1 + $0x1a8] sm:$0xff]
      %v565 = vld [vmem:[%s1 + $0x1b0] sm:$0xff]
      %v566 = vld [vmem:[%s1 + $0x1b8] sm:$0xff]
      %v567 = vld [vmem:[%s1 + $0x1c0] sm:$0xff]
      %v568 = vld [vmem:[%s1 + $0x1c8] sm:$0xff]
      %v569 = vld [vmem:[%s1 + $0x1d0] sm:$0xff]
      %v570 = vld [vmem:[%s1 + $0x1d8] sm:$0xff]
      %v571 = vld [vmem:[%s1 + $0x1e0] sm:$0xff]
      %v572 = vld [vmem:[%s1 + $0x1e8] sm:$0xff]
      %v573 = vld [vmem:[%s1 + $0x1f0] sm:$0xff]
      %v574 = vld [vmem:[%s1 + $0x1f8] sm:$0xff]
      %v575 = vld [vmem:[%s1 + $0x200] sm:$0xff]
      %v576 = vld [vmem:[%s1 + $0x208] sm:$0xff]
      %v577 = vld [vmem:[%s1 + $0x210] sm:$0xff]
      %v578 = vld [vmem:[%s1 + $0x218] sm:$0xff]
      %v579 = vld [vmem:[%s1 + $0x220] sm:$0xff]
      %v580 = vld [vmem:[%s1 + $0x228] sm:$0xff]
      %v581 = vld [vmem:[%s1 + $0x230] sm:$0xff]
      %v582 = vld [vmem:[%s1 + $0x238] sm:$0xff]
      %v583 = vld [vmem:[%s1 + $0x240] sm:$0xff]
      %v584 = vld [vmem:[%s1 + $0x248] sm:$0xff]
      %v585 = vld [vmem:[%s1 + $0x250] sm:$0xff]
      %v586 = vld [vmem:[%s1 + $0x258] sm:$0xff]
      %v587 = vld [vmem:[%s1 + $0x260] sm:$0xff]
      %v588 = vld [vmem:[%s1 + $0x268] sm:$0xff]
      %v589 = vld [vmem:[%s1 + $0x270] sm:$0xff]
      %v590 = vld [vmem:[%s1 + $0x278] sm:$0xff]
      %v591 = vld [vmem:[%s1 + $0x280] sm:$0xff]
      %v592 = vld [vmem:[%s1 + $0x288] sm:$0xff]
      %v593 = vld [vmem:[%s1 + $0x290] sm:$0xff]
      %v594 = vld [vmem:[%s1 + $0x298] sm:$0xff]
      %v595 = vld [vmem:[%s1 + $0x2a0] sm:$0xff]
      %v596 = vld [vmem:[%s1 + $0x2a8] sm:$0xff]
      %v597 = vld [vmem:[%s1 + $0x2b0] sm:$0xff]
      %v598 = vld [vmem:[%s1 + $0x2b8] sm:$0xff]
      %v599 = vld [vmem:[%s1 + $0x2c0] sm:$0xff]
      %v600 = vld [vmem:[%s1 + $0x2c8] sm:$0xff]
      %v601 = vld [vmem:[%s1 + $0x2d0] sm:$0xff]
      %v602 = vld [vmem:[%s1 + $0x2d8] sm:$0xff]
      %v603 = vld [vmem:[%s1 + $0x2e0] sm:$0xff]
      %v604 = vld [vmem:[%s1 + $0x2e8] sm:$0xff]
      %v605 = vld [vmem:[%s1 + $0x2f0] sm:$0xff]
      %v606 = vld [vmem:[%s1 + $0x2f8] sm:$0xff]
      %v607 = vld [vmem:[%s1 + $0x300] sm:$0xff]
      %v608 = vld [vmem:[%s1 + $0x308] sm:$0xff]
      %v609 = vld [vmem:[%s1 + $0x310] sm:$0xff]
      %v610 = vld [vmem:[%s1 + $0x318] sm:$0xff]
      %v611 = vld [vmem:[%s1 + $0x320] sm:$0xff]
      %v612 = vld [vmem:[%s1 + $0x328] sm:$0xff]
      %v613 = vld [vmem:[%s1 + $0x330] sm:$0xff]
      %v614 = vld [vmem:[%s1 + $0x338] sm:$0xff]
      %v615 = vld [vmem:[%s1 + $0x340] sm:$0xff]
      %v616 = vld [vmem:[%s1 + $0x348] sm:$0xff]
      %v617 = vld [vmem:[%s1 + $0x350] sm:$0xff]
      %v618 = vld [vmem:[%s1 + $0x358] sm:$0xff]
      %v619 = vld [vmem:[%s1 + $0x360] sm:$0xff]
      %v620 = vld [vmem:[%s1 + $0x368] sm:$0xff]
      %v621 = vld [vmem:[%s1 + $0x370] sm:$0xff]
      %v622 = vld [vmem:[%s1 + $0x378] sm:$0xff]
      %v623 = vld [vmem:[%s1 + $0x380] sm:$0xff]
      %v624 = vld [vmem:[%s1 + $0x388] sm:$0xff]
      %v625 = vld [vmem:[%s1 + $0x390] sm:$0xff]
      %v626 = vld [vmem:[%s1 + $0x398] sm:$0xff]
      %v627 = vld [vmem:[%s1 + $0x3a0] sm:$0xff]
      %v628 = vld [vmem:[%s1 + $0x3a8] sm:$0xff]
      %v629 = vld [vmem:[%s1 + $0x3b0] sm:$0xff]
      %v630 = vld [vmem:[%s1 + $0x3b8] sm:$0xff]
      %v631 = vld [vmem:[%s1 + $0x3c0] sm:$0xff]
      %v632 = vld [vmem:[%s1 + $0x3c8] sm:$0xff]
      %v633 = vld [vmem:[%s1 + $0x3d0] sm:$0xff]
      %v634 = vld [vmem:[%s1 + $0x3d8] sm:$0xff]
      %v635 = vld [vmem:[%s1 + $0x3e0] sm:$0xff]
      %v636 = vld [vmem:[%s1 + $0x3e8] sm:$0xff]
      %v637 = vld [vmem:[%s1 + $0x3f0] sm:$0xff]
      %v638 = vld [vmem:[%s1 + $0x3f8] sm:$0xff]
      %v639 = vld [vmem:[%s1 + $0x400] sm:$0xff]
      %v640 = vld [vmem:[%s1 + $0x408] sm:$0xff]
      %v641 = vld [vmem:[%s1 + $0x410] sm:$0xff]
      %v642 = vld [vmem:[%s1 + $0x418] sm:$0xff]
      %v643 = vld [vmem:[%s1 + $0x420] sm:$0xff]
      %v644 = vld [vmem:[%s1 + $0x428] sm:$0xff]
      %v645 = vld [vmem:[%s1 + $0x430] sm:$0xff]
      %v646 = vld [vmem:[%s1 + $0x438] sm:$0xff]
      %v647 = vld [vmem:[%s1 + $0x440] sm:$0xff]
      %v648 = vld [vmem:[%s1 + $0x448] sm:$0xff]
      %v649 = vld [vmem:[%s1 + $0x450] sm:$0xff]
      %v650 = vld [vmem:[%s1 + $0x458] sm:$0xff]
      %v651 = vld [vmem:[%s1 + $0x460] sm:$0xff]
      %v652 = vld [vmem:[%s1 + $0x468] sm:$0xff]
      %v653 = vld [vmem:[%s1 + $0x470] sm:$0xff]
      %v654 = vld [vmem:[%s1 + $0x478] sm:$0xff]
      %v655 = vld [vmem:[%s1 + $0x480] sm:$0xff]
      %v656 = vld [vmem:[%s1 + $0x488] sm:$0xff]
      %v657 = vld [vmem:[%s1 + $0x490] sm:$0xff]
      %v658 = vld [vmem:[%s1 + $0x498] sm:$0xff]
      %v659 = vld [vmem:[%s1 + $0x4a0] sm:$0xff]
      %v660 = vld [vmem:[%s1 + $0x4a8] sm:$0xff]
      %v661 = vld [vmem:[%s1 + $0x4b0] sm:$0xff]
      %v662 = vld [vmem:[%s1 + $0x4b8] sm:$0xff]
      %v663 = vld [vmem:[%s1 + $0x4c0] sm:$0xff]
      %v664 = vld [vmem:[%s1 + $0x4c8] sm:$0xff]
      %v665 = vld [vmem:[%s1 + $0x4d0] sm:$0xff]
      %v666 = vld [vmem:[%s1 + $0x4d8] sm:$0xff]
      %v667 = vld [vmem:[%s1 + $0x4e0] sm:$0xff]
      %v668 = vld [vmem:[%s1 + $0x4e8] sm:$0xff]
      %v669 = vld [vmem:[%s1 + $0x4f0] sm:$0xff]
      %v670 = vld [vmem:[%s1 + $0x4f8] sm:$0xff]
      %v671 = vld [vmem:[%s1 + $0x500] sm:$0xff]
      %v672 = vld [vmem:[%s1 + $0x508] sm:$0xff]
      %v673 = vld [vmem:[%s1 + $0x510] sm:$0xff]
      %v674 = vld [vmem:[%s1 + $0x518] sm:$0xff]
      %v675 = vld [vmem:[%s1 + $0x520] sm:$0xff]
      %v676 = vld [vmem:[%s1 + $0x528] sm:$0xff]
      %v677 = vld [vmem:[%s1 + $0x530] sm:$0xff]
      %v678 = vld [vmem:[%s1 + $0x538] sm:$0xff]
      %v679 = vld [vmem:[%s1 + $0x540] sm:$0xff]
      %v680 = vld [vmem:[%s1 + $0x548] sm:$0xff]
      %v681 = vld [vmem:[%s1 + $0x550] sm:$0xff]
      %v682 = vld [vmem:[%s1 + $0x558] sm:$0xff]
      %v683 = vld [vmem:[%s1 + $0x560] sm:$0xff]
      %v684 = vld [vmem:[%s1 + $0x568] sm:$0xff]
      %v685 = vld [vmem:[%s1 + $0x570] sm:$0xff]
      %v686 = vld [vmem:[%s1 + $0x578] sm:$0xff]
      %v687 = vld [vmem:[%s1 + $0x580] sm:$0xff]
      %v688 = vld [vmem:[%s1 + $0x588] sm:$0xff]
      %v689 = vld [vmem:[%s1 + $0x590] sm:$0xff]
      %v690 = vld [vmem:[%s1 + $0x598] sm:$0xff]
      %v691 = vld [vmem:[%s1 + $0x5a0] sm:$0xff]
      %v692 = vld [vmem:[%s1 + $0x5a8] sm:$0xff]
      %v693 = vld [vmem:[%s1 + $0x5b0] sm:$0xff]
      %v694 = vld [vmem:[%s1 + $0x5b8] sm:$0xff]
      %v695 = vld [vmem:[%s1 + $0x5c0] sm:$0xff]
      %v696 = vld [vmem:[%s1 + $0x5c8] sm:$0xff]
      %v697 = vld [vmem:[%s1 + $0x5d0] sm:$0xff]
      %v698 = vld [vmem:[%s1 + $0x5d8] sm:$0xff]
      %v699 = vld [vmem:[%s1 + $0x5e0] sm:$0xff]
      %v700 = vld [vmem:[%s1 + $0x5e8] sm:$0xff]
      %v701 = vld [vmem:[%s1 + $0x5f0] sm:$0xff]
      %v702 = vld [vmem:[%s1 + $0x5f8] sm:$0xff]
      %v703 = vld [vmem:[%s1 + $0x600] sm:$0xff]
      %v704 = vld [vmem:[%s1 + $0x608] sm:$0xff]
      %v705 = vld [vmem:[%s1 + $0x610] sm:$0xff]
      %v706 = vld [vmem:[%s1 + $0x618] sm:$0xff]
      %v707 = vld [vmem:[%s1 + $0x620] sm:$0xff]
      %v708 = vld [vmem:[%s1 + $0x628] sm:$0xff]
      %v709 = vld [vmem:[%s1 + $0x630] sm:$0xff]
      %v710 = vld [vmem:[%s1 + $0x638] sm:$0xff]
      %v711 = vld [vmem:[%s1 + $0x640] sm:$0xff]
      %v712 = vld [vmem:[%s1 + $0x648] sm:$0xff]
      %v713 = vld [vmem:[%s1 + $0x650] sm:$0xff]
      %v714 = vld [vmem:[%s1 + $0x658] sm:$0xff]
      %v715 = vld [vmem:[%s1 + $0x660] sm:$0xff]
      %v716 = vld [vmem:[%s1 + $0x668] sm:$0xff]
      %v717 = vld [vmem:[%s1 + $0x670] sm:$0xff]
      %v718 = vld [vmem:[%s1 + $0x678] sm:$0xff]
      %v719 = vld [vmem:[%s1 + $0x680] sm:$0xff]
      %v720 = vld [vmem:[%s1 + $0x688] sm:$0xff]
      %v721 = vld [vmem:[%s1 + $0x690] sm:$0xff]
      %v722 = vld [vmem:[%s1 + $0x698] sm:$0xff]
      %v723 = vld [vmem:[%s1 + $0x6a0] sm:$0xff]
      %v724 = vld [vmem:[%s1 + $0x6a8] sm:$0xff]
      %v725 = vld [vmem:[%s1 + $0x6b0] sm:$0xff]
      %v726 = vld [vmem:[%s1 + $0x6b8] sm:$0xff]
      %v727 = vld [vmem:[%s2] sm:$0xff]
      %v728 = vld [vmem:[%s2 + $0x8] sm:$0xff]
      %v731 = vlaneseq
      %v732 = vshrl.u32 %v731, 7
      %v733 = vsub.s32 0, %v732
      %v734 = vrot.slane %v727, %v733
      %v735 = vlaneseq
      %v736 = vshrl.u32 %v735, 7
      %v737 = vsub.s32 1, %v736
      %v738 = vrot.slane %v727, %v737
      %v739 = vlaneseq
      %v740 = vshrl.u32 %v739, 7
      %v741 = vsub.s32 2, %v740
      %v742 = vrot.slane %v727, %v741
      %v743 = vlaneseq
      %v744 = vshrl.u32 %v743, 7
      %v745 = vsub.s32 3, %v744
      %v746 = vrot.slane %v727, %v745
      %v747 = vlaneseq
      %v748 = vshrl.u32 %v747, 7
      %v749 = vsub.s32 4, %v748
      %v750 = vrot.slane %v727, %v749
      %v751 = vlaneseq
      %v752 = vshrl.u32 %v751, 7
      %v753 = vsub.s32 5, %v752
      %v754 = vrot.slane %v727, %v753
      %v755 = vlaneseq
      %v756 = vshrl.u32 %v755, 7
      %v757 = vsub.s32 6, %v756
      %v758 = vrot.slane %v727, %v757
      %v759 = vlaneseq
      %v760 = vshrl.u32 %v759, 7
      %v761 = vsub.s32 7, %v760
      %v762 = vrot.slane %v727, %v761
      %v763 = vlaneseq
      %v764 = vshrl.u32 %v763, 7
      %v765 = vsub.s32 0, %v764
      %v766 = vrot.slane %v728, %v765
      %v767 = vlaneseq
      %v768 = vshrl.u32 %v767, 7
      %v769 = vsub.s32 1, %v768
      %v770 = vrot.slane %v728, %v769
      %v771 = vlaneseq
      %v772 = vshrl.u32 %v771, 7
      %v773 = vsub.s32 2, %v772
      %v774 = vrot.slane %v728, %v773
      %v775 = vlaneseq
      %v776 = vshrl.u32 %v775, 7
      %v777 = vsub.s32 3, %v776
      %v778 = vrot.slane %v728, %v777
      %v779 = vlaneseq
      %v780 = vshrl.u32 %v779, 7
      %v781 = vsub.s32 4, %v780
      %v782 = vrot.slane %v728, %v781
      %v783 = vlaneseq
      %v784 = vshrl.u32 %v783, 7
      %v785 = vsub.s32 5, %v784
      %v786 = vrot.slane %v728, %v785
      %v787 = vlaneseq
      %v788 = vshrl.u32 %v787, 7
      %v789 = vsub.s32 6, %v788
      %v790 = vrot.slane %v728, %v789
      %v791 = vlaneseq
      %v792 = vshrl.u32 %v791, 7
      %v793 = vsub.s32 7, %v792
      %v794 = vrot.slane %v728, %v793
      %v1027 = vunpack.c.l.b16 %v511
      %v1028 = vunpack.c.h.b16 %v511
      %v1029 = vunpack.c.l.b16 %v512
      %v1030 = vunpack.c.h.b16 %v512
      %v1031 = vunpack.c.l.b16 %v513
      %v1032 = vunpack.c.h.b16 %v513
      %v1033 = vunpack.c.l.b16 %v514
      %v1034 = vunpack.c.h.b16 %v514
      %v1035 = vunpack.c.l.b16 %v515
      %v1036 = vunpack.c.h.b16 %v515
      %v1037 = vunpack.c.l.b16 %v516
      %v1038 = vunpack.c.h.b16 %v516
      %v1039 = vunpack.c.l.b16 %v517
      %v1040 = vunpack.c.h.b16 %v517
      %v1041 = vunpack.c.l.b16 %v518
      %v1042 = vunpack.c.h.b16 %v518
      %v1043 = vunpack.c.l.b16 %v519
      %v1044 = vunpack.c.h.b16 %v519
      %v1045 = vunpack.c.l.b16 %v520
      %v1046 = vunpack.c.h.b16 %v520
      %v1047 = vunpack.c.l.b16 %v521
      %v1048 = vunpack.c.h.b16 %v521
      %v1049 = vunpack.c.l.b16 %v522
      %v1050 = vunpack.c.h.b16 %v522
      %v1051 = vunpack.c.l.b16 %v523
      %v1052 = vunpack.c.h.b16 %v523
      %v1053 = vunpack.c.l.b16 %v524
      %v1054 = vunpack.c.h.b16 %v524
      %v1055 = vunpack.c.l.b16 %v525
      %v1056 = vunpack.c.h.b16 %v525
      %v1057 = vunpack.c.l.b16 %v526
      %v1058 = vunpack.c.h.b16 %v526
      %v1059 = vunpack.c.l.b16 %v527
      %v1060 = vunpack.c.h.b16 %v527
      %v1061 = vunpack.c.l.b16 %v528
      %v1062 = vunpack.c.h.b16 %v528
      %v1063 = vunpack.c.l.b16 %v529
      %v1064 = vunpack.c.h.b16 %v529
      %v1065 = vunpack.c.l.b16 %v530
      %v1066 = vunpack.c.h.b16 %v530
      %v1067 = vunpack.c.l.b16 %v531
      %v1068 = vunpack.c.h.b16 %v531
      %v1069 = vunpack.c.l.b16 %v532
      %v1070 = vunpack.c.h.b16 %v532
      %v1071 = vunpack.c.l.b16 %v533
      %v1072 = vunpack.c.h.b16 %v533
      %v1073 = vunpack.c.l.b16 %v534
      %v1074 = vunpack.c.h.b16 %v534
      %v1075 = vunpack.c.l.b16 %v535
      %v1076 = vunpack.c.h.b16 %v535
      %v1077 = vunpack.c.l.b16 %v536
      %v1078 = vunpack.c.h.b16 %v536
      %v1079 = vunpack.c.l.b16 %v537
      %v1080 = vunpack.c.h.b16 %v537
      %v1081 = vunpack.c.l.b16 %v538
      %v1082 = vunpack.c.h.b16 %v538
      %v1083 = vunpack.c.l.b16 %v539
      %v1084 = vunpack.c.h.b16 %v539
      %v1085 = vunpack.c.l.b16 %v540
      %v1086 = vunpack.c.h.b16 %v540
      %v1087 = vunpack.c.l.b16 %v541
      %v1088 = vunpack.c.h.b16 %v541
      %v1089 = vunpack.c.l.b16 %v542
      %v1090 = vunpack.c.h.b16 %v542
      %v1091 = vunpack.c.l.b16 %v543
      %v1092 = vunpack.c.h.b16 %v543
      %v1093 = vunpack.c.l.b16 %v544
      %v1094 = vunpack.c.h.b16 %v544
      %v1095 = vunpack.c.l.b16 %v545
      %v1096 = vunpack.c.h.b16 %v545
      %v1097 = vunpack.c.l.b16 %v546
      %v1098 = vunpack.c.h.b16 %v546
      %v1099 = vunpack.c.l.b16 %v547
      %v1100 = vunpack.c.h.b16 %v547
      %v1101 = vunpack.c.l.b16 %v548
      %v1102 = vunpack.c.h.b16 %v548
      %v1103 = vunpack.c.l.b16 %v549
      %v1104 = vunpack.c.h.b16 %v549
      %v1105 = vunpack.c.l.b16 %v550
      %v1106 = vunpack.c.h.b16 %v550
      %v1107 = vunpack.c.l.b16 %v551
      %v1108 = vunpack.c.h.b16 %v551
      %v1109 = vunpack.c.l.b16 %v552
      %v1110 = vunpack.c.h.b16 %v552
      %v1111 = vunpack.c.l.b16 %v553
      %v1112 = vunpack.c.h.b16 %v553
      %v1113 = vunpack.c.l.b16 %v554
      %v1114 = vunpack.c.h.b16 %v554
      %v1115 = vunpack.c.l.b16 %v555
      %v1116 = vunpack.c.h.b16 %v555
      %v1117 = vunpack.c.l.b16 %v556
      %v1118 = vunpack.c.h.b16 %v556
      %v1119 = vunpack.c.l.b16 %v557
      %v1120 = vunpack.c.h.b16 %v557
      %v1121 = vunpack.c.l.b16 %v558
      %v1122 = vunpack.c.h.b16 %v558
      %v1123 = vunpack.c.l.b16 %v559
      %v1124 = vunpack.c.h.b16 %v559
      %v1125 = vunpack.c.l.b16 %v560
      %v1126 = vunpack.c.h.b16 %v560
      %v1127 = vunpack.c.l.b16 %v561
      %v1128 = vunpack.c.h.b16 %v561
      %v1129 = vunpack.c.l.b16 %v562
      %v1130 = vunpack.c.h.b16 %v562
      %v1131 = vunpack.c.l.b16 %v563
      %v1132 = vunpack.c.h.b16 %v563
      %v1133 = vunpack.c.l.b16 %v564
      %v1134 = vunpack.c.h.b16 %v564
      %v1135 = vunpack.c.l.b16 %v565
      %v1136 = vunpack.c.h.b16 %v565
      %v1137 = vunpack.c.l.b16 %v566
      %v1138 = vunpack.c.h.b16 %v566
      %v1139 = vunpack.c.l.b16 %v567
      %v1140 = vunpack.c.h.b16 %v567
      %v1141 = vunpack.c.l.b16 %v568
      %v1142 = vunpack.c.h.b16 %v568
      %v1143 = vunpack.c.l.b16 %v569
      %v1144 = vunpack.c.h.b16 %v569
      %v1145 = vunpack.c.l.b16 %v570
      %v1146 = vunpack.c.h.b16 %v570
      %v1147 = vunpack.c.l.b16 %v571
      %v1148 = vunpack.c.h.b16 %v571
      %v1149 = vunpack.c.l.b16 %v572
      %v1150 = vunpack.c.h.b16 %v572
      %v1151 = vunpack.c.l.b16 %v573
      %v1152 = vunpack.c.h.b16 %v573
      %v1153 = vunpack.c.l.b16 %v574
      %v1154 = vunpack.c.h.b16 %v574
      %v1155 = vunpack.c.l.b16 %v575
      %v1156 = vunpack.c.h.b16 %v575
      %v1157 = vunpack.c.l.b16 %v576
      %v1158 = vunpack.c.h.b16 %v576
      %v1159 = vunpack.c.l.b16 %v577
      %v1160 = vunpack.c.h.b16 %v577
      %v1161 = vunpack.c.l.b16 %v578
      %v1162 = vunpack.c.h.b16 %v578
      %v1163 = vunpack.c.l.b16 %v579
      %v1164 = vunpack.c.h.b16 %v579
      %v1165 = vunpack.c.l.b16 %v580
      %v1166 = vunpack.c.h.b16 %v580
      %v1167 = vunpack.c.l.b16 %v581
      %v1168 = vunpack.c.h.b16 %v581
      %v1169 = vunpack.c.l.b16 %v582
      %v1170 = vunpack.c.h.b16 %v582
      %v1171 = vunpack.c.l.b16 %v583
      %v1172 = vunpack.c.h.b16 %v583
      %v1173 = vunpack.c.l.b16 %v584
      %v1174 = vunpack.c.h.b16 %v584
      %v1175 = vunpack.c.l.b16 %v585
      %v1176 = vunpack.c.h.b16 %v585
      %v1177 = vunpack.c.l.b16 %v586
      %v1178 = vunpack.c.h.b16 %v586
      %v1179 = vunpack.c.l.b16 %v587
      %v1180 = vunpack.c.h.b16 %v587
      %v1181 = vunpack.c.l.b16 %v588
      %v1182 = vunpack.c.h.b16 %v588
      %v1183 = vunpack.c.l.b16 %v589
      %v1184 = vunpack.c.h.b16 %v589
      %v1185 = vunpack.c.l.b16 %v590
      %v1186 = vunpack.c.h.b16 %v590
      %v1187 = vunpack.c.l.b16 %v591
      %v1188 = vunpack.c.h.b16 %v591
      %v1189 = vunpack.c.l.b16 %v592
      %v1190 = vunpack.c.h.b16 %v592
      %v1191 = vunpack.c.l.b16 %v593
      %v1192 = vunpack.c.h.b16 %v593
      %v1193 = vunpack.c.l.b16 %v594
      %v1194 = vunpack.c.h.b16 %v594
      %v1195 = vunpack.c.l.b16 %v595
      %v1196 = vunpack.c.h.b16 %v595
      %v1197 = vunpack.c.l.b16 %v596
      %v1198 = vunpack.c.h.b16 %v596
      %v1199 = vunpack.c.l.b16 %v597
      %v1200 = vunpack.c.h.b16 %v597
      %v1201 = vunpack.c.l.b16 %v598
      %v1202 = vunpack.c.h.b16 %v598
      %v1203 = vunpack.c.l.b16 %v599
      %v1204 = vunpack.c.h.b16 %v599
      %v1205 = vunpack.c.l.b16 %v600
      %v1206 = vunpack.c.h.b16 %v600
      %v1207 = vunpack.c.l.b16 %v601
      %v1208 = vunpack.c.h.b16 %v601
      %v1209 = vunpack.c.l.b16 %v602
      %v1210 = vunpack.c.h.b16 %v602
      %v1211 = vunpack.c.l.b16 %v603
      %v1212 = vunpack.c.h.b16 %v603
      %v1213 = vunpack.c.l.b16 %v604
      %v1214 = vunpack.c.h.b16 %v604
      %v1215 = vunpack.c.l.b16 %v605
      %v1216 = vunpack.c.h.b16 %v605
      %v1217 = vunpack.c.l.b16 %v606
      %v1218 = vunpack.c.h.b16 %v606
      %v1219 = vunpack.c.l.b16 %v607
      %v1220 = vunpack.c.h.b16 %v607
      %v1221 = vunpack.c.l.b16 %v608
      %v1222 = vunpack.c.h.b16 %v608
      %v1223 = vunpack.c.l.b16 %v609
      %v1224 = vunpack.c.h.b16 %v609
      %v1225 = vunpack.c.l.b16 %v610
      %v1226 = vunpack.c.h.b16 %v610
      %v1227 = vunpack.c.l.b16 %v611
      %v1228 = vunpack.c.h.b16 %v611
      %v1229 = vunpack.c.l.b16 %v612
      %v1230 = vunpack.c.h.b16 %v612
      %v1231 = vunpack.c.l.b16 %v613
      %v1232 = vunpack.c.h.b16 %v613
      %v1233 = vunpack.c.l.b16 %v614
      %v1234 = vunpack.c.h.b16 %v614
      %v1235 = vunpack.c.l.b16 %v615
      %v1236 = vunpack.c.h.b16 %v615
      %v1237 = vunpack.c.l.b16 %v616
      %v1238 = vunpack.c.h.b16 %v616
      %v1239 = vunpack.c.l.b16 %v617
      %v1240 = vunpack.c.h.b16 %v617
      %v1241 = vunpack.c.l.b16 %v618
      %v1242 = vunpack.c.h.b16 %v618
      %v1243 = vunpack.c.l.b16 %v619
      %v1244 = vunpack.c.h.b16 %v619
      %v1245 = vunpack.c.l.b16 %v620
      %v1246 = vunpack.c.h.b16 %v620
      %v1247 = vunpack.c.l.b16 %v621
      %v1248 = vunpack.c.h.b16 %v621
      %v1249 = vunpack.c.l.b16 %v622
      %v1250 = vunpack.c.h.b16 %v622
      %v1251 = vunpack.c.l.b16 %v623
      %v1252 = vunpack.c.h.b16 %v623
      %v1253 = vunpack.c.l.b16 %v624
      %v1254 = vunpack.c.h.b16 %v624
      %v1255 = vunpack.c.l.b16 %v625
      %v1256 = vunpack.c.h.b16 %v625
      %v1257 = vunpack.c.l.b16 %v626
      %v1258 = vunpack.c.h.b16 %v626
      %v1259 = vunpack.c.l.b16 %v627
      %v1260 = vunpack.c.h.b16 %v627
      %v1261 = vunpack.c.l.b16 %v628
      %v1262 = vunpack.c.h.b16 %v628
      %v1263 = vunpack.c.l.b16 %v629
      %v1264 = vunpack.c.h.b16 %v629
      %v1265 = vunpack.c.l.b16 %v630
      %v1266 = vunpack.c.h.b16 %v630
      %v1267 = vunpack.c.l.b16 %v631
      %v1268 = vunpack.c.h.b16 %v631
      %v1269 = vunpack.c.l.b16 %v632
      %v1270 = vunpack.c.h.b16 %v632
      %v1271 = vunpack.c.l.b16 %v633
      %v1272 = vunpack.c.h.b16 %v633
      %v1273 = vunpack.c.l.b16 %v634
      %v1274 = vunpack.c.h.b16 %v634
      %v1275 = vunpack.c.l.b16 %v635
      %v1276 = vunpack.c.h.b16 %v635
      %v1277 = vunpack.c.l.b16 %v636
      %v1278 = vunpack.c.h.b16 %v636
      %v1279 = vunpack.c.l.b16 %v637
      %v1280 = vunpack.c.h.b16 %v637
      %v1281 = vunpack.c.l.b16 %v638
      %v1282 = vunpack.c.h.b16 %v638
      %v1283 = vunpack.c.l.b16 %v639
      %v1284 = vunpack.c.h.b16 %v639
      %v1285 = vunpack.c.l.b16 %v640
      %v1286 = vunpack.c.h.b16 %v640
      %v1287 = vunpack.c.l.b16 %v641
      %v1288 = vunpack.c.h.b16 %v641
      %v1289 = vunpack.c.l.b16 %v642
      %v1290 = vunpack.c.h.b16 %v642
      %v1291 = vunpack.c.l.b16 %v643
      %v1292 = vunpack.c.h.b16 %v643
      %v1293 = vunpack.c.l.b16 %v644
      %v1294 = vunpack.c.h.b16 %v644
      %v1295 = vunpack.c.l.b16 %v645
      %v1296 = vunpack.c.h.b16 %v645
      %v1297 = vunpack.c.l.b16 %v646
      %v1298 = vunpack.c.h.b16 %v646
      %v1299 = vunpack.c.l.b16 %v647
      %v1300 = vunpack.c.h.b16 %v647
      %v1301 = vunpack.c.l.b16 %v648
      %v1302 = vunpack.c.h.b16 %v648
      %v1303 = vunpack.c.l.b16 %v649
      %v1304 = vunpack.c.h.b16 %v649
      %v1305 = vunpack.c.l.b16 %v650
      %v1306 = vunpack.c.h.b16 %v650
      %v1307 = vunpack.c.l.b16 %v651
      %v1308 = vunpack.c.h.b16 %v651
      %v1309 = vunpack.c.l.b16 %v652
      %v1310 = vunpack.c.h.b16 %v652
      %v1311 = vunpack.c.l.b16 %v653
      %v1312 = vunpack.c.h.b16 %v653
      %v1313 = vunpack.c.l.b16 %v654
      %v1314 = vunpack.c.h.b16 %v654
      %v1315 = vunpack.c.l.b16 %v655
      %v1316 = vunpack.c.h.b16 %v655
      %v1317 = vunpack.c.l.b16 %v656
      %v1318 = vunpack.c.h.b16 %v656
      %v1319 = vunpack.c.l.b16 %v657
      %v1320 = vunpack.c.h.b16 %v657
      %v1321 = vunpack.c.l.b16 %v658
      %v1322 = vunpack.c.h.b16 %v658
      %v1323 = vunpack.c.l.b16 %v659
      %v1324 = vunpack.c.h.b16 %v659
      %v1325 = vunpack.c.l.b16 %v660
      %v1326 = vunpack.c.h.b16 %v660
      %v1327 = vunpack.c.l.b16 %v661
      %v1328 = vunpack.c.h.b16 %v661
      %v1329 = vunpack.c.l.b16 %v662
      %v1330 = vunpack.c.h.b16 %v662
      %v1331 = vunpack.c.l.b16 %v663
      %v1332 = vunpack.c.h.b16 %v663
      %v1333 = vunpack.c.l.b16 %v664
      %v1334 = vunpack.c.h.b16 %v664
      %v1335 = vunpack.c.l.b16 %v665
      %v1336 = vunpack.c.h.b16 %v665
      %v1337 = vunpack.c.l.b16 %v666
      %v1338 = vunpack.c.h.b16 %v666
      %v1339 = vunpack.c.l.b16 %v667
      %v1340 = vunpack.c.h.b16 %v667
      %v1341 = vunpack.c.l.b16 %v668
      %v1342 = vunpack.c.h.b16 %v668
      %v1343 = vunpack.c.l.b16 %v669
      %v1344 = vunpack.c.h.b16 %v669
      %v1345 = vunpack.c.l.b16 %v670
      %v1346 = vunpack.c.h.b16 %v670
      %v1347 = vunpack.c.l.b16 %v671
      %v1348 = vunpack.c.h.b16 %v671
      %v1349 = vunpack.c.l.b16 %v672
      %v1350 = vunpack.c.h.b16 %v672
      %v1351 = vunpack.c.l.b16 %v673
      %v1352 = vunpack.c.h.b16 %v673
      %v1353 = vunpack.c.l.b16 %v674
      %v1354 = vunpack.c.h.b16 %v674
      %v1355 = vunpack.c.l.b16 %v675
      %v1356 = vunpack.c.h.b16 %v675
      %v1357 = vunpack.c.l.b16 %v676
      %v1358 = vunpack.c.h.b16 %v676
      %v1359 = vunpack.c.l.b16 %v677
      %v1360 = vunpack.c.h.b16 %v677
      %v1361 = vunpack.c.l.b16 %v678
      %v1362 = vunpack.c.h.b16 %v678
      %v1363 = vunpack.c.l.b16 %v679
      %v1364 = vunpack.c.h.b16 %v679
      %v1365 = vunpack.c.l.b16 %v680
      %v1366 = vunpack.c.h.b16 %v680
      %v1367 = vunpack.c.l.b16 %v681
      %v1368 = vunpack.c.h.b16 %v681
      %v1369 = vunpack.c.l.b16 %v682
      %v1370 = vunpack.c.h.b16 %v682
      %v1371 = vunpack.c.l.b16 %v683
      %v1372 = vunpack.c.h.b16 %v683
      %v1373 = vunpack.c.l.b16 %v684
      %v1374 = vunpack.c.h.b16 %v684
      %v1375 = vunpack.c.l.b16 %v685
      %v1376 = vunpack.c.h.b16 %v685
      %v1377 = vunpack.c.l.b16 %v686
      %v1378 = vunpack.c.h.b16 %v686
      %v1379 = vunpack.c.l.b16 %v687
      %v1380 = vunpack.c.h.b16 %v687
      %v1381 = vunpack.c.l.b16 %v688
      %v1382 = vunpack.c.h.b16 %v688
      %v1383 = vunpack.c.l.b16 %v689
      %v1384 = vunpack.c.h.b16 %v689
      %v1385 = vunpack.c.l.b16 %v690
      %v1386 = vunpack.c.h.b16 %v690
      %v1387 = vunpack.c.l.b16 %v691
      %v1388 = vunpack.c.h.b16 %v691
      %v1389 = vunpack.c.l.b16 %v692
      %v1390 = vunpack.c.h.b16 %v692
      %v1391 = vunpack.c.l.b16 %v693
      %v1392 = vunpack.c.h.b16 %v693
      %v1393 = vunpack.c.l.b16 %v694
      %v1394 = vunpack.c.h.b16 %v694
      %v1395 = vunpack.c.l.b16 %v695
      %v1396 = vunpack.c.h.b16 %v695
      %v1397 = vunpack.c.l.b16 %v696
      %v1398 = vunpack.c.h.b16 %v696
      %v1399 = vunpack.c.l.b16 %v697
      %v1400 = vunpack.c.h.b16 %v697
      %v1401 = vunpack.c.l.b16 %v698
      %v1402 = vunpack.c.h.b16 %v698
      %v1403 = vunpack.c.l.b16 %v699
      %v1404 = vunpack.c.h.b16 %v699
      %v1405 = vunpack.c.l.b16 %v700
      %v1406 = vunpack.c.h.b16 %v700
      %v1407 = vunpack.c.l.b16 %v701
      %v1408 = vunpack.c.h.b16 %v701
      %v1409 = vunpack.c.l.b16 %v702
      %v1410 = vunpack.c.h.b16 %v702
      %v1411 = vunpack.c.l.b16 %v703
      %v1412 = vunpack.c.h.b16 %v703
      %v1413 = vunpack.c.l.b16 %v704
      %v1414 = vunpack.c.h.b16 %v704
      %v1415 = vunpack.c.l.b16 %v705
      %v1416 = vunpack.c.h.b16 %v705
      %v1417 = vunpack.c.l.b16 %v706
      %v1418 = vunpack.c.h.b16 %v706
      %v1419 = vunpack.c.l.b16 %v707
      %v1420 = vunpack.c.h.b16 %v707
      %v1421 = vunpack.c.l.b16 %v708
      %v1422 = vunpack.c.h.b16 %v708
      %v1423 = vunpack.c.l.b16 %v709
      %v1424 = vunpack.c.h.b16 %v709
      %v1425 = vunpack.c.l.b16 %v710
      %v1426 = vunpack.c.h.b16 %v710
      %v1427 = vunpack.c.l.b16 %v711
      %v1428 = vunpack.c.h.b16 %v711
      %v1429 = vunpack.c.l.b16 %v712
      %v1430 = vunpack.c.h.b16 %v712
      %v1431 = vunpack.c.l.b16 %v713
      %v1432 = vunpack.c.h.b16 %v713
      %v1433 = vunpack.c.l.b16 %v714
      %v1434 = vunpack.c.h.b16 %v714
      %v1435 = vunpack.c.l.b16 %v715
      %v1436 = vunpack.c.h.b16 %v715
      %v1437 = vunpack.c.l.b16 %v716
      %v1438 = vunpack.c.h.b16 %v716
      %v1439 = vunpack.c.l.b16 %v717
      %v1440 = vunpack.c.h.b16 %v717
      %v1441 = vunpack.c.l.b16 %v718
      %v1442 = vunpack.c.h.b16 %v718
      %v1443 = vunpack.c.l.b16 %v719
      %v1444 = vunpack.c.h.b16 %v719
      %v1445 = vunpack.c.l.b16 %v720
      %v1446 = vunpack.c.h.b16 %v720
      %v1447 = vunpack.c.l.b16 %v721
      %v1448 = vunpack.c.h.b16 %v721
      %v1449 = vunpack.c.l.b16 %v722
      %v1450 = vunpack.c.h.b16 %v722
      %v1451 = vunpack.c.l.b16 %v723
      %v1452 = vunpack.c.h.b16 %v723
      %v1453 = vunpack.c.l.b16 %v724
      %v1454 = vunpack.c.h.b16 %v724
      %v1455 = vunpack.c.l.b16 %v725
      %v1456 = vunpack.c.h.b16 %v725
      %v1457 = vunpack.c.l.b16 %v726
      %v1458 = vunpack.c.h.b16 %v726
      %v1459 = vpack.c.b16 %v1043, %v1027
      %v1460 = vpack.c.b16 %v1044, %v1028
      %v1461 = vpack.c.b16 %v1045, %v1029
      %v1462 = vpack.c.b16 %v1046, %v1030
      %v1463 = vpack.c.b16 %v1047, %v1031
      %v1464 = vpack.c.b16 %v1048, %v1032
      %v1465 = vpack.c.b16 %v1049, %v1033
      %v1466 = vpack.c.b16 %v1050, %v1034
      %v1467 = vpack.c.b16 %v1051, %v1035
      %v1468 = vpack.c.b16 %v1052, %v1036
      %v1469 = vpack.c.b16 %v1053, %v1037
      %v1470 = vpack.c.b16 %v1054, %v1038
      %v1471 = vpack.c.b16 %v1055, %v1039
      %v1472 = vpack.c.b16 %v1056, %v1040
      %v1473 = vpack.c.b16 %v1057, %v1041
      %v1474 = vpack.c.b16 %v1058, %v1042
      %v1475 = vpack.c.b16 %v1075, %v1059
      %v1476 = vpack.c.b16 %v1076, %v1060
      %v1477 = vpack.c.b16 %v1077, %v1061
      %v1478 = vpack.c.b16 %v1078, %v1062
      %v1479 = vpack.c.b16 %v1079, %v1063
      %v1480 = vpack.c.b16 %v1080, %v1064
      %v1481 = vpack.c.b16 %v1081, %v1065
      %v1482 = vpack.c.b16 %v1082, %v1066
      %v1483 = vpack.c.b16 %v1083, %v1067
      %v1484 = vpack.c.b16 %v1084, %v1068
      %v1485 = vpack.c.b16 %v1085, %v1069
      %v1486 = vpack.c.b16 %v1086, %v1070
      %v1487 = vpack.c.b16 %v1087, %v1071
      %v1488 = vpack.c.b16 %v1088, %v1072
      %v1489 = vpack.c.b16 %v1089, %v1073
      %v1490 = vpack.c.b16 %v1090, %v1074
      %v1491 = vpack.c.b16 %v1107, %v1091
      %v1492 = vpack.c.b16 %v1108, %v1092
      %v1493 = vpack.c.b16 %v1109, %v1093
      %v1494 = vpack.c.b16 %v1110, %v1094
      %v1495 = vpack.c.b16 %v1111, %v1095
      %v1496 = vpack.c.b16 %v1112, %v1096
      %v1497 = vpack.c.b16 %v1113, %v1097
      %v1498 = vpack.c.b16 %v1114, %v1098
      %v1499 = vpack.c.b16 %v1115, %v1099
      %v1500 = vpack.c.b16 %v1116, %v1100
      %v1501 = vpack.c.b16 %v1117, %v1101
      %v1502 = vpack.c.b16 %v1118, %v1102
      %v1503 = vpack.c.b16 %v1119, %v1103
      %v1504 = vpack.c.b16 %v1120, %v1104
      %v1505 = vpack.c.b16 %v1121, %v1105
      %v1506 = vpack.c.b16 %v1122, %v1106
      %v1507 = vpack.c.b16 %v1139, %v1123
      %v1508 = vpack.c.b16 %v1140, %v1124
      %v1509 = vpack.c.b16 %v1141, %v1125
      %v1510 = vpack.c.b16 %v1142, %v1126
      %v1511 = vpack.c.b16 %v1143, %v1127
      %v1512 = vpack.c.b16 %v1144, %v1128
      %v1513 = vpack.c.b16 %v1145, %v1129
      %v1514 = vpack.c.b16 %v1146, %v1130
      %v1515 = vpack.c.b16 %v1147, %v1131
      %v1516 = vpack.c.b16 %v1148, %v1132
      %v1517 = vpack.c.b16 %v1149, %v1133
      %v1518 = vpack.c.b16 %v1150, %v1134
      %v1519 = vpack.c.b16 %v1151, %v1135
      %v1520 = vpack.c.b16 %v1152, %v1136
      %v1521 = vpack.c.b16 %v1153, %v1137
      %v1522 = vpack.c.b16 %v1154, %v1138
      %v1523 = vpack.c.b16 %v1171, %v1155
      %v1524 = vpack.c.b16 %v1172, %v1156
      %v1525 = vpack.c.b16 %v1173, %v1157
      %v1526 = vpack.c.b16 %v1174, %v1158
      %v1527 = vpack.c.b16 %v1175, %v1159
      %v1528 = vpack.c.b16 %v1176, %v1160
      %v1529 = vpack.c.b16 %v1177, %v1161
      %v1530 = vpack.c.b16 %v1178, %v1162
      %v1531 = vpack.c.b16 %v1179, %v1163
      %v1532 = vpack.c.b16 %v1180, %v1164
      %v1533 = vpack.c.b16 %v1181, %v1165
      %v1534 = vpack.c.b16 %v1182, %v1166
      %v1535 = vpack.c.b16 %v1183, %v1167
      %v1536 = vpack.c.b16 %v1184, %v1168
      %v1537 = vpack.c.b16 %v1185, %v1169
      %v1538 = vpack.c.b16 %v1186, %v1170
      %v1539 = vpack.c.b16 %v1203, %v1187
      %v1540 = vpack.c.b16 %v1204, %v1188
      %v1541 = vpack.c.b16 %v1205, %v1189
      %v1542 = vpack.c.b16 %v1206, %v1190
      %v1543 = vpack.c.b16 %v1207, %v1191
      %v1544 = vpack.c.b16 %v1208, %v1192
      %v1545 = vpack.c.b16 %v1209, %v1193
      %v1546 = vpack.c.b16 %v1210, %v1194
      %v1547 = vpack.c.b16 %v1211, %v1195
      %v1548 = vpack.c.b16 %v1212, %v1196
      %v1549 = vpack.c.b16 %v1213, %v1197
      %v1550 = vpack.c.b16 %v1214, %v1198
      %v1551 = vpack.c.b16 %v1215, %v1199
      %v1552 = vpack.c.b16 %v1216, %v1200
      %v1553 = vpack.c.b16 %v1217, %v1201
      %v1554 = vpack.c.b16 %v1218, %v1202
      %v1555 = vpack.c.b16 %v1235, %v1219
      %v1556 = vpack.c.b16 %v1236, %v1220
      %v1557 = vpack.c.b16 %v1237, %v1221
      %v1558 = vpack.c.b16 %v1238, %v1222
      %v1559 = vpack.c.b16 %v1239, %v1223
      %v1560 = vpack.c.b16 %v1240, %v1224
      %v1561 = vpack.c.b16 %v1241, %v1225
      %v1562 = vpack.c.b16 %v1242, %v1226
      %v1563 = vpack.c.b16 %v1243, %v1227
      %v1564 = vpack.c.b16 %v1244, %v1228
      %v1565 = vpack.c.b16 %v1245, %v1229
      %v1566 = vpack.c.b16 %v1246, %v1230
      %v1567 = vpack.c.b16 %v1247, %v1231
      %v1568 = vpack.c.b16 %v1248, %v1232
      %v1569 = vpack.c.b16 %v1249, %v1233
      %v1570 = vpack.c.b16 %v1250, %v1234
      %v1571 = vpack.c.b16 %v1267, %v1251
      %v1572 = vpack.c.b16 %v1268, %v1252
      %v1573 = vpack.c.b16 %v1269, %v1253
      %v1574 = vpack.c.b16 %v1270, %v1254
      %v1575 = vpack.c.b16 %v1271, %v1255
      %v1576 = vpack.c.b16 %v1272, %v1256
      %v1577 = vpack.c.b16 %v1273, %v1257
      %v1578 = vpack.c.b16 %v1274, %v1258
      %v1579 = vpack.c.b16 %v1275, %v1259
      %v1580 = vpack.c.b16 %v1276, %v1260
      %v1581 = vpack.c.b16 %v1277, %v1261
      %v1582 = vpack.c.b16 %v1278, %v1262
      %v1583 = vpack.c.b16 %v1279, %v1263
      %v1584 = vpack.c.b16 %v1280, %v1264
      %v1585 = vpack.c.b16 %v1281, %v1265
      %v1586 = vpack.c.b16 %v1282, %v1266
      %v1587 = vpack.c.b16 %v1299, %v1283
      %v1588 = vpack.c.b16 %v1300, %v1284
      %v1589 = vpack.c.b16 %v1301, %v1285
      %v1590 = vpack.c.b16 %v1302, %v1286
      %v1591 = vpack.c.b16 %v1303, %v1287
      %v1592 = vpack.c.b16 %v1304, %v1288
      %v1593 = vpack.c.b16 %v1305, %v1289
      %v1594 = vpack.c.b16 %v1306, %v1290
      %v1595 = vpack.c.b16 %v1307, %v1291
      %v1596 = vpack.c.b16 %v1308, %v1292
      %v1597 = vpack.c.b16 %v1309, %v1293
      %v1598 = vpack.c.b16 %v1310, %v1294
      %v1599 = vpack.c.b16 %v1311, %v1295
      %v1600 = vpack.c.b16 %v1312, %v1296
      %v1601 = vpack.c.b16 %v1313, %v1297
      %v1602 = vpack.c.b16 %v1314, %v1298
      %v1603 = vpack.c.b16 %v1331, %v1315
      %v1604 = vpack.c.b16 %v1332, %v1316
      %v1605 = vpack.c.b16 %v1333, %v1317
      %v1606 = vpack.c.b16 %v1334, %v1318
      %v1607 = vpack.c.b16 %v1335, %v1319
      %v1608 = vpack.c.b16 %v1336, %v1320
      %v1609 = vpack.c.b16 %v1337, %v1321
      %v1610 = vpack.c.b16 %v1338, %v1322
      %v1611 = vpack.c.b16 %v1339, %v1323
      %v1612 = vpack.c.b16 %v1340, %v1324
      %v1613 = vpack.c.b16 %v1341, %v1325
      %v1614 = vpack.c.b16 %v1342, %v1326
      %v1615 = vpack.c.b16 %v1343, %v1327
      %v1616 = vpack.c.b16 %v1344, %v1328
      %v1617 = vpack.c.b16 %v1345, %v1329
      %v1618 = vpack.c.b16 %v1346, %v1330
      %v1619 = vpack.c.b16 %v1363, %v1347
      %v1620 = vpack.c.b16 %v1364, %v1348
      %v1621 = vpack.c.b16 %v1365, %v1349
      %v1622 = vpack.c.b16 %v1366, %v1350
      %v1623 = vpack.c.b16 %v1367, %v1351
      %v1624 = vpack.c.b16 %v1368, %v1352
      %v1625 = vpack.c.b16 %v1369, %v1353
      %v1626 = vpack.c.b16 %v1370, %v1354
      %v1627 = vpack.c.b16 %v1371, %v1355
      %v1628 = vpack.c.b16 %v1372, %v1356
      %v1629 = vpack.c.b16 %v1373, %v1357
      %v1630 = vpack.c.b16 %v1374, %v1358
      %v1631 = vpack.c.b16 %v1375, %v1359
      %v1632 = vpack.c.b16 %v1376, %v1360
      %v1633 = vpack.c.b16 %v1377, %v1361
      %v1634 = vpack.c.b16 %v1378, %v1362
      %v1635 = vpack.c.b16 %v1395, %v1379
      %v1636 = vpack.c.b16 %v1396, %v1380
      %v1637 = vpack.c.b16 %v1397, %v1381
      %v1638 = vpack.c.b16 %v1398, %v1382
      %v1639 = vpack.c.b16 %v1399, %v1383
      %v1640 = vpack.c.b16 %v1400, %v1384
      %v1641 = vpack.c.b16 %v1401, %v1385
      %v1642 = vpack.c.b16 %v1402, %v1386
      %v1643 = vpack.c.b16 %v1403, %v1387
      %v1644 = vpack.c.b16 %v1404, %v1388
      %v1645 = vpack.c.b16 %v1405, %v1389
      %v1646 = vpack.c.b16 %v1406, %v1390
      %v1647 = vpack.c.b16 %v1407, %v1391
      %v1648 = vpack.c.b16 %v1408, %v1392
      %v1649 = vpack.c.b16 %v1409, %v1393
      %v1650 = vpack.c.b16 %v1410, %v1394
      %v1651 = vpack.c.b16 %v1427, %v1411
      %v1652 = vpack.c.b16 %v1428, %v1412
      %v1653 = vpack.c.b16 %v1429, %v1413
      %v1654 = vpack.c.b16 %v1430, %v1414
      %v1655 = vpack.c.b16 %v1431, %v1415
      %v1656 = vpack.c.b16 %v1432, %v1416
      %v1657 = vpack.c.b16 %v1433, %v1417
      %v1658 = vpack.c.b16 %v1434, %v1418
      %v1659 = vpack.c.b16 %v1435, %v1419
      %v1660 = vpack.c.b16 %v1436, %v1420
      %v1661 = vpack.c.b16 %v1437, %v1421
      %v1662 = vpack.c.b16 %v1438, %v1422
      %v1663 = vpack.c.b16 %v1439, %v1423
      %v1664 = vpack.c.b16 %v1440, %v1424
      %v1665 = vpack.c.b16 %v1441, %v1425
      %v1666 = vpack.c.b16 %v1442, %v1426
      %v1667 = vpack.c.b16 %v1443, %v1443
      %v1668 = vpack.c.b16 %v1444, %v1444
      %v1669 = vpack.c.b16 %v1445, %v1445
      %v1670 = vpack.c.b16 %v1446, %v1446
      %v1671 = vpack.c.b16 %v1447, %v1447
      %v1672 = vpack.c.b16 %v1448, %v1448
      %v1673 = vpack.c.b16 %v1449, %v1449
      %v1674 = vpack.c.b16 %v1450, %v1450
      %v1675 = vpack.c.b16 %v1451, %v1451
      %v1676 = vpack.c.b16 %v1452, %v1452
      %v1677 = vpack.c.b16 %v1453, %v1453
      %v1678 = vpack.c.b16 %v1454, %v1454
      %v1679 = vpack.c.b16 %v1455, %v1455
      %v1680 = vpack.c.b16 %v1456, %v1456
      %v1681 = vpack.c.b16 %v1457, %v1457
      %v1682 = vpack.c.b16 %v1458, %v1458
      %vm1891 = vcmask 719872
      %v1892 = vsel %vm1891, %v504, 0
      %v1894 = vsel %vm1891, %v506, 0
      %v1896 = vsel %vm1891, %v508, 0
      %v1898 = vsel %vm1891, %v510, 0
      %vm1900 = vcmask 1043456
      %v1902 = vsel %vm1900, %v1667, 0
      %v1905 = vsel %vm1900, %v1668, 0
      %v1908 = vsel %vm1900, %v1669, 0
      %v1911 = vsel %vm1900, %v1670, 0
      %v1914 = vsel %vm1900, %v1671, 0
      %v1917 = vsel %vm1900, %v1672, 0
      %v1920 = vsel %vm1900, %v1673, 0
      %v1923 = vsel %vm1900, %v1674, 0
      %v1926 = vsel %vm1900, %v1675, 0
      %v1929 = vsel %vm1900, %v1676, 0
      %v1932 = vsel %vm1900, %v1677, 0
      %v1935 = vsel %vm1900, %v1678, 0
      %v1938 = vsel %vm1900, %v1679, 0
      %v1941 = vsel %vm1900, %v1680, 0
      %v1944 = vsel %vm1900, %v1681, 0
      %v1947 = vsel %vm1900, %v1682, 0
      %1949 = vmatprep.subr.bf16.mxu0 %v1572
      %1950 = vmatpush1.bf16.msra.mxu0 %v1571
      %1951 = vmatprep.subr.bf16.mxu0 %v1556
      %1952 = vmatpush1.bf16.msra.mxu0 %v1555
      %1953 = vmatprep.subr.bf16.mxu0 %v1540
      %1954 = vmatpush1.bf16.msra.mxu0 %v1539
      %1955 = vmatprep.subr.bf16.mxu0 %v1524
      %1956 = vmatpush1.bf16.msra.mxu0 %v1523
      %1957 = vmatprep.subr.bf16.mxu0 %v1508
      %1958 = vmatpush1.bf16.msra.mxu0 %v1507
      %1959 = vmatprep.subr.bf16.mxu0 %v1492
      %1960 = vmatpush1.bf16.msra.mxu0 %v1491
      %1961 = vmatprep.subr.bf16.mxu0 %v1476
      %1962 = vmatpush1.bf16.msra.mxu0 %v1475
      %1963 = vmatprep.subr.bf16.mxu0 %v1460
      %1964 = vmatpush1.bf16.msra.mxu0 %v1459
      %1965 = vmatprep.subr.bf16.mxu0 0
      %1966 = vmatpush2.bf16.msra.mxu0 0
      %1967 = vmatprep.subr.bf16.mxu0 0
      %1968 = vmatpush2.bf16.msra.mxu0 0
      %1969 = vmatprep.subr.bf16.mxu0 %v1905
      %1970 = vmatpush2.bf16.msra.mxu0 %v1902
      %1971 = vmatprep.subr.bf16.mxu0 %v1652
      %1972 = vmatpush2.bf16.msra.mxu0 %v1651
      %1973 = vmatprep.subr.bf16.mxu0 %v1636
      %1974 = vmatpush2.bf16.msra.mxu0 %v1635
      %1975 = vmatprep.subr.bf16.mxu0 %v1620
      %1976 = vmatpush2.bf16.msra.mxu0 %v1619
      %1977 = vmatprep.subr.bf16.mxu0 %v1604
      %1978 = vmatpush2.bf16.msra.mxu0 %v1603
      %1979 = vmatprep.subr.bf16.mxu0 %v1588
      %1980 = vmatpush2.bf16.msra.mxu0 %v1587
      %1981 = vmatprep.mubr.bf16.mxu0 %v1892
      %1982 = vmatmul.mubr.bf16.gmra.mxu0 %v488
      %v1983 = vpop.f32.mrf.mxu0
      %v1984 = vadd.f32 %v734, %v1983
      %v1985 = vpop.f32.mrf.mxu0
      %v1986 = vadd.f32 %v738, %v1985
      %v1987 = vpop.f32.mrf.mxu0
      %v1988 = vadd.f32 %v734, %v1987
      %v1989 = vpop.f32.mrf.mxu0
      %v1990 = vadd.f32 %v738, %v1989
      %1991 = vmatprep.mubr.bf16.mxu0 %v1894
      %1992 = vmatmul.mubr.bf16.gmra.mxu0 %v492
      %v1993 = vpop.f32.mrf.mxu0
      %v1994 = vadd.f32 %v734, %v1993
      %v1995 = vpop.f32.mrf.mxu0
      %v1996 = vadd.f32 %v738, %v1995
      %v1997 = vpop.f32.mrf.mxu0
      %v1998 = vadd.f32 %v734, %v1997
      %v1999 = vpop.f32.mrf.mxu0
      %v2000 = vadd.f32 %v738, %v1999
      %2001 = vmatprep.mubr.bf16.mxu0 %v1896
      %2002 = vmatmul.mubr.bf16.gmra.mxu0 %v496
      %v2003 = vpop.f32.mrf.mxu0
      %v2004 = vadd.f32 %v734, %v2003
      %v2005 = vpop.f32.mrf.mxu0
      %v2006 = vadd.f32 %v738, %v2005
      %v2007 = vpop.f32.mrf.mxu0
      %v2008 = vadd.f32 %v734, %v2007
      %v2009 = vpop.f32.mrf.mxu0
      %v2010 = vadd.f32 %v738, %v2009
      %2011 = vmatprep.mubr.bf16.mxu0 %v1898
      %2012 = vmatmul.mubr.bf16.gmra.mxu0 %v500
      %v2013 = vpop.f32.mrf.mxu0
      %v2014 = vadd.f32 %v734, %v2013
      %v2015 = vpop.f32.mrf.mxu0
      %v2016 = vadd.f32 %v738, %v2015
      %v2017 = vpop.f32.mrf.mxu0
      %v2018 = vadd.f32 %v734, %v2017
      %v2019 = vpop.f32.mrf.mxu0
      %v2020 = vadd.f32 %v738, %v2019
      %2021 = vdwg.mxu0
      %2022 = vmatprep.subr.bf16.mxu0 %v1574
      %2023 = vmatpush1.bf16.msra.mxu0 %v1573
      %2024 = vmatprep.subr.bf16.mxu0 %v1558
      %2025 = vmatpush1.bf16.msra.mxu0 %v1557
      %2026 = vmatprep.subr.bf16.mxu0 %v1542
      %2027 = vmatpush1.bf16.msra.mxu0 %v1541
      %2028 = vmatprep.subr.bf16.mxu0 %v1526
      %2029 = vmatpush1.bf16.msra.mxu0 %v1525
      %2030 = vmatprep.subr.bf16.mxu0 %v1510
      %2031 = vmatpush1.bf16.msra.mxu0 %v1509
      %2032 = vmatprep.subr.bf16.mxu0 %v1494
      %2033 = vmatpush1.bf16.msra.mxu0 %v1493
      %2034 = vmatprep.subr.bf16.mxu0 %v1478
      %2035 = vmatpush1.bf16.msra.mxu0 %v1477
      %2036 = vmatprep.subr.bf16.mxu0 %v1462
      %2037 = vmatpush1.bf16.msra.mxu0 %v1461
      %2038 = vmatprep.subr.bf16.mxu0 0
      %2039 = vmatpush2.bf16.msra.mxu0 0
      %2040 = vmatprep.subr.bf16.mxu0 0
      %2041 = vmatpush2.bf16.msra.mxu0 0
      %2042 = vmatprep.subr.bf16.mxu0 %v1911
      %2043 = vmatpush2.bf16.msra.mxu0 %v1908
      %2044 = vmatprep.subr.bf16.mxu0 %v1654
      %2045 = vmatpush2.bf16.msra.mxu0 %v1653
      %2046 = vmatprep.subr.bf16.mxu0 %v1638
      %2047 = vmatpush2.bf16.msra.mxu0 %v1637
      %2048 = vmatprep.subr.bf16.mxu0 %v1622
      %2049 = vmatpush2.bf16.msra.mxu0 %v1621
      %2050 = vmatprep.subr.bf16.mxu0 %v1606
      %2051 = vmatpush2.bf16.msra.mxu0 %v1605
      %2052 = vmatprep.subr.bf16.mxu0 %v1590
      %2053 = vmatpush2.bf16.msra.mxu0 %v1589
      %2054 = vmatprep.mubr.bf16.mxu0 %v1892
      %2055 = vmatmul.mubr.bf16.gmra.mxu0 %v488
      %v2056 = vpop.f32.mrf.mxu0
      %v2057 = vadd.f32 %v742, %v2056
      %v2058 = vpop.f32.mrf.mxu0
      %v2059 = vadd.f32 %v746, %v2058
      %v2060 = vpop.f32.mrf.mxu0
      %v2061 = vadd.f32 %v742, %v2060
      %v2062 = vpop.f32.mrf.mxu0
      %v2063 = vadd.f32 %v746, %v2062
      %2064 = vmatprep.mubr.bf16.mxu0 %v1894
      %2065 = vmatmul.mubr.bf16.gmra.mxu0 %v492
      %v2066 = vpop.f32.mrf.mxu0
      %v2067 = vadd.f32 %v742, %v2066
      %v2068 = vpop.f32.mrf.mxu0
      %v2069 = vadd.f32 %v746, %v2068
      %v2070 = vpop.f32.mrf.mxu0
      %v2071 = vadd.f32 %v742, %v2070
      %v2072 = vpop.f32.mrf.mxu0
      %v2073 = vadd.f32 %v746, %v2072
      %2074 = vmatprep.mubr.bf16.mxu0 %v1896
      %2075 = vmatmul.mubr.bf16.gmra.mxu0 %v496
      %v2076 = vpop.f32.mrf.mxu0
      %v2077 = vadd.f32 %v742, %v2076
      %v2078 = vpop.f32.mrf.mxu0
      %v2079 = vadd.f32 %v746, %v2078
      %v2080 = vpop.f32.mrf.mxu0
      %v2081 = vadd.f32 %v742, %v2080
      %v2082 = vpop.f32.mrf.mxu0
      %v2083 = vadd.f32 %v746, %v2082
      %2084 = vmatprep.mubr.bf16.mxu0 %v1898
      %2085 = vmatmul.mubr.bf16.gmra.mxu0 %v500
      %v2086 = vpop.f32.mrf.mxu0
      %v2087 = vadd.f32 %v742, %v2086
      %v2088 = vpop.f32.mrf.mxu0
      %v2089 = vadd.f32 %v746, %v2088
      %v2090 = vpop.f32.mrf.mxu0
      %v2091 = vadd.f32 %v742, %v2090
      %v2092 = vpop.f32.mrf.mxu0
      %v2093 = vadd.f32 %v746, %v2092
      %2094 = vdwg.mxu0
      %2095 = vmatprep.subr.bf16.mxu0 %v1576
      %2096 = vmatpush1.bf16.msra.mxu0 %v1575
      %2097 = vmatprep.subr.bf16.mxu0 %v1560
      %2098 = vmatpush1.bf16.msra.mxu0 %v1559
      %2099 = vmatprep.subr.bf16.mxu0 %v1544
      %2100 = vmatpush1.bf16.msra.mxu0 %v1543
      %2101 = vmatprep.subr.bf16.mxu0 %v1528
      %2102 = vmatpush1.bf16.msra.mxu0 %v1527
      %2103 = vmatprep.subr.bf16.mxu0 %v1512
      %2104 = vmatpush1.bf16.msra.mxu0 %v1511
      %2105 = vmatprep.subr.bf16.mxu0 %v1496
      %2106 = vmatpush1.bf16.msra.mxu0 %v1495
      %2107 = vmatprep.subr.bf16.mxu0 %v1480
      %2108 = vmatpush1.bf16.msra.mxu0 %v1479
      %2109 = vmatprep.subr.bf16.mxu0 %v1464
      %2110 = vmatpush1.bf16.msra.mxu0 %v1463
      %2111 = vmatprep.subr.bf16.mxu0 0
      %2112 = vmatpush2.bf16.msra.mxu0 0
      %2113 = vmatprep.subr.bf16.mxu0 0
      %2114 = vmatpush2.bf16.msra.mxu0 0
      %2115 = vmatprep.subr.bf16.mxu0 %v1917
      %2116 = vmatpush2.bf16.msra.mxu0 %v1914
      %2117 = vmatprep.subr.bf16.mxu0 %v1656
      %2118 = vmatpush2.bf16.msra.mxu0 %v1655
      %2119 = vmatprep.subr.bf16.mxu0 %v1640
      %2120 = vmatpush2.bf16.msra.mxu0 %v1639
      %2121 = vmatprep.subr.bf16.mxu0 %v1624
      %2122 = vmatpush2.bf16.msra.mxu0 %v1623
      %2123 = vmatprep.subr.bf16.mxu0 %v1608
      %2124 = vmatpush2.bf16.msra.mxu0 %v1607
      %2125 = vmatprep.subr.bf16.mxu0 %v1592
      %2126 = vmatpush2.bf16.msra.mxu0 %v1591
      %2127 = vmatprep.mubr.bf16.mxu0 %v1892
      %2128 = vmatmul.mubr.bf16.gmra.mxu0 %v488
      %v2129 = vpop.f32.mrf.mxu0
      %v2130 = vadd.f32 %v750, %v2129
      %v2131 = vpop.f32.mrf.mxu0
      %v2132 = vadd.f32 %v754, %v2131
      %v2133 = vpop.f32.mrf.mxu0
      %v2134 = vadd.f32 %v750, %v2133
      %v2135 = vpop.f32.mrf.mxu0
      %v2136 = vadd.f32 %v754, %v2135
      %2137 = vmatprep.mubr.bf16.mxu0 %v1894
      %2138 = vmatmul.mubr.bf16.gmra.mxu0 %v492
      %v2139 = vpop.f32.mrf.mxu0
      %v2140 = vadd.f32 %v750, %v2139
      %v2141 = vpop.f32.mrf.mxu0
      %v2142 = vadd.f32 %v754, %v2141
      %v2143 = vpop.f32.mrf.mxu0
      %v2144 = vadd.f32 %v750, %v2143
      %v2145 = vpop.f32.mrf.mxu0
      %v2146 = vadd.f32 %v754, %v2145
      %2147 = vmatprep.mubr.bf16.mxu0 %v1896
      %2148 = vmatmul.mubr.bf16.gmra.mxu0 %v496
      %v2149 = vpop.f32.mrf.mxu0
      %v2150 = vadd.f32 %v750, %v2149
      %v2151 = vpop.f32.mrf.mxu0
      %v2152 = vadd.f32 %v754, %v2151
      %v2153 = vpop.f32.mrf.mxu0
      %v2154 = vadd.f32 %v750, %v2153
      %v2155 = vpop.f32.mrf.mxu0
      %v2156 = vadd.f32 %v754, %v2155
      %2157 = vmatprep.mubr.bf16.mxu0 %v1898
      %2158 = vmatmul.mubr.bf16.gmra.mxu0 %v500
      %v2159 = vpop.f32.mrf.mxu0
      %v2160 = vadd.f32 %v750, %v2159
      %v2161 = vpop.f32.mrf.mxu0
      %v2162 = vadd.f32 %v754, %v2161
      %v2163 = vpop.f32.mrf.mxu0
      %v2164 = vadd.f32 %v750, %v2163
      %v2165 = vpop.f32.mrf.mxu0
      %v2166 = vadd.f32 %v754, %v2165
      %2167 = vdwg.mxu0
      %2168 = vmatprep.subr.bf16.mxu0 %v1578
      %2169 = vmatpush1.bf16.msra.mxu0 %v1577
      %2170 = vmatprep.subr.bf16.mxu0 %v1562
      %2171 = vmatpush1.bf16.msra.mxu0 %v1561
      %2172 = vmatprep.subr.bf16.mxu0 %v1546
      %2173 = vmatpush1.bf16.msra.mxu0 %v1545
      %2174 = vmatprep.subr.bf16.mxu0 %v1530
      %2175 = vmatpush1.bf16.msra.mxu0 %v1529
      %2176 = vmatprep.subr.bf16.mxu0 %v1514
      %2177 = vmatpush1.bf16.msra.mxu0 %v1513
      %2178 = vmatprep.subr.bf16.mxu0 %v1498
      %2179 = vmatpush1.bf16.msra.mxu0 %v1497
      %2180 = vmatprep.subr.bf16.mxu0 %v1482
      %2181 = vmatpush1.bf16.msra.mxu0 %v1481
      %2182 = vmatprep.subr.bf16.mxu0 %v1466
      %2183 = vmatpush1.bf16.msra.mxu0 %v1465
      %2184 = vmatprep.subr.bf16.mxu0 0
      %2185 = vmatpush2.bf16.msra.mxu0 0
      %2186 = vmatprep.subr.bf16.mxu0 0
      %2187 = vmatpush2.bf16.msra.mxu0 0
      %2188 = vmatprep.subr.bf16.mxu0 %v1923
      %2189 = vmatpush2.bf16.msra.mxu0 %v1920
      %2190 = vmatprep.subr.bf16.mxu0 %v1658
      %2191 = vmatpush2.bf16.msra.mxu0 %v1657
      %2192 = vmatprep.subr.bf16.mxu0 %v1642
      %2193 = vmatpush2.bf16.msra.mxu0 %v1641
      %2194 = vmatprep.subr.bf16.mxu0 %v1626
      %2195 = vmatpush2.bf16.msra.mxu0 %v1625
      %2196 = vmatprep.subr.bf16.mxu0 %v1610
      %2197 = vmatpush2.bf16.msra.mxu0 %v1609
      %2198 = vmatprep.subr.bf16.mxu0 %v1594
      %2199 = vmatpush2.bf16.msra.mxu0 %v1593
      %2200 = vmatprep.mubr.bf16.mxu0 %v1892
      %2201 = vmatmul.mubr.bf16.gmra.mxu0 %v488
      %v2202 = vpop.f32.mrf.mxu0
      %v2203 = vadd.f32 %v758, %v2202
      %v2204 = vpop.f32.mrf.mxu0
      %v2205 = vadd.f32 %v762, %v2204
      %v2206 = vpop.f32.mrf.mxu0
      %v2207 = vadd.f32 %v758, %v2206
      %v2208 = vpop.f32.mrf.mxu0
      %v2209 = vadd.f32 %v762, %v2208
      %2210 = vmatprep.mubr.bf16.mxu0 %v1894
      %2211 = vmatmul.mubr.bf16.gmra.mxu0 %v492
      %v2212 = vpop.f32.mrf.mxu0
      %v2213 = vadd.f32 %v758, %v2212
      %v2214 = vpop.f32.mrf.mxu0
      %v2215 = vadd.f32 %v762, %v2214
      %v2216 = vpop.f32.mrf.mxu0
      %v2217 = vadd.f32 %v758, %v2216
      %v2218 = vpop.f32.mrf.mxu0
      %v2219 = vadd.f32 %v762, %v2218
      %2220 = vmatprep.mubr.bf16.mxu0 %v1896
      %2221 = vmatmul.mubr.bf16.gmra.mxu0 %v496
      %v2222 = vpop.f32.mrf.mxu0
      %v2223 = vadd.f32 %v758, %v2222
      %v2224 = vpop.f32.mrf.mxu0
      %v2225 = vadd.f32 %v762, %v2224
      %v2226 = vpop.f32.mrf.mxu0
      %v2227 = vadd.f32 %v758, %v2226
      %v2228 = vpop.f32.mrf.mxu0
      %v2229 = vadd.f32 %v762, %v2228
      %2230 = vmatprep.mubr.bf16.mxu0 %v1898
      %2231 = vmatmul.mubr.bf16.gmra.mxu0 %v500
      %v2232 = vpop.f32.mrf.mxu0
      %v2233 = vadd.f32 %v758, %v2232
      %v2234 = vpop.f32.mrf.mxu0
      %v2235 = vadd.f32 %v762, %v2234
      %v2236 = vpop.f32.mrf.mxu0
      %v2237 = vadd.f32 %v758, %v2236
      %v2238 = vpop.f32.mrf.mxu0
      %v2239 = vadd.f32 %v762, %v2238
      %2240 = vdwg.mxu0
      %2241 = vmatprep.subr.bf16.mxu0 %v1580
      %2242 = vmatpush1.bf16.msra.mxu0 %v1579
      %2243 = vmatprep.subr.bf16.mxu0 %v1564
      %2244 = vmatpush1.bf16.msra.mxu0 %v1563
      %2245 = vmatprep.subr.bf16.mxu0 %v1548
      %2246 = vmatpush1.bf16.msra.mxu0 %v1547
      %2247 = vmatprep.subr.bf16.mxu0 %v1532
      %2248 = vmatpush1.bf16.msra.mxu0 %v1531
      %2249 = vmatprep.subr.bf16.mxu0 %v1516
      %2250 = vmatpush1.bf16.msra.mxu0 %v1515
      %2251 = vmatprep.subr.bf16.mxu0 %v1500
      %2252 = vmatpush1.bf16.msra.mxu0 %v1499
      %2253 = vmatprep.subr.bf16.mxu0 %v1484
      %2254 = vmatpush1.bf16.msra.mxu0 %v1483
      %2255 = vmatprep.subr.bf16.mxu0 %v1468
      %2256 = vmatpush1.bf16.msra.mxu0 %v1467
      %2257 = vmatprep.subr.bf16.mxu0 0
      %2258 = vmatpush2.bf16.msra.mxu0 0
      %2259 = vmatprep.subr.bf16.mxu0 0
      %2260 = vmatpush2.bf16.msra.mxu0 0
      %2261 = vmatprep.subr.bf16.mxu0 %v1929
      %2262 = vmatpush2.bf16.msra.mxu0 %v1926
      %2263 = vmatprep.subr.bf16.mxu0 %v1660
      %2264 = vmatpush2.bf16.msra.mxu0 %v1659
      %2265 = vmatprep.subr.bf16.mxu0 %v1644
      %2266 = vmatpush2.bf16.msra.mxu0 %v1643
      %2267 = vmatprep.subr.bf16.mxu0 %v1628
      %2268 = vmatpush2.bf16.msra.mxu0 %v1627
      %2269 = vmatprep.subr.bf16.mxu0 %v1612
      %2270 = vmatpush2.bf16.msra.mxu0 %v1611
      %2271 = vmatprep.subr.bf16.mxu0 %v1596
      %2272 = vmatpush2.bf16.msra.mxu0 %v1595
      %2273 = vmatprep.mubr.bf16.mxu0 %v1892
      %2274 = vmatmul.mubr.bf16.gmra.mxu0 %v488
      %v2275 = vpop.f32.mrf.mxu0
      %v2276 = vadd.f32 %v766, %v2275
      %v2277 = vpop.f32.mrf.mxu0
      %v2278 = vadd.f32 %v770, %v2277
      %v2279 = vpop.f32.mrf.mxu0
      %v2280 = vadd.f32 %v766, %v2279
      %v2281 = vpop.f32.mrf.mxu0
      %v2282 = vadd.f32 %v770, %v2281
      %2283 = vmatprep.mubr.bf16.mxu0 %v1894
      %2284 = vmatmul.mubr.bf16.gmra.mxu0 %v492
      %v2285 = vpop.f32.mrf.mxu0
      %v2286 = vadd.f32 %v766, %v2285
      %v2287 = vpop.f32.mrf.mxu0
      %v2288 = vadd.f32 %v770, %v2287
      %v2289 = vpop.f32.mrf.mxu0
      %v2290 = vadd.f32 %v766, %v2289
      %v2291 = vpop.f32.mrf.mxu0
      %v2292 = vadd.f32 %v770, %v2291
      %2293 = vmatprep.mubr.bf16.mxu0 %v1896
      %2294 = vmatmul.mubr.bf16.gmra.mxu0 %v496
      %v2295 = vpop.f32.mrf.mxu0
      %v2296 = vadd.f32 %v766, %v2295
      %v2297 = vpop.f32.mrf.mxu0
      %v2298 = vadd.f32 %v770, %v2297
      %v2299 = vpop.f32.mrf.mxu0
      %v2300 = vadd.f32 %v766, %v2299
      %v2301 = vpop.f32.mrf.mxu0
      %v2302 = vadd.f32 %v770, %v2301
      %2303 = vmatprep.mubr.bf16.mxu0 %v1898
      %2304 = vmatmul.mubr.bf16.gmra.mxu0 %v500
      %v2305 = vpop.f32.mrf.mxu0
      %v2306 = vadd.f32 %v766, %v2305
      %v2307 = vpop.f32.mrf.mxu0
      %v2308 = vadd.f32 %v770, %v2307
      %v2309 = vpop.f32.mrf.mxu0
      %v2310 = vadd.f32 %v766, %v2309
      %v2311 = vpop.f32.mrf.mxu0
      %v2312 = vadd.f32 %v770, %v2311
      %2313 = vdwg.mxu0
      %2314 = vmatprep.subr.bf16.mxu0 %v1582
      %2315 = vmatpush1.bf16.msra.mxu0 %v1581
      %2316 = vmatprep.subr.bf16.mxu0 %v1566
      %2317 = vmatpush1.bf16.msra.mxu0 %v1565
      %2318 = vmatprep.subr.bf16.mxu0 %v1550
      %2319 = vmatpush1.bf16.msra.mxu0 %v1549
      %2320 = vmatprep.subr.bf16.mxu0 %v1534
      %2321 = vmatpush1.bf16.msra.mxu0 %v1533
      %2322 = vmatprep.subr.bf16.mxu0 %v1518
      %2323 = vmatpush1.bf16.msra.mxu0 %v1517
      %2324 = vmatprep.subr.bf16.mxu0 %v1502
      %2325 = vmatpush1.bf16.msra.mxu0 %v1501
      %2326 = vmatprep.subr.bf16.mxu0 %v1486
      %2327 = vmatpush1.bf16.msra.mxu0 %v1485
      %2328 = vmatprep.subr.bf16.mxu0 %v1470
      %2329 = vmatpush1.bf16.msra.mxu0 %v1469
      %2330 = vmatprep.subr.bf16.mxu0 0
      %2331 = vmatpush2.bf16.msra.mxu0 0
      %2332 = vmatprep.subr.bf16.mxu0 0
      %2333 = vmatpush2.bf16.msra.mxu0 0
      %2334 = vmatprep.subr.bf16.mxu0 %v1935
      %2335 = vmatpush2.bf16.msra.mxu0 %v1932
      %2336 = vmatprep.subr.bf16.mxu0 %v1662
      %2337 = vmatpush2.bf16.msra.mxu0 %v1661
      %2338 = vmatprep.subr.bf16.mxu0 %v1646
      %2339 = vmatpush2.bf16.msra.mxu0 %v1645
      %2340 = vmatprep.subr.bf16.mxu0 %v1630
      %2341 = vmatpush2.bf16.msra.mxu0 %v1629
      %2342 = vmatprep.subr.bf16.mxu0 %v1614
      %2343 = vmatpush2.bf16.msra.mxu0 %v1613
      %2344 = vmatprep.subr.bf16.mxu0 %v1598
      %2345 = vmatpush2.bf16.msra.mxu0 %v1597
      %2346 = vmatprep.mubr.bf16.mxu0 %v1892
      %2347 = vmatmul.mubr.bf16.gmra.mxu0 %v488
      %v2348 = vpop.f32.mrf.mxu0
      %v2349 = vadd.f32 %v774, %v2348
      %v2350 = vpop.f32.mrf.mxu0
      %v2351 = vadd.f32 %v778, %v2350
      %v2352 = vpop.f32.mrf.mxu0
      %v2353 = vadd.f32 %v774, %v2352
      %v2354 = vpop.f32.mrf.mxu0
      %v2355 = vadd.f32 %v778, %v2354
      %2356 = vmatprep.mubr.bf16.mxu0 %v1894
      %2357 = vmatmul.mubr.bf16.gmra.mxu0 %v492
      %v2358 = vpop.f32.mrf.mxu0
      %v2359 = vadd.f32 %v774, %v2358
      %v2360 = vpop.f32.mrf.mxu0
      %v2361 = vadd.f32 %v778, %v2360
      %v2362 = vpop.f32.mrf.mxu0
      %v2363 = vadd.f32 %v774, %v2362
      %v2364 = vpop.f32.mrf.mxu0
      %v2365 = vadd.f32 %v778, %v2364
      %2366 = vmatprep.mubr.bf16.mxu0 %v1896
      %2367 = vmatmul.mubr.bf16.gmra.mxu0 %v496
      %v2368 = vpop.f32.mrf.mxu0
      %v2369 = vadd.f32 %v774, %v2368
      %v2370 = vpop.f32.mrf.mxu0
      %v2371 = vadd.f32 %v778, %v2370
      %v2372 = vpop.f32.mrf.mxu0
      %v2373 = vadd.f32 %v774, %v2372
      %v2374 = vpop.f32.mrf.mxu0
      %v2375 = vadd.f32 %v778, %v2374
      %2376 = vmatprep.mubr.bf16.mxu0 %v1898
      %2377 = vmatmul.mubr.bf16.gmra.mxu0 %v500
      %v2378 = vpop.f32.mrf.mxu0
      %v2379 = vadd.f32 %v774, %v2378
      %v2380 = vpop.f32.mrf.mxu0
      %v2381 = vadd.f32 %v778, %v2380
      %v2382 = vpop.f32.mrf.mxu0
      %v2383 = vadd.f32 %v774, %v2382
      %v2384 = vpop.f32.mrf.mxu0
      %v2385 = vadd.f32 %v778, %v2384
      %2386 = vdwg.mxu0
      %2387 = vmatprep.subr.bf16.mxu0 %v1584
      %2388 = vmatpush1.bf16.msra.mxu0 %v1583
      %2389 = vmatprep.subr.bf16.mxu0 %v1568
      %2390 = vmatpush1.bf16.msra.mxu0 %v1567
      %2391 = vmatprep.subr.bf16.mxu0 %v1552
      %2392 = vmatpush1.bf16.msra.mxu0 %v1551
      %2393 = vmatprep.subr.bf16.mxu0 %v1536
      %2394 = vmatpush1.bf16.msra.mxu0 %v1535
      %2395 = vmatprep.subr.bf16.mxu0 %v1520
      %2396 = vmatpush1.bf16.msra.mxu0 %v1519
      %2397 = vmatprep.subr.bf16.mxu0 %v1504
      %2398 = vmatpush1.bf16.msra.mxu0 %v1503
      %2399 = vmatprep.subr.bf16.mxu0 %v1488
      %2400 = vmatpush1.bf16.msra.mxu0 %v1487
      %2401 = vmatprep.subr.bf16.mxu0 %v1472
      %2402 = vmatpush1.bf16.msra.mxu0 %v1471
      %2403 = vmatprep.subr.bf16.mxu0 0
      %2404 = vmatpush2.bf16.msra.mxu0 0
      %2405 = vmatprep.subr.bf16.mxu0 0
      %2406 = vmatpush2.bf16.msra.mxu0 0
      %2407 = vmatprep.subr.bf16.mxu0 %v1941
      %2408 = vmatpush2.bf16.msra.mxu0 %v1938
      %2409 = vmatprep.subr.bf16.mxu0 %v1664
      %2410 = vmatpush2.bf16.msra.mxu0 %v1663
      %2411 = vmatprep.subr.bf16.mxu0 %v1648
      %2412 = vmatpush2.bf16.msra.mxu0 %v1647
      %2413 = vmatprep.subr.bf16.mxu0 %v1632
      %2414 = vmatpush2.bf16.msra.mxu0 %v1631
      %2415 = vmatprep.subr.bf16.mxu0 %v1616
      %2416 = vmatpush2.bf16.msra.mxu0 %v1615
      %2417 = vmatprep.subr.bf16.mxu0 %v1600
      %2418 = vmatpush2.bf16.msra.mxu0 %v1599
      %2419 = vmatprep.mubr.bf16.mxu0 %v1892
      %2420 = vmatmul.mubr.bf16.gmra.mxu0 %v488
      %v2421 = vpop.f32.mrf.mxu0
      %v2422 = vadd.f32 %v782, %v2421
      %v2423 = vpop.f32.mrf.mxu0
      %v2424 = vadd.f32 %v786, %v2423
      %v2425 = vpop.f32.mrf.mxu0
      %v2426 = vadd.f32 %v782, %v2425
      %v2427 = vpop.f32.mrf.mxu0
      %v2428 = vadd.f32 %v786, %v2427
      %2429 = vmatprep.mubr.bf16.mxu0 %v1894
      %2430 = vmatmul.mubr.bf16.gmra.mxu0 %v492
      %v2431 = vpop.f32.mrf.mxu0
      %v2432 = vadd.f32 %v782, %v2431
      %v2433 = vpop.f32.mrf.mxu0
      %v2434 = vadd.f32 %v786, %v2433
      %v2435 = vpop.f32.mrf.mxu0
      %v2436 = vadd.f32 %v782, %v2435
      %v2437 = vpop.f32.mrf.mxu0
      %v2438 = vadd.f32 %v786, %v2437
      %2439 = vmatprep.mubr.bf16.mxu0 %v1896
      %2440 = vmatmul.mubr.bf16.gmra.mxu0 %v496
      %v2441 = vpop.f32.mrf.mxu0
      %v2442 = vadd.f32 %v782, %v2441
      %v2443 = vpop.f32.mrf.mxu0
      %v2444 = vadd.f32 %v786, %v2443
      %v2445 = vpop.f32.mrf.mxu0
      %v2446 = vadd.f32 %v782, %v2445
      %v2447 = vpop.f32.mrf.mxu0
      %v2448 = vadd.f32 %v786, %v2447
      %2449 = vmatprep.mubr.bf16.mxu0 %v1898
      %2450 = vmatmul.mubr.bf16.gmra.mxu0 %v500
      %v2451 = vpop.f32.mrf.mxu0
      %v2452 = vadd.f32 %v782, %v2451
      %v2453 = vpop.f32.mrf.mxu0
      %v2454 = vadd.f32 %v786, %v2453
      %v2455 = vpop.f32.mrf.mxu0
      %v2456 = vadd.f32 %v782, %v2455
      %v2457 = vpop.f32.mrf.mxu0
      %v2458 = vadd.f32 %v786, %v2457
      %2459 = vdwg.mxu0
      %2460 = vmatprep.subr.bf16.mxu0 %v1586
      %2461 = vmatpush1.bf16.msra.mxu0 %v1585
      %2462 = vmatprep.subr.bf16.mxu0 %v1570
      %2463 = vmatpush1.bf16.msra.mxu0 %v1569
      %2464 = vmatprep.subr.bf16.mxu0 %v1554
      %2465 = vmatpush1.bf16.msra.mxu0 %v1553
      %2466 = vmatprep.subr.bf16.mxu0 %v1538
      %2467 = vmatpush1.bf16.msra.mxu0 %v1537
      %2468 = vmatprep.subr.bf16.mxu0 %v1522
      %2469 = vmatpush1.bf16.msra.mxu0 %v1521
      %2470 = vmatprep.subr.bf16.mxu0 %v1506
      %2471 = vmatpush1.bf16.msra.mxu0 %v1505
      %2472 = vmatprep.subr.bf16.mxu0 %v1490
      %2473 = vmatpush1.bf16.msra.mxu0 %v1489
      %2474 = vmatprep.subr.bf16.mxu0 %v1474
      %2475 = vmatpush1.bf16.msra.mxu0 %v1473
      %2476 = vmatprep.subr.bf16.mxu0 0
      %2477 = vmatpush2.bf16.msra.mxu0 0
      %2478 = vmatprep.subr.bf16.mxu0 0
      %2479 = vmatpush2.bf16.msra.mxu0 0
      %2480 = vmatprep.subr.bf16.mxu0 %v1947
      %2481 = vmatpush2.bf16.msra.mxu0 %v1944
      %2482 = vmatprep.subr.bf16.mxu0 %v1666
      %2483 = vmatpush2.bf16.msra.mxu0 %v1665
      %2484 = vmatprep.subr.bf16.mxu0 %v1650
      %2485 = vmatpush2.bf16.msra.mxu0 %v1649
      %2486 = vmatprep.subr.bf16.mxu0 %v1634
      %2487 = vmatpush2.bf16.msra.mxu0 %v1633
      %2488 = vmatprep.subr.bf16.mxu0 %v1618
      %2489 = vmatpush2.bf16.msra.mxu0 %v1617
      %2490 = vmatprep.subr.bf16.mxu0 %v1602
      %2491 = vmatpush2.bf16.msra.mxu0 %v1601
      %2492 = vmatprep.mubr.bf16.mxu0 %v1892
      %2493 = vmatmul.mubr.bf16.gmra.mxu0 %v488
      %v2494 = vpop.f32.mrf.mxu0
      %v2495 = vadd.f32 %v790, %v2494
      %v2496 = vpop.f32.mrf.mxu0
      %v2497 = vadd.f32 %v794, %v2496
      %v2498 = vpop.f32.mrf.mxu0
      %v2499 = vadd.f32 %v790, %v2498
      %v2500 = vpop.f32.mrf.mxu0
      %v2501 = vadd.f32 %v794, %v2500
      %2502 = vmatprep.mubr.bf16.mxu0 %v1894
      %2503 = vmatmul.mubr.bf16.gmra.mxu0 %v492
      %v2504 = vpop.f32.mrf.mxu0
      %v2505 = vadd.f32 %v790, %v2504
      %v2506 = vpop.f32.mrf.mxu0
      %v2507 = vadd.f32 %v794, %v2506
      %v2508 = vpop.f32.mrf.mxu0
      %v2509 = vadd.f32 %v790, %v2508
      %v2510 = vpop.f32.mrf.mxu0
      %v2511 = vadd.f32 %v794, %v2510
      %2512 = vmatprep.mubr.bf16.mxu0 %v1896
      %2513 = vmatmul.mubr.bf16.gmra.mxu0 %v496
      %v2514 = vpop.f32.mrf.mxu0
      %v2515 = vadd.f32 %v790, %v2514
      %v2516 = vpop.f32.mrf.mxu0
      %v2517 = vadd.f32 %v794, %v2516
      %v2518 = vpop.f32.mrf.mxu0
      %v2519 = vadd.f32 %v790, %v2518
      %v2520 = vpop.f32.mrf.mxu0
      %v2521 = vadd.f32 %v794, %v2520
      %2522 = vmatprep.mubr.bf16.mxu0 %v1898
      %2523 = vmatmul.mubr.bf16.gmra.mxu0 %v500
      %v2524 = vpop.f32.mrf.mxu0
      %v2525 = vadd.f32 %v790, %v2524
      %v2526 = vpop.f32.mrf.mxu0
      %v2527 = vadd.f32 %v794, %v2526
      %v2528 = vpop.f32.mrf.mxu0
      %v2529 = vadd.f32 %v790, %v2528
      %v2530 = vpop.f32.mrf.mxu0
      %v2531 = vadd.f32 %v794, %v2530
      %2532 = vdwg.mxu0
      %v2533 = vmax.f32 %v1984, 0.0
      %v2534 = vmax.f32 %v1986, 0.0
      %v2535 = vmax.f32 %v2057, 0.0
      %v2536 = vmax.f32 %v2059, 0.0
      %v2537 = vmax.f32 %v2130, 0.0
      %v2538 = vmax.f32 %v2132, 0.0
      %v2539 = vmax.f32 %v2203, 0.0
      %v2540 = vmax.f32 %v2205, 0.0
      %v2541 = vmax.f32 %v2276, 0.0
      %v2542 = vmax.f32 %v2278, 0.0
      %v2543 = vmax.f32 %v2349, 0.0
      %v2544 = vmax.f32 %v2351, 0.0
      %v2545 = vmax.f32 %v2422, 0.0
      %v2546 = vmax.f32 %v2424, 0.0
      %v2547 = vmax.f32 %v2495, 0.0
      %v2548 = vmax.f32 %v2497, 0.0
      %v2549 = vmax.f32 %v1988, 0.0
      %v2550 = vmax.f32 %v1990, 0.0
      %v2551 = vmax.f32 %v2061, 0.0
      %v2552 = vmax.f32 %v2063, 0.0
      %v2553 = vmax.f32 %v2134, 0.0
      %v2554 = vmax.f32 %v2136, 0.0
      %v2555 = vmax.f32 %v2207, 0.0
      %v2556 = vmax.f32 %v2209, 0.0
      %v2557 = vmax.f32 %v2280, 0.0
      %v2558 = vmax.f32 %v2282, 0.0
      %v2559 = vmax.f32 %v2353, 0.0
      %v2560 = vmax.f32 %v2355, 0.0
      %v2561 = vmax.f32 %v2426, 0.0
      %v2562 = vmax.f32 %v2428, 0.0
      %v2563 = vmax.f32 %v2499, 0.0
      %v2564 = vmax.f32 %v2501, 0.0
      %v2565 = vmax.f32 %v1994, 0.0
      %v2566 = vmax.f32 %v1996, 0.0
      %v2567 = vmax.f32 %v2067, 0.0
      %v2568 = vmax.f32 %v2069, 0.0
      %v2569 = vmax.f32 %v2140, 0.0
      %v2570 = vmax.f32 %v2142, 0.0
      %v2571 = vmax.f32 %v2213, 0.0
      %v2572 = vmax.f32 %v2215, 0.0
      %v2573 = vmax.f32 %v2286, 0.0
      %v2574 = vmax.f32 %v2288, 0.0
      %v2575 = vmax.f32 %v2359, 0.0
      %v2576 = vmax.f32 %v2361, 0.0
      %v2577 = vmax.f32 %v2432, 0.0
      %v2578 = vmax.f32 %v2434, 0.0
      %v2579 = vmax.f32 %v2505, 0.0
      %v2580 = vmax.f32 %v2507, 0.0
      %v2581 = vmax.f32 %v1998, 0.0
      %v2582 = vmax.f32 %v2000, 0.0
      %v2583 = vmax.f32 %v2071, 0.0
      %v2584 = vmax.f32 %v2073, 0.0
      %v2585 = vmax.f32 %v2144, 0.0
      %v2586 = vmax.f32 %v2146, 0.0
      %v2587 = vmax.f32 %v2217, 0.0
      %v2588 = vmax.f32 %v2219, 0.0
      %v2589 = vmax.f32 %v2290, 0.0
      %v2590 = vmax.f32 %v2292, 0.0
      %v2591 = vmax.f32 %v2363, 0.0
      %v2592 = vmax.f32 %v2365, 0.0
      %v2593 = vmax.f32 %v2436, 0.0
      %v2594 = vmax.f32 %v2438, 0.0
      %v2595 = vmax.f32 %v2509, 0.0
      %v2596 = vmax.f32 %v2511, 0.0
      %v2597 = vmax.f32 %v2004, 0.0
      %v2598 = vmax.f32 %v2006, 0.0
      %v2599 = vmax.f32 %v2077, 0.0
      %v2600 = vmax.f32 %v2079, 0.0
      %v2601 = vmax.f32 %v2150, 0.0
      %v2602 = vmax.f32 %v2152, 0.0
      %v2603 = vmax.f32 %v2223, 0.0
      %v2604 = vmax.f32 %v2225, 0.0
      %v2605 = vmax.f32 %v2296, 0.0
      %v2606 = vmax.f32 %v2298, 0.0
      %v2607 = vmax.f32 %v2369, 0.0
      %v2608 = vmax.f32 %v2371, 0.0
      %v2609 = vmax.f32 %v2442, 0.0
      %v2610 = vmax.f32 %v2444, 0.0
      %v2611 = vmax.f32 %v2515, 0.0
      %v2612 = vmax.f32 %v2517, 0.0
      %v2613 = vmax.f32 %v2008, 0.0
      %v2614 = vmax.f32 %v2010, 0.0
      %v2615 = vmax.f32 %v2081, 0.0
      %v2616 = vmax.f32 %v2083, 0.0
      %v2617 = vmax.f32 %v2154, 0.0
      %v2618 = vmax.f32 %v2156, 0.0
      %v2619 = vmax.f32 %v2227, 0.0
      %v2620 = vmax.f32 %v2229, 0.0
      %v2621 = vmax.f32 %v2300, 0.0
      %v2622 = vmax.f32 %v2302, 0.0
      %v2623 = vmax.f32 %v2373, 0.0
      %v2624 = vmax.f32 %v2375, 0.0
      %v2625 = vmax.f32 %v2446, 0.0
      %v2626 = vmax.f32 %v2448, 0.0
      %v2627 = vmax.f32 %v2519, 0.0
      %v2628 = vmax.f32 %v2521, 0.0
      %v2629 = vmax.f32 %v2014, 0.0
      %v2630 = vmax.f32 %v2016, 0.0
      %v2631 = vmax.f32 %v2087, 0.0
      %v2632 = vmax.f32 %v2089, 0.0
      %v2633 = vmax.f32 %v2160, 0.0
      %v2634 = vmax.f32 %v2162, 0.0
      %v2635 = vmax.f32 %v2233, 0.0
      %v2636 = vmax.f32 %v2235, 0.0
      %v2637 = vmax.f32 %v2306, 0.0
      %v2638 = vmax.f32 %v2308, 0.0
      %v2639 = vmax.f32 %v2379, 0.0
      %v2640 = vmax.f32 %v2381, 0.0
      %v2641 = vmax.f32 %v2452, 0.0
      %v2642 = vmax.f32 %v2454, 0.0
      %v2643 = vmax.f32 %v2525, 0.0
      %v2644 = vmax.f32 %v2527, 0.0
      %v2645 = vmax.f32 %v2018, 0.0
      %v2646 = vmax.f32 %v2020, 0.0
      %v2647 = vmax.f32 %v2091, 0.0
      %v2648 = vmax.f32 %v2093, 0.0
      %v2649 = vmax.f32 %v2164, 0.0
      %v2650 = vmax.f32 %v2166, 0.0
      %v2651 = vmax.f32 %v2237, 0.0
      %v2652 = vmax.f32 %v2239, 0.0
      %v2653 = vmax.f32 %v2310, 0.0
      %v2654 = vmax.f32 %v2312, 0.0
      %v2655 = vmax.f32 %v2383, 0.0
      %v2656 = vmax.f32 %v2385, 0.0
      %v2657 = vmax.f32 %v2456, 0.0
      %v2658 = vmax.f32 %v2458, 0.0
      %v2659 = vmax.f32 %v2529, 0.0
      %v2660 = vmax.f32 %v2531, 0.0
      %v2661 = vld [vmem:[#allocation2] sm:$0xff]
      %v2790 = vcombine.low %v2533, %v2534
      %v2791 = vcombine.high %v2533, %v2534
      %v2792 = vcombine.low %v2535, %v2536
      %v2793 = vcombine.high %v2535, %v2536
      %v2794 = vcombine.low %v2537, %v2538
      %v2795 = vcombine.high %v2537, %v2538
      %v2796 = vcombine.low %v2539, %v2540
      %v2797 = vcombine.high %v2539, %v2540
      %v2799 = vunpack.c.l.s4 1966171168
      %v2800 = vunpack.c.0.s8 %v2799
      %v2801 = vlaneseq
      %v2802 = vshrl.u32 %v2801, 7
      %v2803 = vsub.s32 %v2800, %v2802
      %v2804 = vrot.slane %v2790, %v2803
      %v2806 = vunpack.c.l.s4 1966171168
      %v2807 = vunpack.c.0.s8 %v2806
      %v2808 = vlaneseq
      %v2809 = vshrl.u32 %v2808, 7
      %v2810 = vsub.s32 %v2807, %v2809
      %v2811 = vrot.slane %v2791, %v2810
      %v2813 = vunpack.c.l.s4 1966171168
      %v2814 = vunpack.c.0.s8 %v2813
      %v2815 = vlaneseq
      %v2816 = vshrl.u32 %v2815, 7
      %v2817 = vsub.s32 %v2814, %v2816
      %v2818 = vrot.slane %v2792, %v2817
      %v2820 = vunpack.c.l.s4 1966171168
      %v2821 = vunpack.c.0.s8 %v2820
      %v2822 = vlaneseq
      %v2823 = vshrl.u32 %v2822, 7
      %v2824 = vsub.s32 %v2821, %v2823
      %v2825 = vrot.slane %v2793, %v2824
      %v2827 = vunpack.c.l.s4 1966171168
      %v2828 = vunpack.c.0.s8 %v2827
      %v2829 = vlaneseq
      %v2830 = vshrl.u32 %v2829, 7
      %v2831 = vsub.s32 %v2828, %v2830
      %v2832 = vrot.slane %v2794, %v2831
      %v2834 = vunpack.c.l.s4 1966171168
      %v2835 = vunpack.c.0.s8 %v2834
      %v2836 = vlaneseq
      %v2837 = vshrl.u32 %v2836, 7
      %v2838 = vsub.s32 %v2835, %v2837
      %v2839 = vrot.slane %v2795, %v2838
      %v2841 = vunpack.c.l.s4 1966171168
      %v2842 = vunpack.c.0.s8 %v2841
      %v2843 = vlaneseq
      %v2844 = vshrl.u32 %v2843, 7
      %v2845 = vsub.s32 %v2842, %v2844
      %v2846 = vrot.slane %v2796, %v2845
      %v2848 = vunpack.c.l.s4 1966171168
      %v2849 = vunpack.c.0.s8 %v2848
      %v2850 = vlaneseq
      %v2851 = vshrl.u32 %v2850, 7
      %v2852 = vsub.s32 %v2849, %v2851
      %v2853 = vrot.slane %v2797, %v2852
      %v2854 = vcombine.low %v2804, %v2818
      %v2855 = vcombine.high %v2804, %v2818
      %v2856 = vcombine.low %v2811, %v2825
      %v2857 = vcombine.high %v2811, %v2825
      %v2858 = vcombine.low %v2832, %v2846
      %v2859 = vcombine.high %v2832, %v2846
      %v2860 = vcombine.low %v2839, %v2853
      %v2861 = vcombine.high %v2839, %v2853
      %v2863 = vunpack.c.l.s4 1966171168
      %v2864 = vunpack.c.0.s8 %v2863
      %v2865 = vlaneseq
      %v2866 = vshrl.u32 %v2865, 7
      %v2867 = vsub.s32 %v2864, %v2866
      %v2868 = vrot.slane %v2854, %v2867
      %v2870 = vunpack.c.l.s4 1966171168
      %v2871 = vunpack.c.0.s8 %v2870
      %v2872 = vlaneseq
      %v2873 = vshrl.u32 %v2872, 7
      %v2874 = vsub.s32 %v2871, %v2873
      %v2875 = vrot.slane %v2856, %v2874
      %v2877 = vunpack.c.l.s4 1966171168
      %v2878 = vunpack.c.0.s8 %v2877
      %v2879 = vlaneseq
      %v2880 = vshrl.u32 %v2879, 7
      %v2881 = vsub.s32 %v2878, %v2880
      %v2882 = vrot.slane %v2855, %v2881
      %v2884 = vunpack.c.l.s4 1966171168
      %v2885 = vunpack.c.0.s8 %v2884
      %v2886 = vlaneseq
      %v2887 = vshrl.u32 %v2886, 7
      %v2888 = vsub.s32 %v2885, %v2887
      %v2889 = vrot.slane %v2857, %v2888
      %v2891 = vunpack.c.l.s4 1966171168
      %v2892 = vunpack.c.0.s8 %v2891
      %v2893 = vlaneseq
      %v2894 = vshrl.u32 %v2893, 7
      %v2895 = vsub.s32 %v2892, %v2894
      %v2896 = vrot.slane %v2858, %v2895
      %v2898 = vunpack.c.l.s4 1966171168
      %v2899 = vunpack.c.0.s8 %v2898
      %v2900 = vlaneseq
      %v2901 = vshrl.u32 %v2900, 7
      %v2902 = vsub.s32 %v2899, %v2901
      %v2903 = vrot.slane %v2860, %v2902
      %v2905 = vunpack.c.l.s4 1966171168
      %v2906 = vunpack.c.0.s8 %v2905
      %v2907 = vlaneseq
      %v2908 = vshrl.u32 %v2907, 7
      %v2909 = vsub.s32 %v2906, %v2908
      %v2910 = vrot.slane %v2859, %v2909
      %v2912 = vunpack.c.l.s4 1966171168
      %v2913 = vunpack.c.0.s8 %v2912
      %v2914 = vlaneseq
      %v2915 = vshrl.u32 %v2914, 7
      %v2916 = vsub.s32 %v2913, %v2915
      %v2917 = vrot.slane %v2861, %v2916
      %v2918 = vcombine.low %v2868, %v2896
      %v2919 = vcombine.high %v2868, %v2896
      %v2920 = vcombine.low %v2875, %v2903
      %v2921 = vcombine.high %v2875, %v2903
      %v2922 = vcombine.low %v2882, %v2910
      %v2923 = vcombine.high %v2882, %v2910
      %v2924 = vcombine.low %v2889, %v2917
      %v2925 = vcombine.high %v2889, %v2917
      %v2926 = vcombine.low %v2541, %v2542
      %v2927 = vcombine.high %v2541, %v2542
      %v2928 = vcombine.low %v2543, %v2544
      %v2929 = vcombine.high %v2543, %v2544
      %v2930 = vcombine.low %v2545, %v2546
      %v2931 = vcombine.high %v2545, %v2546
      %v2932 = vcombine.low %v2547, %v2548
      %v2933 = vcombine.high %v2547, %v2548
      %v2935 = vunpack.c.l.s4 1966171168
      %v2936 = vunpack.c.0.s8 %v2935
      %v2937 = vlaneseq
      %v2938 = vshrl.u32 %v2937, 7
      %v2939 = vsub.s32 %v2936, %v2938
      %v2940 = vrot.slane %v2926, %v2939
      %v2942 = vunpack.c.l.s4 1966171168
      %v2943 = vunpack.c.0.s8 %v2942
      %v2944 = vlaneseq
      %v2945 = vshrl.u32 %v2944, 7
      %v2946 = vsub.s32 %v2943, %v2945
      %v2947 = vrot.slane %v2927, %v2946
      %v2949 = vunpack.c.l.s4 1966171168
      %v2950 = vunpack.c.0.s8 %v2949
      %v2951 = vlaneseq
      %v2952 = vshrl.u32 %v2951, 7
      %v2953 = vsub.s32 %v2950, %v2952
      %v2954 = vrot.slane %v2928, %v2953
      %v2956 = vunpack.c.l.s4 1966171168
      %v2957 = vunpack.c.0.s8 %v2956
      %v2958 = vlaneseq
      %v2959 = vshrl.u32 %v2958, 7
      %v2960 = vsub.s32 %v2957, %v2959
      %v2961 = vrot.slane %v2929, %v2960
      %v2963 = vunpack.c.l.s4 1966171168
      %v2964 = vunpack.c.0.s8 %v2963
      %v2965 = vlaneseq
      %v2966 = vshrl.u32 %v2965, 7
      %v2967 = vsub.s32 %v2964, %v2966
      %v2968 = vrot.slane %v2930, %v2967
      %v2970 = vunpack.c.l.s4 1966171168
      %v2971 = vunpack.c.0.s8 %v2970
      %v2972 = vlaneseq
      %v2973 = vshrl.u32 %v2972, 7
      %v2974 = vsub.s32 %v2971, %v2973
      %v2975 = vrot.slane %v2931, %v2974
      %v2977 = vunpack.c.l.s4 1966171168
      %v2978 = vunpack.c.0.s8 %v2977
      %v2979 = vlaneseq
      %v2980 = vshrl.u32 %v2979, 7
      %v2981 = vsub.s32 %v2978, %v2980
      %v2982 = vrot.slane %v2932, %v2981
      %v2984 = vunpack.c.l.s4 1966171168
      %v2985 = vunpack.c.0.s8 %v2984
      %v2986 = vlaneseq
      %v2987 = vshrl.u32 %v2986, 7
      %v2988 = vsub.s32 %v2985, %v2987
      %v2989 = vrot.slane %v2933, %v2988
      %v2990 = vcombine.low %v2940, %v2954
      %v2991 = vcombine.high %v2940, %v2954
      %v2992 = vcombine.low %v2947, %v2961
      %v2993 = vcombine.high %v2947, %v2961
      %v2994 = vcombine.low %v2968, %v2982
      %v2995 = vcombine.high %v2968, %v2982
      %v2996 = vcombine.low %v2975, %v2989
      %v2997 = vcombine.high %v2975, %v2989
      %v2999 = vunpack.c.l.s4 1966171168
      %v3000 = vunpack.c.0.s8 %v2999
      %v3001 = vlaneseq
      %v3002 = vshrl.u32 %v3001, 7
      %v3003 = vsub.s32 %v3000, %v3002
      %v3004 = vrot.slane %v2990, %v3003
      %v3006 = vunpack.c.l.s4 1966171168
      %v3007 = vunpack.c.0.s8 %v3006
      %v3008 = vlaneseq
      %v3009 = vshrl.u32 %v3008, 7
      %v3010 = vsub.s32 %v3007, %v3009
      %v3011 = vrot.slane %v2992, %v3010
      %v3013 = vunpack.c.l.s4 1966171168
      %v3014 = vunpack.c.0.s8 %v3013
      %v3015 = vlaneseq
      %v3016 = vshrl.u32 %v3015, 7
      %v3017 = vsub.s32 %v3014, %v3016
      %v3018 = vrot.slane %v2991, %v3017
      %v3020 = vunpack.c.l.s4 1966171168
      %v3021 = vunpack.c.0.s8 %v3020
      %v3022 = vlaneseq
      %v3023 = vshrl.u32 %v3022, 7
      %v3024 = vsub.s32 %v3021, %v3023
      %v3025 = vrot.slane %v2993, %v3024
      %v3027 = vunpack.c.l.s4 1966171168
      %v3028 = vunpack.c.0.s8 %v3027
      %v3029 = vlaneseq
      %v3030 = vshrl.u32 %v3029, 7
      %v3031 = vsub.s32 %v3028, %v3030
      %v3032 = vrot.slane %v2994, %v3031
      %v3034 = vunpack.c.l.s4 1966171168
      %v3035 = vunpack.c.0.s8 %v3034
      %v3036 = vlaneseq
      %v3037 = vshrl.u32 %v3036, 7
      %v3038 = vsub.s32 %v3035, %v3037
      %v3039 = vrot.slane %v2996, %v3038
      %v3041 = vunpack.c.l.s4 1966171168
      %v3042 = vunpack.c.0.s8 %v3041
      %v3043 = vlaneseq
      %v3044 = vshrl.u32 %v3043, 7
      %v3045 = vsub.s32 %v3042, %v3044
      %v3046 = vrot.slane %v2995, %v3045
      %v3048 = vunpack.c.l.s4 1966171168
      %v3049 = vunpack.c.0.s8 %v3048
      %v3050 = vlaneseq
      %v3051 = vshrl.u32 %v3050, 7
      %v3052 = vsub.s32 %v3049, %v3051
      %v3053 = vrot.slane %v2997, %v3052
      %v3054 = vcombine.low %v3004, %v3032
      %v3055 = vcombine.high %v3004, %v3032
      %v3056 = vcombine.low %v3011, %v3039
      %v3057 = vcombine.high %v3011, %v3039
      %v3058 = vcombine.low %v3018, %v3046
      %v3059 = vcombine.high %v3018, %v3046
      %v3060 = vcombine.low %v3025, %v3053
      %v3061 = vcombine.high %v3025, %v3053
      %v3062 = vcombine.low %v2549, %v2550
      %v3063 = vcombine.high %v2549, %v2550
      %v3064 = vcombine.low %v2551, %v2552
      %v3065 = vcombine.high %v2551, %v2552
      %v3066 = vcombine.low %v2553, %v2554
      %v3067 = vcombine.high %v2553, %v2554
      %v3068 = vcombine.low %v2555, %v2556
      %v3069 = vcombine.high %v2555, %v2556
      %v3071 = vunpack.c.l.s4 1966171168
      %v3072 = vunpack.c.0.s8 %v3071
      %v3073 = vlaneseq
      %v3074 = vshrl.u32 %v3073, 7
      %v3075 = vsub.s32 %v3072, %v3074
      %v3076 = vrot.slane %v3062, %v3075
      %v3078 = vunpack.c.l.s4 1966171168
      %v3079 = vunpack.c.0.s8 %v3078
      %v3080 = vlaneseq
      %v3081 = vshrl.u32 %v3080, 7
      %v3082 = vsub.s32 %v3079, %v3081
      %v3083 = vrot.slane %v3063, %v3082
      %v3085 = vunpack.c.l.s4 1966171168
      %v3086 = vunpack.c.0.s8 %v3085
      %v3087 = vlaneseq
      %v3088 = vshrl.u32 %v3087, 7
      %v3089 = vsub.s32 %v3086, %v3088
      %v3090 = vrot.slane %v3064, %v3089
      %v3092 = vunpack.c.l.s4 1966171168
      %v3093 = vunpack.c.0.s8 %v3092
      %v3094 = vlaneseq
      %v3095 = vshrl.u32 %v3094, 7
      %v3096 = vsub.s32 %v3093, %v3095
      %v3097 = vrot.slane %v3065, %v3096
      %v3099 = vunpack.c.l.s4 1966171168
      %v3100 = vunpack.c.0.s8 %v3099
      %v3101 = vlaneseq
      %v3102 = vshrl.u32 %v3101, 7
      %v3103 = vsub.s32 %v3100, %v3102
      %v3104 = vrot.slane %v3066, %v3103
      %v3106 = vunpack.c.l.s4 1966171168
      %v3107 = vunpack.c.0.s8 %v3106
      %v3108 = vlaneseq
      %v3109 = vshrl.u32 %v3108, 7
      %v3110 = vsub.s32 %v3107, %v3109
      %v3111 = vrot.slane %v3067, %v3110
      %v3113 = vunpack.c.l.s4 1966171168
      %v3114 = vunpack.c.0.s8 %v3113
      %v3115 = vlaneseq
      %v3116 = vshrl.u32 %v3115, 7
      %v3117 = vsub.s32 %v3114, %v3116
      %v3118 = vrot.slane %v3068, %v3117
      %v3120 = vunpack.c.l.s4 1966171168
      %v3121 = vunpack.c.0.s8 %v3120
      %v3122 = vlaneseq
      %v3123 = vshrl.u32 %v3122, 7
      %v3124 = vsub.s32 %v3121, %v3123
      %v3125 = vrot.slane %v3069, %v3124
      %v3126 = vcombine.low %v3076, %v3090
      %v3127 = vcombine.high %v3076, %v3090
      %v3128 = vcombine.low %v3083, %v3097
      %v3129 = vcombine.high %v3083, %v3097
      %v3130 = vcombine.low %v3104, %v3118
      %v3131 = vcombine.high %v3104, %v3118
      %v3132 = vcombine.low %v3111, %v3125
      %v3133 = vcombine.high %v3111, %v3125
      %v3135 = vunpack.c.l.s4 1966171168
      %v3136 = vunpack.c.0.s8 %v3135
      %v3137 = vlaneseq
      %v3138 = vshrl.u32 %v3137, 7
      %v3139 = vsub.s32 %v3136, %v3138
      %v3140 = vrot.slane %v3126, %v3139
      %v3142 = vunpack.c.l.s4 1966171168
      %v3143 = vunpack.c.0.s8 %v3142
      %v3144 = vlaneseq
      %v3145 = vshrl.u32 %v3144, 7
      %v3146 = vsub.s32 %v3143, %v3145
      %v3147 = vrot.slane %v3128, %v3146
      %v3149 = vunpack.c.l.s4 1966171168
      %v3150 = vunpack.c.0.s8 %v3149
      %v3151 = vlaneseq
      %v3152 = vshrl.u32 %v3151, 7
      %v3153 = vsub.s32 %v3150, %v3152
      %v3154 = vrot.slane %v3127, %v3153
      %v3156 = vunpack.c.l.s4 1966171168
      %v3157 = vunpack.c.0.s8 %v3156
      %v3158 = vlaneseq
      %v3159 = vshrl.u32 %v3158, 7
      %v3160 = vsub.s32 %v3157, %v3159
      %v3161 = vrot.slane %v3129, %v3160
      %v3163 = vunpack.c.l.s4 1966171168
      %v3164 = vunpack.c.0.s8 %v3163
      %v3165 = vlaneseq
      %v3166 = vshrl.u32 %v3165, 7
      %v3167 = vsub.s32 %v3164, %v3166
      %v3168 = vrot.slane %v3130, %v3167
      %v3170 = vunpack.c.l.s4 1966171168
      %v3171 = vunpack.c.0.s8 %v3170
      %v3172 = vlaneseq
      %v3173 = vshrl.u32 %v3172, 7
      %v3174 = vsub.s32 %v3171, %v3173
      %v3175 = vrot.slane %v3132, %v3174
      %v3177 = vunpack.c.l.s4 1966171168
      %v3178 = vunpack.c.0.s8 %v3177
      %v3179 = vlaneseq
      %v3180 = vshrl.u32 %v3179, 7
      %v3181 = vsub.s32 %v3178, %v3180
      %v3182 = vrot.slane %v3131, %v3181
      %v3184 = vunpack.c.l.s4 1966171168
      %v3185 = vunpack.c.0.s8 %v3184
      %v3186 = vlaneseq
      %v3187 = vshrl.u32 %v3186, 7
      %v3188 = vsub.s32 %v3185, %v3187
      %v3189 = vrot.slane %v3133, %v3188
      %v3190 = vcombine.low %v3140, %v3168
      %v3191 = vcombine.high %v3140, %v3168
      %v3192 = vcombine.low %v3147, %v3175
      %v3193 = vcombine.high %v3147, %v3175
      %v3194 = vcombine.low %v3154, %v3182
      %v3195 = vcombine.high %v3154, %v3182
      %v3196 = vcombine.low %v3161, %v3189
      %v3197 = vcombine.high %v3161, %v3189
      %v3198 = vcombine.low %v2557, %v2558
      %v3199 = vcombine.high %v2557, %v2558
      %v3200 = vcombine.low %v2559, %v2560
      %v3201 = vcombine.high %v2559, %v2560
      %v3202 = vcombine.low %v2561, %v2562
      %v3203 = vcombine.high %v2561, %v2562
      %v3204 = vcombine.low %v2563, %v2564
      %v3205 = vcombine.high %v2563, %v2564
      %v3207 = vunpack.c.l.s4 1966171168
      %v3208 = vunpack.c.0.s8 %v3207
      %v3209 = vlaneseq
      %v3210 = vshrl.u32 %v3209, 7
      %v3211 = vsub.s32 %v3208, %v3210
      %v3212 = vrot.slane %v3198, %v3211
      %v3214 = vunpack.c.l.s4 1966171168
      %v3215 = vunpack.c.0.s8 %v3214
      %v3216 = vlaneseq
      %v3217 = vshrl.u32 %v3216, 7
      %v3218 = vsub.s32 %v3215, %v3217
      %v3219 = vrot.slane %v3199, %v3218
      %v3221 = vunpack.c.l.s4 1966171168
      %v3222 = vunpack.c.0.s8 %v3221
      %v3223 = vlaneseq
      %v3224 = vshrl.u32 %v3223, 7
      %v3225 = vsub.s32 %v3222, %v3224
      %v3226 = vrot.slane %v3200, %v3225
      %v3228 = vunpack.c.l.s4 1966171168
      %v3229 = vunpack.c.0.s8 %v3228
      %v3230 = vlaneseq
      %v3231 = vshrl.u32 %v3230, 7
      %v3232 = vsub.s32 %v3229, %v3231
      %v3233 = vrot.slane %v3201, %v3232
      %v3235 = vunpack.c.l.s4 1966171168
      %v3236 = vunpack.c.0.s8 %v3235
      %v3237 = vlaneseq
      %v3238 = vshrl.u32 %v3237, 7
      %v3239 = vsub.s32 %v3236, %v3238
      %v3240 = vrot.slane %v3202, %v3239
      %v3242 = vunpack.c.l.s4 1966171168
      %v3243 = vunpack.c.0.s8 %v3242
      %v3244 = vlaneseq
      %v3245 = vshrl.u32 %v3244, 7
      %v3246 = vsub.s32 %v3243, %v3245
      %v3247 = vrot.slane %v3203, %v3246
      %v3249 = vunpack.c.l.s4 1966171168
      %v3250 = vunpack.c.0.s8 %v3249
      %v3251 = vlaneseq
      %v3252 = vshrl.u32 %v3251, 7
      %v3253 = vsub.s32 %v3250, %v3252
      %v3254 = vrot.slane %v3204, %v3253
      %v3256 = vunpack.c.l.s4 1966171168
      %v3257 = vunpack.c.0.s8 %v3256
      %v3258 = vlaneseq
      %v3259 = vshrl.u32 %v3258, 7
      %v3260 = vsub.s32 %v3257, %v3259
      %v3261 = vrot.slane %v3205, %v3260
      %v3262 = vcombine.low %v3212, %v3226
      %v3263 = vcombine.high %v3212, %v3226
      %v3264 = vcombine.low %v3219, %v3233
      %v3265 = vcombine.high %v3219, %v3233
      %v3266 = vcombine.low %v3240, %v3254
      %v3267 = vcombine.high %v3240, %v3254
      %v3268 = vcombine.low %v3247, %v3261
      %v3269 = vcombine.high %v3247, %v3261
      %v3271 = vunpack.c.l.s4 1966171168
      %v3272 = vunpack.c.0.s8 %v3271
      %v3273 = vlaneseq
      %v3274 = vshrl.u32 %v3273, 7
      %v3275 = vsub.s32 %v3272, %v3274
      %v3276 = vrot.slane %v3262, %v3275
      %v3278 = vunpack.c.l.s4 1966171168
      %v3279 = vunpack.c.0.s8 %v3278
      %v3280 = vlaneseq
      %v3281 = vshrl.u32 %v3280, 7
      %v3282 = vsub.s32 %v3279, %v3281
      %v3283 = vrot.slane %v3264, %v3282
      %v3285 = vunpack.c.l.s4 1966171168
      %v3286 = vunpack.c.0.s8 %v3285
      %v3287 = vlaneseq
      %v3288 = vshrl.u32 %v3287, 7
      %v3289 = vsub.s32 %v3286, %v3288
      %v3290 = vrot.slane %v3263, %v3289
      %v3292 = vunpack.c.l.s4 1966171168
      %v3293 = vunpack.c.0.s8 %v3292
      %v3294 = vlaneseq
      %v3295 = vshrl.u32 %v3294, 7
      %v3296 = vsub.s32 %v3293, %v3295
      %v3297 = vrot.slane %v3265, %v3296
      %v3299 = vunpack.c.l.s4 1966171168
      %v3300 = vunpack.c.0.s8 %v3299
      %v3301 = vlaneseq
      %v3302 = vshrl.u32 %v3301, 7
      %v3303 = vsub.s32 %v3300, %v3302
      %v3304 = vrot.slane %v3266, %v3303
      %v3306 = vunpack.c.l.s4 1966171168
      %v3307 = vunpack.c.0.s8 %v3306
      %v3308 = vlaneseq
      %v3309 = vshrl.u32 %v3308, 7
      %v3310 = vsub.s32 %v3307, %v3309
      %v3311 = vrot.slane %v3268, %v3310
      %v3313 = vunpack.c.l.s4 1966171168
      %v3314 = vunpack.c.0.s8 %v3313
      %v3315 = vlaneseq
      %v3316 = vshrl.u32 %v3315, 7
      %v3317 = vsub.s32 %v3314, %v3316
      %v3318 = vrot.slane %v3267, %v3317
      %v3320 = vunpack.c.l.s4 1966171168
      %v3321 = vunpack.c.0.s8 %v3320
      %v3322 = vlaneseq
      %v3323 = vshrl.u32 %v3322, 7
      %v3324 = vsub.s32 %v3321, %v3323
      %v3325 = vrot.slane %v3269, %v3324
      %v3326 = vcombine.low %v3276, %v3304
      %v3327 = vcombine.high %v3276, %v3304
      %v3328 = vcombine.low %v3283, %v3311
      %v3329 = vcombine.high %v3283, %v3311
      %v3330 = vcombine.low %v3290, %v3318
      %v3331 = vcombine.high %v3290, %v3318
      %v3332 = vcombine.low %v3297, %v3325
      %v3333 = vcombine.high %v3297, %v3325
      %v3334 = vcombine.low %v2565, %v2566
      %v3335 = vcombine.high %v2565, %v2566
      %v3336 = vcombine.low %v2567, %v2568
      %v3337 = vcombine.high %v2567, %v2568
      %v3338 = vcombine.low %v2569, %v2570
      %v3339 = vcombine.high %v2569, %v2570
      %v3340 = vcombine.low %v2571, %v2572
      %v3341 = vcombine.high %v2571, %v2572
      %v3343 = vunpack.c.l.s4 1966171168
      %v3344 = vunpack.c.0.s8 %v3343
      %v3345 = vlaneseq
      %v3346 = vshrl.u32 %v3345, 7
      %v3347 = vsub.s32 %v3344, %v3346
      %v3348 = vrot.slane %v3334, %v3347
      %v3350 = vunpack.c.l.s4 1966171168
      %v3351 = vunpack.c.0.s8 %v3350
      %v3352 = vlaneseq
      %v3353 = vshrl.u32 %v3352, 7
      %v3354 = vsub.s32 %v3351, %v3353
      %v3355 = vrot.slane %v3335, %v3354
      %v3357 = vunpack.c.l.s4 1966171168
      %v3358 = vunpack.c.0.s8 %v3357
      %v3359 = vlaneseq
      %v3360 = vshrl.u32 %v3359, 7
      %v3361 = vsub.s32 %v3358, %v3360
      %v3362 = vrot.slane %v3336, %v3361
      %v3364 = vunpack.c.l.s4 1966171168
      %v3365 = vunpack.c.0.s8 %v3364
      %v3366 = vlaneseq
      %v3367 = vshrl.u32 %v3366, 7
      %v3368 = vsub.s32 %v3365, %v3367
      %v3369 = vrot.slane %v3337, %v3368
      %v3371 = vunpack.c.l.s4 1966171168
      %v3372 = vunpack.c.0.s8 %v3371
      %v3373 = vlaneseq
      %v3374 = vshrl.u32 %v3373, 7
      %v3375 = vsub.s32 %v3372, %v3374
      %v3376 = vrot.slane %v3338, %v3375
      %v3378 = vunpack.c.l.s4 1966171168
      %v3379 = vunpack.c.0.s8 %v3378
      %v3380 = vlaneseq
      %v3381 = vshrl.u32 %v3380, 7
      %v3382 = vsub.s32 %v3379, %v3381
      %v3383 = vrot.slane %v3339, %v3382
      %v3385 = vunpack.c.l.s4 1966171168
      %v3386 = vunpack.c.0.s8 %v3385
      %v3387 = vlaneseq
      %v3388 = vshrl.u32 %v3387, 7
      %v3389 = vsub.s32 %v3386, %v3388
      %v3390 = vrot.slane %v3340, %v3389
      %v3392 = vunpack.c.l.s4 1966171168
      %v3393 = vunpack.c.0.s8 %v3392
      %v3394 = vlaneseq
      %v3395 = vshrl.u32 %v3394, 7
      %v3396 = vsub.s32 %v3393, %v3395
      %v3397 = vrot.slane %v3341, %v3396
      %v3398 = vcombine.low %v3348, %v3362
      %v3399 = vcombine.high %v3348, %v3362
      %v3400 = vcombine.low %v3355, %v3369
      %v3401 = vcombine.high %v3355, %v3369
      %v3402 = vcombine.low %v3376, %v3390
      %v3403 = vcombine.high %v3376, %v3390
      %v3404 = vcombine.low %v3383, %v3397
      %v3405 = vcombine.high %v3383, %v3397
      %v3407 = vunpack.c.l.s4 1966171168
      %v3408 = vunpack.c.0.s8 %v3407
      %v3409 = vlaneseq
      %v3410 = vshrl.u32 %v3409, 7
      %v3411 = vsub.s32 %v3408, %v3410
      %v3412 = vrot.slane %v3398, %v3411
      %v3414 = vunpack.c.l.s4 1966171168
      %v3415 = vunpack.c.0.s8 %v3414
      %v3416 = vlaneseq
      %v3417 = vshrl.u32 %v3416, 7
      %v3418 = vsub.s32 %v3415, %v3417
      %v3419 = vrot.slane %v3400, %v3418
      %v3421 = vunpack.c.l.s4 1966171168
      %v3422 = vunpack.c.0.s8 %v3421
      %v3423 = vlaneseq
      %v3424 = vshrl.u32 %v3423, 7
      %v3425 = vsub.s32 %v3422, %v3424
      %v3426 = vrot.slane %v3399, %v3425
      %v3428 = vunpack.c.l.s4 1966171168
      %v3429 = vunpack.c.0.s8 %v3428
      %v3430 = vlaneseq
      %v3431 = vshrl.u32 %v3430, 7
      %v3432 = vsub.s32 %v3429, %v3431
      %v3433 = vrot.slane %v3401, %v3432
      %v3435 = vunpack.c.l.s4 1966171168
      %v3436 = vunpack.c.0.s8 %v3435
      %v3437 = vlaneseq
      %v3438 = vshrl.u32 %v3437, 7
      %v3439 = vsub.s32 %v3436, %v3438
      %v3440 = vrot.slane %v3402, %v3439
      %v3442 = vunpack.c.l.s4 1966171168
      %v3443 = vunpack.c.0.s8 %v3442
      %v3444 = vlaneseq
      %v3445 = vshrl.u32 %v3444, 7
      %v3446 = vsub.s32 %v3443, %v3445
      %v3447 = vrot.slane %v3404, %v3446
      %v3449 = vunpack.c.l.s4 1966171168
      %v3450 = vunpack.c.0.s8 %v3449
      %v3451 = vlaneseq
      %v3452 = vshrl.u32 %v3451, 7
      %v3453 = vsub.s32 %v3450, %v3452
      %v3454 = vrot.slane %v3403, %v3453
      %v3456 = vunpack.c.l.s4 1966171168
      %v3457 = vunpack.c.0.s8 %v3456
      %v3458 = vlaneseq
      %v3459 = vshrl.u32 %v3458, 7
      %v3460 = vsub.s32 %v3457, %v3459
      %v3461 = vrot.slane %v3405, %v3460
      %v3462 = vcombine.low %v3412, %v3440
      %v3463 = vcombine.high %v3412, %v3440
      %v3464 = vcombine.low %v3419, %v3447
      %v3465 = vcombine.high %v3419, %v3447
      %v3466 = vcombine.low %v3426, %v3454
      %v3467 = vcombine.high %v3426, %v3454
      %v3468 = vcombine.low %v3433, %v3461
      %v3469 = vcombine.high %v3433, %v3461
      %v3470 = vcombine.low %v2573, %v2574
      %v3471 = vcombine.high %v2573, %v2574
      %v3472 = vcombine.low %v2575, %v2576
      %v3473 = vcombine.high %v2575, %v2576
      %v3474 = vcombine.low %v2577, %v2578
      %v3475 = vcombine.high %v2577, %v2578
      %v3476 = vcombine.low %v2579, %v2580
      %v3477 = vcombine.high %v2579, %v2580
      %v3479 = vunpack.c.l.s4 1966171168
      %v3480 = vunpack.c.0.s8 %v3479
      %v3481 = vlaneseq
      %v3482 = vshrl.u32 %v3481, 7
      %v3483 = vsub.s32 %v3480, %v3482
      %v3484 = vrot.slane %v3470, %v3483
      %v3486 = vunpack.c.l.s4 1966171168
      %v3487 = vunpack.c.0.s8 %v3486
      %v3488 = vlaneseq
      %v3489 = vshrl.u32 %v3488, 7
      %v3490 = vsub.s32 %v3487, %v3489
      %v3491 = vrot.slane %v3471, %v3490
      %v3493 = vunpack.c.l.s4 1966171168
      %v3494 = vunpack.c.0.s8 %v3493
      %v3495 = vlaneseq
      %v3496 = vshrl.u32 %v3495, 7
      %v3497 = vsub.s32 %v3494, %v3496
      %v3498 = vrot.slane %v3472, %v3497
      %v3500 = vunpack.c.l.s4 1966171168
      %v3501 = vunpack.c.0.s8 %v3500
      %v3502 = vlaneseq
      %v3503 = vshrl.u32 %v3502, 7
      %v3504 = vsub.s32 %v3501, %v3503
      %v3505 = vrot.slane %v3473, %v3504
      %v3507 = vunpack.c.l.s4 1966171168
      %v3508 = vunpack.c.0.s8 %v3507
      %v3509 = vlaneseq
      %v3510 = vshrl.u32 %v3509, 7
      %v3511 = vsub.s32 %v3508, %v3510
      %v3512 = vrot.slane %v3474, %v3511
      %v3514 = vunpack.c.l.s4 1966171168
      %v3515 = vunpack.c.0.s8 %v3514
      %v3516 = vlaneseq
      %v3517 = vshrl.u32 %v3516, 7
      %v3518 = vsub.s32 %v3515, %v3517
      %v3519 = vrot.slane %v3475, %v3518
      %v3521 = vunpack.c.l.s4 1966171168
      %v3522 = vunpack.c.0.s8 %v3521
      %v3523 = vlaneseq
      %v3524 = vshrl.u32 %v3523, 7
      %v3525 = vsub.s32 %v3522, %v3524
      %v3526 = vrot.slane %v3476, %v3525
      %v3528 = vunpack.c.l.s4 1966171168
      %v3529 = vunpack.c.0.s8 %v3528
      %v3530 = vlaneseq
      %v3531 = vshrl.u32 %v3530, 7
      %v3532 = vsub.s32 %v3529, %v3531
      %v3533 = vrot.slane %v3477, %v3532
      %v3534 = vcombine.low %v3484, %v3498
      %v3535 = vcombine.high %v3484, %v3498
      %v3536 = vcombine.low %v3491, %v3505
      %v3537 = vcombine.high %v3491, %v3505
      %v3538 = vcombine.low %v3512, %v3526
      %v3539 = vcombine.high %v3512, %v3526
      %v3540 = vcombine.low %v3519, %v3533
      %v3541 = vcombine.high %v3519, %v3533
      %v3543 = vunpack.c.l.s4 1966171168
      %v3544 = vunpack.c.0.s8 %v3543
      %v3545 = vlaneseq
      %v3546 = vshrl.u32 %v3545, 7
      %v3547 = vsub.s32 %v3544, %v3546
      %v3548 = vrot.slane %v3534, %v3547
      %v3550 = vunpack.c.l.s4 1966171168
      %v3551 = vunpack.c.0.s8 %v3550
      %v3552 = vlaneseq
      %v3553 = vshrl.u32 %v3552, 7
      %v3554 = vsub.s32 %v3551, %v3553
      %v3555 = vrot.slane %v3536, %v3554
      %v3557 = vunpack.c.l.s4 1966171168
      %v3558 = vunpack.c.0.s8 %v3557
      %v3559 = vlaneseq
      %v3560 = vshrl.u32 %v3559, 7
      %v3561 = vsub.s32 %v3558, %v3560
      %v3562 = vrot.slane %v3535, %v3561
      %v3564 = vunpack.c.l.s4 1966171168
      %v3565 = vunpack.c.0.s8 %v3564
      %v3566 = vlaneseq
      %v3567 = vshrl.u32 %v3566, 7
      %v3568 = vsub.s32 %v3565, %v3567
      %v3569 = vrot.slane %v3537, %v3568
      %v3571 = vunpack.c.l.s4 1966171168
      %v3572 = vunpack.c.0.s8 %v3571
      %v3573 = vlaneseq
      %v3574 = vshrl.u32 %v3573, 7
      %v3575 = vsub.s32 %v3572, %v3574
      %v3576 = vrot.slane %v3538, %v3575
      %v3578 = vunpack.c.l.s4 1966171168
      %v3579 = vunpack.c.0.s8 %v3578
      %v3580 = vlaneseq
      %v3581 = vshrl.u32 %v3580, 7
      %v3582 = vsub.s32 %v3579, %v3581
      %v3583 = vrot.slane %v3540, %v3582
      %v3585 = vunpack.c.l.s4 1966171168
      %v3586 = vunpack.c.0.s8 %v3585
      %v3587 = vlaneseq
      %v3588 = vshrl.u32 %v3587, 7
      %v3589 = vsub.s32 %v3586, %v3588
      %v3590 = vrot.slane %v3539, %v3589
      %v3592 = vunpack.c.l.s4 1966171168
      %v3593 = vunpack.c.0.s8 %v3592
      %v3594 = vlaneseq
      %v3595 = vshrl.u32 %v3594, 7
      %v3596 = vsub.s32 %v3593, %v3595
      %v3597 = vrot.slane %v3541, %v3596
      %v3598 = vcombine.low %v3548, %v3576
      %v3599 = vcombine.high %v3548, %v3576
      %v3600 = vcombine.low %v3555, %v3583
      %v3601 = vcombine.high %v3555, %v3583
      %v3602 = vcombine.low %v3562, %v3590
      %v3603 = vcombine.high %v3562, %v3590
      %v3604 = vcombine.low %v3569, %v3597
      %v3605 = vcombine.high %v3569, %v3597
      %v3606 = vcombine.low %v2581, %v2582
      %v3607 = vcombine.high %v2581, %v2582
      %v3608 = vcombine.low %v2583, %v2584
      %v3609 = vcombine.high %v2583, %v2584
      %v3610 = vcombine.low %v2585, %v2586
      %v3611 = vcombine.high %v2585, %v2586
      %v3612 = vcombine.low %v2587, %v2588
      %v3613 = vcombine.high %v2587, %v2588
      %v3615 = vunpack.c.l.s4 1966171168
      %v3616 = vunpack.c.0.s8 %v3615
      %v3617 = vlaneseq
      %v3618 = vshrl.u32 %v3617, 7
      %v3619 = vsub.s32 %v3616, %v3618
      %v3620 = vrot.slane %v3606, %v3619
      %v3622 = vunpack.c.l.s4 1966171168
      %v3623 = vunpack.c.0.s8 %v3622
      %v3624 = vlaneseq
      %v3625 = vshrl.u32 %v3624, 7
      %v3626 = vsub.s32 %v3623, %v3625
      %v3627 = vrot.slane %v3607, %v3626
      %v3629 = vunpack.c.l.s4 1966171168
      %v3630 = vunpack.c.0.s8 %v3629
      %v3631 = vlaneseq
      %v3632 = vshrl.u32 %v3631, 7
      %v3633 = vsub.s32 %v3630, %v3632
      %v3634 = vrot.slane %v3608, %v3633
      %v3636 = vunpack.c.l.s4 1966171168
      %v3637 = vunpack.c.0.s8 %v3636
      %v3638 = vlaneseq
      %v3639 = vshrl.u32 %v3638, 7
      %v3640 = vsub.s32 %v3637, %v3639
      %v3641 = vrot.slane %v3609, %v3640
      %v3643 = vunpack.c.l.s4 1966171168
      %v3644 = vunpack.c.0.s8 %v3643
      %v3645 = vlaneseq
      %v3646 = vshrl.u32 %v3645, 7
      %v3647 = vsub.s32 %v3644, %v3646
      %v3648 = vrot.slane %v3610, %v3647
      %v3650 = vunpack.c.l.s4 1966171168
      %v3651 = vunpack.c.0.s8 %v3650
      %v3652 = vlaneseq
      %v3653 = vshrl.u32 %v3652, 7
      %v3654 = vsub.s32 %v3651, %v3653
      %v3655 = vrot.slane %v3611, %v3654
      %v3657 = vunpack.c.l.s4 1966171168
      %v3658 = vunpack.c.0.s8 %v3657
      %v3659 = vlaneseq
      %v3660 = vshrl.u32 %v3659, 7
      %v3661 = vsub.s32 %v3658, %v3660
      %v3662 = vrot.slane %v3612, %v3661
      %v3664 = vunpack.c.l.s4 1966171168
      %v3665 = vunpack.c.0.s8 %v3664
      %v3666 = vlaneseq
      %v3667 = vshrl.u32 %v3666, 7
      %v3668 = vsub.s32 %v3665, %v3667
      %v3669 = vrot.slane %v3613, %v3668
      %v3670 = vcombine.low %v3620, %v3634
      %v3671 = vcombine.high %v3620, %v3634
      %v3672 = vcombine.low %v3627, %v3641
      %v3673 = vcombine.high %v3627, %v3641
      %v3674 = vcombine.low %v3648, %v3662
      %v3675 = vcombine.high %v3648, %v3662
      %v3676 = vcombine.low %v3655, %v3669
      %v3677 = vcombine.high %v3655, %v3669
      %v3679 = vunpack.c.l.s4 1966171168
      %v3680 = vunpack.c.0.s8 %v3679
      %v3681 = vlaneseq
      %v3682 = vshrl.u32 %v3681, 7
      %v3683 = vsub.s32 %v3680, %v3682
      %v3684 = vrot.slane %v3670, %v3683
      %v3686 = vunpack.c.l.s4 1966171168
      %v3687 = vunpack.c.0.s8 %v3686
      %v3688 = vlaneseq
      %v3689 = vshrl.u32 %v3688, 7
      %v3690 = vsub.s32 %v3687, %v3689
      %v3691 = vrot.slane %v3672, %v3690
      %v3693 = vunpack.c.l.s4 1966171168
      %v3694 = vunpack.c.0.s8 %v3693
      %v3695 = vlaneseq
      %v3696 = vshrl.u32 %v3695, 7
      %v3697 = vsub.s32 %v3694, %v3696
      %v3698 = vrot.slane %v3671, %v3697
      %v3700 = vunpack.c.l.s4 1966171168
      %v3701 = vunpack.c.0.s8 %v3700
      %v3702 = vlaneseq
      %v3703 = vshrl.u32 %v3702, 7
      %v3704 = vsub.s32 %v3701, %v3703
      %v3705 = vrot.slane %v3673, %v3704
      %v3707 = vunpack.c.l.s4 1966171168
      %v3708 = vunpack.c.0.s8 %v3707
      %v3709 = vlaneseq
      %v3710 = vshrl.u32 %v3709, 7
      %v3711 = vsub.s32 %v3708, %v3710
      %v3712 = vrot.slane %v3674, %v3711
      %v3714 = vunpack.c.l.s4 1966171168
      %v3715 = vunpack.c.0.s8 %v3714
      %v3716 = vlaneseq
      %v3717 = vshrl.u32 %v3716, 7
      %v3718 = vsub.s32 %v3715, %v3717
      %v3719 = vrot.slane %v3676, %v3718
      %v3721 = vunpack.c.l.s4 1966171168
      %v3722 = vunpack.c.0.s8 %v3721
      %v3723 = vlaneseq
      %v3724 = vshrl.u32 %v3723, 7
      %v3725 = vsub.s32 %v3722, %v3724
      %v3726 = vrot.slane %v3675, %v3725
      %v3728 = vunpack.c.l.s4 1966171168
      %v3729 = vunpack.c.0.s8 %v3728
      %v3730 = vlaneseq
      %v3731 = vshrl.u32 %v3730, 7
      %v3732 = vsub.s32 %v3729, %v3731
      %v3733 = vrot.slane %v3677, %v3732
      %v3734 = vcombine.low %v3684, %v3712
      %v3735 = vcombine.high %v3684, %v3712
      %v3736 = vcombine.low %v3691, %v3719
      %v3737 = vcombine.high %v3691, %v3719
      %v3738 = vcombine.low %v3698, %v3726
      %v3739 = vcombine.high %v3698, %v3726
      %v3740 = vcombine.low %v3705, %v3733
      %v3741 = vcombine.high %v3705, %v3733
      %v3742 = vcombine.low %v2589, %v2590
      %v3743 = vcombine.high %v2589, %v2590
      %v3744 = vcombine.low %v2591, %v2592
      %v3745 = vcombine.high %v2591, %v2592
      %v3746 = vcombine.low %v2593, %v2594
      %v3747 = vcombine.high %v2593, %v2594
      %v3748 = vcombine.low %v2595, %v2596
      %v3749 = vcombine.high %v2595, %v2596
      %v3751 = vunpack.c.l.s4 1966171168
      %v3752 = vunpack.c.0.s8 %v3751
      %v3753 = vlaneseq
      %v3754 = vshrl.u32 %v3753, 7
      %v3755 = vsub.s32 %v3752, %v3754
      %v3756 = vrot.slane %v3742, %v3755
      %v3758 = vunpack.c.l.s4 1966171168
      %v3759 = vunpack.c.0.s8 %v3758
      %v3760 = vlaneseq
      %v3761 = vshrl.u32 %v3760, 7
      %v3762 = vsub.s32 %v3759, %v3761
      %v3763 = vrot.slane %v3743, %v3762
      %v3765 = vunpack.c.l.s4 1966171168
      %v3766 = vunpack.c.0.s8 %v3765
      %v3767 = vlaneseq
      %v3768 = vshrl.u32 %v3767, 7
      %v3769 = vsub.s32 %v3766, %v3768
      %v3770 = vrot.slane %v3744, %v3769
      %v3772 = vunpack.c.l.s4 1966171168
      %v3773 = vunpack.c.0.s8 %v3772
      %v3774 = vlaneseq
      %v3775 = vshrl.u32 %v3774, 7
      %v3776 = vsub.s32 %v3773, %v3775
      %v3777 = vrot.slane %v3745, %v3776
      %v3779 = vunpack.c.l.s4 1966171168
      %v3780 = vunpack.c.0.s8 %v3779
      %v3781 = vlaneseq
      %v3782 = vshrl.u32 %v3781, 7
      %v3783 = vsub.s32 %v3780, %v3782
      %v3784 = vrot.slane %v3746, %v3783
      %v3786 = vunpack.c.l.s4 1966171168
      %v3787 = vunpack.c.0.s8 %v3786
      %v3788 = vlaneseq
      %v3789 = vshrl.u32 %v3788, 7
      %v3790 = vsub.s32 %v3787, %v3789
      %v3791 = vrot.slane %v3747, %v3790
      %v3793 = vunpack.c.l.s4 1966171168
      %v3794 = vunpack.c.0.s8 %v3793
      %v3795 = vlaneseq
      %v3796 = vshrl.u32 %v3795, 7
      %v3797 = vsub.s32 %v3794, %v3796
      %v3798 = vrot.slane %v3748, %v3797
      %v3800 = vunpack.c.l.s4 1966171168
      %v3801 = vunpack.c.0.s8 %v3800
      %v3802 = vlaneseq
      %v3803 = vshrl.u32 %v3802, 7
      %v3804 = vsub.s32 %v3801, %v3803
      %v3805 = vrot.slane %v3749, %v3804
      %v3806 = vcombine.low %v3756, %v3770
      %v3807 = vcombine.high %v3756, %v3770
      %v3808 = vcombine.low %v3763, %v3777
      %v3809 = vcombine.high %v3763, %v3777
      %v3810 = vcombine.low %v3784, %v3798
      %v3811 = vcombine.high %v3784, %v3798
      %v3812 = vcombine.low %v3791, %v3805
      %v3813 = vcombine.high %v3791, %v3805
      %v3815 = vunpack.c.l.s4 1966171168
      %v3816 = vunpack.c.0.s8 %v3815
      %v3817 = vlaneseq
      %v3818 = vshrl.u32 %v3817, 7
      %v3819 = vsub.s32 %v3816, %v3818
      %v3820 = vrot.slane %v3806, %v3819
      %v3822 = vunpack.c.l.s4 1966171168
      %v3823 = vunpack.c.0.s8 %v3822
      %v3824 = vlaneseq
      %v3825 = vshrl.u32 %v3824, 7
      %v3826 = vsub.s32 %v3823, %v3825
      %v3827 = vrot.slane %v3808, %v3826
      %v3829 = vunpack.c.l.s4 1966171168
      %v3830 = vunpack.c.0.s8 %v3829
      %v3831 = vlaneseq
      %v3832 = vshrl.u32 %v3831, 7
      %v3833 = vsub.s32 %v3830, %v3832
      %v3834 = vrot.slane %v3807, %v3833
      %v3836 = vunpack.c.l.s4 1966171168
      %v3837 = vunpack.c.0.s8 %v3836
      %v3838 = vlaneseq
      %v3839 = vshrl.u32 %v3838, 7
      %v3840 = vsub.s32 %v3837, %v3839
      %v3841 = vrot.slane %v3809, %v3840
      %v3843 = vunpack.c.l.s4 1966171168
      %v3844 = vunpack.c.0.s8 %v3843
      %v3845 = vlaneseq
      %v3846 = vshrl.u32 %v3845, 7
      %v3847 = vsub.s32 %v3844, %v3846
      %v3848 = vrot.slane %v3810, %v3847
      %v3850 = vunpack.c.l.s4 1966171168
      %v3851 = vunpack.c.0.s8 %v3850
      %v3852 = vlaneseq
      %v3853 = vshrl.u32 %v3852, 7
      %v3854 = vsub.s32 %v3851, %v3853
      %v3855 = vrot.slane %v3812, %v3854
      %v3857 = vunpack.c.l.s4 1966171168
      %v3858 = vunpack.c.0.s8 %v3857
      %v3859 = vlaneseq
      %v3860 = vshrl.u32 %v3859, 7
      %v3861 = vsub.s32 %v3858, %v3860
      %v3862 = vrot.slane %v3811, %v3861
      %v3864 = vunpack.c.l.s4 1966171168
      %v3865 = vunpack.c.0.s8 %v3864
      %v3866 = vlaneseq
      %v3867 = vshrl.u32 %v3866, 7
      %v3868 = vsub.s32 %v3865, %v3867
      %v3869 = vrot.slane %v3813, %v3868
      %v3870 = vcombine.low %v3820, %v3848
      %v3871 = vcombine.high %v3820, %v3848
      %v3872 = vcombine.low %v3827, %v3855
      %v3873 = vcombine.high %v3827, %v3855
      %v3874 = vcombine.low %v3834, %v3862
      %v3875 = vcombine.high %v3834, %v3862
      %v3876 = vcombine.low %v3841, %v3869
      %v3877 = vcombine.high %v3841, %v3869
      %v3878 = vcombine.low %v2597, %v2598
      %v3879 = vcombine.high %v2597, %v2598
      %v3880 = vcombine.low %v2599, %v2600
      %v3881 = vcombine.high %v2599, %v2600
      %v3882 = vcombine.low %v2601, %v2602
      %v3883 = vcombine.high %v2601, %v2602
      %v3884 = vcombine.low %v2603, %v2604
      %v3885 = vcombine.high %v2603, %v2604
      %v3887 = vunpack.c.l.s4 1966171168
      %v3888 = vunpack.c.0.s8 %v3887
      %v3889 = vlaneseq
      %v3890 = vshrl.u32 %v3889, 7
      %v3891 = vsub.s32 %v3888, %v3890
      %v3892 = vrot.slane %v3878, %v3891
      %v3894 = vunpack.c.l.s4 1966171168
      %v3895 = vunpack.c.0.s8 %v3894
      %v3896 = vlaneseq
      %v3897 = vshrl.u32 %v3896, 7
      %v3898 = vsub.s32 %v3895, %v3897
      %v3899 = vrot.slane %v3879, %v3898
      %v3901 = vunpack.c.l.s4 1966171168
      %v3902 = vunpack.c.0.s8 %v3901
      %v3903 = vlaneseq
      %v3904 = vshrl.u32 %v3903, 7
      %v3905 = vsub.s32 %v3902, %v3904
      %v3906 = vrot.slane %v3880, %v3905
      %v3908 = vunpack.c.l.s4 1966171168
      %v3909 = vunpack.c.0.s8 %v3908
      %v3910 = vlaneseq
      %v3911 = vshrl.u32 %v3910, 7
      %v3912 = vsub.s32 %v3909, %v3911
      %v3913 = vrot.slane %v3881, %v3912
      %v3915 = vunpack.c.l.s4 1966171168
      %v3916 = vunpack.c.0.s8 %v3915
      %v3917 = vlaneseq
      %v3918 = vshrl.u32 %v3917, 7
      %v3919 = vsub.s32 %v3916, %v3918
      %v3920 = vrot.slane %v3882, %v3919
      %v3922 = vunpack.c.l.s4 1966171168
      %v3923 = vunpack.c.0.s8 %v3922
      %v3924 = vlaneseq
      %v3925 = vshrl.u32 %v3924, 7
      %v3926 = vsub.s32 %v3923, %v3925
      %v3927 = vrot.slane %v3883, %v3926
      %v3929 = vunpack.c.l.s4 1966171168
      %v3930 = vunpack.c.0.s8 %v3929
      %v3931 = vlaneseq
      %v3932 = vshrl.u32 %v3931, 7
      %v3933 = vsub.s32 %v3930, %v3932
      %v3934 = vrot.slane %v3884, %v3933
      %v3936 = vunpack.c.l.s4 1966171168
      %v3937 = vunpack.c.0.s8 %v3936
      %v3938 = vlaneseq
      %v3939 = vshrl.u32 %v3938, 7
      %v3940 = vsub.s32 %v3937, %v3939
      %v3941 = vrot.slane %v3885, %v3940
      %v3942 = vcombine.low %v3892, %v3906
      %v3943 = vcombine.high %v3892, %v3906
      %v3944 = vcombine.low %v3899, %v3913
      %v3945 = vcombine.high %v3899, %v3913
      %v3946 = vcombine.low %v3920, %v3934
      %v3947 = vcombine.high %v3920, %v3934
      %v3948 = vcombine.low %v3927, %v3941
      %v3949 = vcombine.high %v3927, %v3941
      %v3951 = vunpack.c.l.s4 1966171168
      %v3952 = vunpack.c.0.s8 %v3951
      %v3953 = vlaneseq
      %v3954 = vshrl.u32 %v3953, 7
      %v3955 = vsub.s32 %v3952, %v3954
      %v3956 = vrot.slane %v3942, %v3955
      %v3958 = vunpack.c.l.s4 1966171168
      %v3959 = vunpack.c.0.s8 %v3958
      %v3960 = vlaneseq
      %v3961 = vshrl.u32 %v3960, 7
      %v3962 = vsub.s32 %v3959, %v3961
      %v3963 = vrot.slane %v3944, %v3962
      %v3965 = vunpack.c.l.s4 1966171168
      %v3966 = vunpack.c.0.s8 %v3965
      %v3967 = vlaneseq
      %v3968 = vshrl.u32 %v3967, 7
      %v3969 = vsub.s32 %v3966, %v3968
      %v3970 = vrot.slane %v3943, %v3969
      %v3972 = vunpack.c.l.s4 1966171168
      %v3973 = vunpack.c.0.s8 %v3972
      %v3974 = vlaneseq
      %v3975 = vshrl.u32 %v3974, 7
      %v3976 = vsub.s32 %v3973, %v3975
      %v3977 = vrot.slane %v3945, %v3976
      %v3979 = vunpack.c.l.s4 1966171168
      %v3980 = vunpack.c.0.s8 %v3979
      %v3981 = vlaneseq
      %v3982 = vshrl.u32 %v3981, 7
      %v3983 = vsub.s32 %v3980, %v3982
      %v3984 = vrot.slane %v3946, %v3983
      %v3986 = vunpack.c.l.s4 1966171168
      %v3987 = vunpack.c.0.s8 %v3986
      %v3988 = vlaneseq
      %v3989 = vshrl.u32 %v3988, 7
      %v3990 = vsub.s32 %v3987, %v3989
      %v3991 = vrot.slane %v3948, %v3990
      %v3993 = vunpack.c.l.s4 1966171168
      %v3994 = vunpack.c.0.s8 %v3993
      %v3995 = vlaneseq
      %v3996 = vshrl.u32 %v3995, 7
      %v3997 = vsub.s32 %v3994, %v3996
      %v3998 = vrot.slane %v3947, %v3997
      %v4000 = vunpack.c.l.s4 1966171168
      %v4001 = vunpack.c.0.s8 %v4000
      %v4002 = vlaneseq
      %v4003 = vshrl.u32 %v4002, 7
      %v4004 = vsub.s32 %v4001, %v4003
      %v4005 = vrot.slane %v3949, %v4004
      %v4006 = vcombine.low %v3956, %v3984
      %v4007 = vcombine.high %v3956, %v3984
      %v4008 = vcombine.low %v3963, %v3991
      %v4009 = vcombine.high %v3963, %v3991
      %v4010 = vcombine.low %v3970, %v3998
      %v4011 = vcombine.high %v3970, %v3998
      %v4012 = vcombine.low %v3977, %v4005
      %v4013 = vcombine.high %v3977, %v4005
      %v4014 = vcombine.low %v2605, %v2606
      %v4015 = vcombine.high %v2605, %v2606
      %v4016 = vcombine.low %v2607, %v2608
      %v4017 = vcombine.high %v2607, %v2608
      %v4018 = vcombine.low %v2609, %v2610
      %v4019 = vcombine.high %v2609, %v2610
      %v4020 = vcombine.low %v2611, %v2612
      %v4021 = vcombine.high %v2611, %v2612
      %v4023 = vunpack.c.l.s4 1966171168
      %v4024 = vunpack.c.0.s8 %v4023
      %v4025 = vlaneseq
      %v4026 = vshrl.u32 %v4025, 7
      %v4027 = vsub.s32 %v4024, %v4026
      %v4028 = vrot.slane %v4014, %v4027
      %v4030 = vunpack.c.l.s4 1966171168
      %v4031 = vunpack.c.0.s8 %v4030
      %v4032 = vlaneseq
      %v4033 = vshrl.u32 %v4032, 7
      %v4034 = vsub.s32 %v4031, %v4033
      %v4035 = vrot.slane %v4015, %v4034
      %v4037 = vunpack.c.l.s4 1966171168
      %v4038 = vunpack.c.0.s8 %v4037
      %v4039 = vlaneseq
      %v4040 = vshrl.u32 %v4039, 7
      %v4041 = vsub.s32 %v4038, %v4040
      %v4042 = vrot.slane %v4016, %v4041
      %v4044 = vunpack.c.l.s4 1966171168
      %v4045 = vunpack.c.0.s8 %v4044
      %v4046 = vlaneseq
      %v4047 = vshrl.u32 %v4046, 7
      %v4048 = vsub.s32 %v4045, %v4047
      %v4049 = vrot.slane %v4017, %v4048
      %v4051 = vunpack.c.l.s4 1966171168
      %v4052 = vunpack.c.0.s8 %v4051
      %v4053 = vlaneseq
      %v4054 = vshrl.u32 %v4053, 7
      %v4055 = vsub.s32 %v4052, %v4054
      %v4056 = vrot.slane %v4018, %v4055
      %v4058 = vunpack.c.l.s4 1966171168
      %v4059 = vunpack.c.0.s8 %v4058
      %v4060 = vlaneseq
      %v4061 = vshrl.u32 %v4060, 7
      %v4062 = vsub.s32 %v4059, %v4061
      %v4063 = vrot.slane %v4019, %v4062
      %v4065 = vunpack.c.l.s4 1966171168
      %v4066 = vunpack.c.0.s8 %v4065
      %v4067 = vlaneseq
      %v4068 = vshrl.u32 %v4067, 7
      %v4069 = vsub.s32 %v4066, %v4068
      %v4070 = vrot.slane %v4020, %v4069
      %v4072 = vunpack.c.l.s4 1966171168
      %v4073 = vunpack.c.0.s8 %v4072
      %v4074 = vlaneseq
      %v4075 = vshrl.u32 %v4074, 7
      %v4076 = vsub.s32 %v4073, %v4075
      %v4077 = vrot.slane %v4021, %v4076
      %v4078 = vcombine.low %v4028, %v4042
      %v4079 = vcombine.high %v4028, %v4042
      %v4080 = vcombine.low %v4035, %v4049
      %v4081 = vcombine.high %v4035, %v4049
      %v4082 = vcombine.low %v4056, %v4070
      %v4083 = vcombine.high %v4056, %v4070
      %v4084 = vcombine.low %v4063, %v4077
      %v4085 = vcombine.high %v4063, %v4077
      %v4087 = vunpack.c.l.s4 1966171168
      %v4088 = vunpack.c.0.s8 %v4087
      %v4089 = vlaneseq
      %v4090 = vshrl.u32 %v4089, 7
      %v4091 = vsub.s32 %v4088, %v4090
      %v4092 = vrot.slane %v4078, %v4091
      %v4094 = vunpack.c.l.s4 1966171168
      %v4095 = vunpack.c.0.s8 %v4094
      %v4096 = vlaneseq
      %v4097 = vshrl.u32 %v4096, 7
      %v4098 = vsub.s32 %v4095, %v4097
      %v4099 = vrot.slane %v4080, %v4098
      %v4101 = vunpack.c.l.s4 1966171168
      %v4102 = vunpack.c.0.s8 %v4101
      %v4103 = vlaneseq
      %v4104 = vshrl.u32 %v4103, 7
      %v4105 = vsub.s32 %v4102, %v4104
      %v4106 = vrot.slane %v4079, %v4105
      %v4108 = vunpack.c.l.s4 1966171168
      %v4109 = vunpack.c.0.s8 %v4108
      %v4110 = vlaneseq
      %v4111 = vshrl.u32 %v4110, 7
      %v4112 = vsub.s32 %v4109, %v4111
      %v4113 = vrot.slane %v4081, %v4112
      %v4115 = vunpack.c.l.s4 1966171168
      %v4116 = vunpack.c.0.s8 %v4115
      %v4117 = vlaneseq
      %v4118 = vshrl.u32 %v4117, 7
      %v4119 = vsub.s32 %v4116, %v4118
      %v4120 = vrot.slane %v4082, %v4119
      %v4122 = vunpack.c.l.s4 1966171168
      %v4123 = vunpack.c.0.s8 %v4122
      %v4124 = vlaneseq
      %v4125 = vshrl.u32 %v4124, 7
      %v4126 = vsub.s32 %v4123, %v4125
      %v4127 = vrot.slane %v4084, %v4126
      %v4129 = vunpack.c.l.s4 1966171168
      %v4130 = vunpack.c.0.s8 %v4129
      %v4131 = vlaneseq
      %v4132 = vshrl.u32 %v4131, 7
      %v4133 = vsub.s32 %v4130, %v4132
      %v4134 = vrot.slane %v4083, %v4133
      %v4136 = vunpack.c.l.s4 1966171168
      %v4137 = vunpack.c.0.s8 %v4136
      %v4138 = vlaneseq
      %v4139 = vshrl.u32 %v4138, 7
      %v4140 = vsub.s32 %v4137, %v4139
      %v4141 = vrot.slane %v4085, %v4140
      %v4142 = vcombine.low %v4092, %v4120
      %v4143 = vcombine.high %v4092, %v4120
      %v4144 = vcombine.low %v4099, %v4127
      %v4145 = vcombine.high %v4099, %v4127
      %v4146 = vcombine.low %v4106, %v4134
      %v4147 = vcombine.high %v4106, %v4134
      %v4148 = vcombine.low %v4113, %v4141
      %v4149 = vcombine.high %v4113, %v4141
      %v4150 = vcombine.low %v2613, %v2614
      %v4151 = vcombine.high %v2613, %v2614
      %v4152 = vcombine.low %v2615, %v2616
      %v4153 = vcombine.high %v2615, %v2616
      %v4154 = vcombine.low %v2617, %v2618
      %v4155 = vcombine.high %v2617, %v2618
      %v4156 = vcombine.low %v2619, %v2620
      %v4157 = vcombine.high %v2619, %v2620
      %v4159 = vunpack.c.l.s4 1966171168
      %v4160 = vunpack.c.0.s8 %v4159
      %v4161 = vlaneseq
      %v4162 = vshrl.u32 %v4161, 7
      %v4163 = vsub.s32 %v4160, %v4162
      %v4164 = vrot.slane %v4150, %v4163
      %v4166 = vunpack.c.l.s4 1966171168
      %v4167 = vunpack.c.0.s8 %v4166
      %v4168 = vlaneseq
      %v4169 = vshrl.u32 %v4168, 7
      %v4170 = vsub.s32 %v4167, %v4169
      %v4171 = vrot.slane %v4151, %v4170
      %v4173 = vunpack.c.l.s4 1966171168
      %v4174 = vunpack.c.0.s8 %v4173
      %v4175 = vlaneseq
      %v4176 = vshrl.u32 %v4175, 7
      %v4177 = vsub.s32 %v4174, %v4176
      %v4178 = vrot.slane %v4152, %v4177
      %v4180 = vunpack.c.l.s4 1966171168
      %v4181 = vunpack.c.0.s8 %v4180
      %v4182 = vlaneseq
      %v4183 = vshrl.u32 %v4182, 7
      %v4184 = vsub.s32 %v4181, %v4183
      %v4185 = vrot.slane %v4153, %v4184
      %v4187 = vunpack.c.l.s4 1966171168
      %v4188 = vunpack.c.0.s8 %v4187
      %v4189 = vlaneseq
      %v4190 = vshrl.u32 %v4189, 7
      %v4191 = vsub.s32 %v4188, %v4190
      %v4192 = vrot.slane %v4154, %v4191
      %v4194 = vunpack.c.l.s4 1966171168
      %v4195 = vunpack.c.0.s8 %v4194
      %v4196 = vlaneseq
      %v4197 = vshrl.u32 %v4196, 7
      %v4198 = vsub.s32 %v4195, %v4197
      %v4199 = vrot.slane %v4155, %v4198
      %v4201 = vunpack.c.l.s4 1966171168
      %v4202 = vunpack.c.0.s8 %v4201
      %v4203 = vlaneseq
      %v4204 = vshrl.u32 %v4203, 7
      %v4205 = vsub.s32 %v4202, %v4204
      %v4206 = vrot.slane %v4156, %v4205
      %v4208 = vunpack.c.l.s4 1966171168
      %v4209 = vunpack.c.0.s8 %v4208
      %v4210 = vlaneseq
      %v4211 = vshrl.u32 %v4210, 7
      %v4212 = vsub.s32 %v4209, %v4211
      %v4213 = vrot.slane %v4157, %v4212
      %v4214 = vcombine.low %v4164, %v4178
      %v4215 = vcombine.high %v4164, %v4178
      %v4216 = vcombine.low %v4171, %v4185
      %v4217 = vcombine.high %v4171, %v4185
      %v4218 = vcombine.low %v4192, %v4206
      %v4219 = vcombine.high %v4192, %v4206
      %v4220 = vcombine.low %v4199, %v4213
      %v4221 = vcombine.high %v4199, %v4213
      %v4223 = vunpack.c.l.s4 1966171168
      %v4224 = vunpack.c.0.s8 %v4223
      %v4225 = vlaneseq
      %v4226 = vshrl.u32 %v4225, 7
      %v4227 = vsub.s32 %v4224, %v4226
      %v4228 = vrot.slane %v4214, %v4227
      %v4230 = vunpack.c.l.s4 1966171168
      %v4231 = vunpack.c.0.s8 %v4230
      %v4232 = vlaneseq
      %v4233 = vshrl.u32 %v4232, 7
      %v4234 = vsub.s32 %v4231, %v4233
      %v4235 = vrot.slane %v4216, %v4234
      %v4237 = vunpack.c.l.s4 1966171168
      %v4238 = vunpack.c.0.s8 %v4237
      %v4239 = vlaneseq
      %v4240 = vshrl.u32 %v4239, 7
      %v4241 = vsub.s32 %v4238, %v4240
      %v4242 = vrot.slane %v4215, %v4241
      %v4244 = vunpack.c.l.s4 1966171168
      %v4245 = vunpack.c.0.s8 %v4244
      %v4246 = vlaneseq
      %v4247 = vshrl.u32 %v4246, 7
      %v4248 = vsub.s32 %v4245, %v4247
      %v4249 = vrot.slane %v4217, %v4248
      %v4251 = vunpack.c.l.s4 1966171168
      %v4252 = vunpack.c.0.s8 %v4251
      %v4253 = vlaneseq
      %v4254 = vshrl.u32 %v4253, 7
      %v4255 = vsub.s32 %v4252, %v4254
      %v4256 = vrot.slane %v4218, %v4255
      %v4258 = vunpack.c.l.s4 1966171168
      %v4259 = vunpack.c.0.s8 %v4258
      %v4260 = vlaneseq
      %v4261 = vshrl.u32 %v4260, 7
      %v4262 = vsub.s32 %v4259, %v4261
      %v4263 = vrot.slane %v4220, %v4262
      %v4265 = vunpack.c.l.s4 1966171168
      %v4266 = vunpack.c.0.s8 %v4265
      %v4267 = vlaneseq
      %v4268 = vshrl.u32 %v4267, 7
      %v4269 = vsub.s32 %v4266, %v4268
      %v4270 = vrot.slane %v4219, %v4269
      %v4272 = vunpack.c.l.s4 1966171168
      %v4273 = vunpack.c.0.s8 %v4272
      %v4274 = vlaneseq
      %v4275 = vshrl.u32 %v4274, 7
      %v4276 = vsub.s32 %v4273, %v4275
      %v4277 = vrot.slane %v4221, %v4276
      %v4278 = vcombine.low %v4228, %v4256
      %v4279 = vcombine.high %v4228, %v4256
      %v4280 = vcombine.low %v4235, %v4263
      %v4281 = vcombine.high %v4235, %v4263
      %v4282 = vcombine.low %v4242, %v4270
      %v4283 = vcombine.high %v4242, %v4270
      %v4284 = vcombine.low %v4249, %v4277
      %v4285 = vcombine.high %v4249, %v4277
      %v4286 = vcombine.low %v2621, %v2622
      %v4287 = vcombine.high %v2621, %v2622
      %v4288 = vcombine.low %v2623, %v2624
      %v4289 = vcombine.high %v2623, %v2624
      %v4290 = vcombine.low %v2625, %v2626
      %v4291 = vcombine.high %v2625, %v2626
      %v4292 = vcombine.low %v2627, %v2628
      %v4293 = vcombine.high %v2627, %v2628
      %v4295 = vunpack.c.l.s4 1966171168
      %v4296 = vunpack.c.0.s8 %v4295
      %v4297 = vlaneseq
      %v4298 = vshrl.u32 %v4297, 7
      %v4299 = vsub.s32 %v4296, %v4298
      %v4300 = vrot.slane %v4286, %v4299
      %v4302 = vunpack.c.l.s4 1966171168
      %v4303 = vunpack.c.0.s8 %v4302
      %v4304 = vlaneseq
      %v4305 = vshrl.u32 %v4304, 7
      %v4306 = vsub.s32 %v4303, %v4305
      %v4307 = vrot.slane %v4287, %v4306
      %v4309 = vunpack.c.l.s4 1966171168
      %v4310 = vunpack.c.0.s8 %v4309
      %v4311 = vlaneseq
      %v4312 = vshrl.u32 %v4311, 7
      %v4313 = vsub.s32 %v4310, %v4312
      %v4314 = vrot.slane %v4288, %v4313
      %v4316 = vunpack.c.l.s4 1966171168
      %v4317 = vunpack.c.0.s8 %v4316
      %v4318 = vlaneseq
      %v4319 = vshrl.u32 %v4318, 7
      %v4320 = vsub.s32 %v4317, %v4319
      %v4321 = vrot.slane %v4289, %v4320
      %v4323 = vunpack.c.l.s4 1966171168
      %v4324 = vunpack.c.0.s8 %v4323
      %v4325 = vlaneseq
      %v4326 = vshrl.u32 %v4325, 7
      %v4327 = vsub.s32 %v4324, %v4326
      %v4328 = vrot.slane %v4290, %v4327
      %v4330 = vunpack.c.l.s4 1966171168
      %v4331 = vunpack.c.0.s8 %v4330
      %v4332 = vlaneseq
      %v4333 = vshrl.u32 %v4332, 7
      %v4334 = vsub.s32 %v4331, %v4333
      %v4335 = vrot.slane %v4291, %v4334
      %v4337 = vunpack.c.l.s4 1966171168
      %v4338 = vunpack.c.0.s8 %v4337
      %v4339 = vlaneseq
      %v4340 = vshrl.u32 %v4339, 7
      %v4341 = vsub.s32 %v4338, %v4340
      %v4342 = vrot.slane %v4292, %v4341
      %v4344 = vunpack.c.l.s4 1966171168
      %v4345 = vunpack.c.0.s8 %v4344
      %v4346 = vlaneseq
      %v4347 = vshrl.u32 %v4346, 7
      %v4348 = vsub.s32 %v4345, %v4347
      %v4349 = vrot.slane %v4293, %v4348
      %v4350 = vcombine.low %v4300, %v4314
      %v4351 = vcombine.high %v4300, %v4314
      %v4352 = vcombine.low %v4307, %v4321
      %v4353 = vcombine.high %v4307, %v4321
      %v4354 = vcombine.low %v4328, %v4342
      %v4355 = vcombine.high %v4328, %v4342
      %v4356 = vcombine.low %v4335, %v4349
      %v4357 = vcombine.high %v4335, %v4349
      %v4359 = vunpack.c.l.s4 1966171168
      %v4360 = vunpack.c.0.s8 %v4359
      %v4361 = vlaneseq
      %v4362 = vshrl.u32 %v4361, 7
      %v4363 = vsub.s32 %v4360, %v4362
      %v4364 = vrot.slane %v4350, %v4363
      %v4366 = vunpack.c.l.s4 1966171168
      %v4367 = vunpack.c.0.s8 %v4366
      %v4368 = vlaneseq
      %v4369 = vshrl.u32 %v4368, 7
      %v4370 = vsub.s32 %v4367, %v4369
      %v4371 = vrot.slane %v4352, %v4370
      %v4373 = vunpack.c.l.s4 1966171168
      %v4374 = vunpack.c.0.s8 %v4373
      %v4375 = vlaneseq
      %v4376 = vshrl.u32 %v4375, 7
      %v4377 = vsub.s32 %v4374, %v4376
      %v4378 = vrot.slane %v4351, %v4377
      %v4380 = vunpack.c.l.s4 1966171168
      %v4381 = vunpack.c.0.s8 %v4380
      %v4382 = vlaneseq
      %v4383 = vshrl.u32 %v4382, 7
      %v4384 = vsub.s32 %v4381, %v4383
      %v4385 = vrot.slane %v4353, %v4384
      %v4387 = vunpack.c.l.s4 1966171168
      %v4388 = vunpack.c.0.s8 %v4387
      %v4389 = vlaneseq
      %v4390 = vshrl.u32 %v4389, 7
      %v4391 = vsub.s32 %v4388, %v4390
      %v4392 = vrot.slane %v4354, %v4391
      %v4394 = vunpack.c.l.s4 1966171168
      %v4395 = vunpack.c.0.s8 %v4394
      %v4396 = vlaneseq
      %v4397 = vshrl.u32 %v4396, 7
      %v4398 = vsub.s32 %v4395, %v4397
      %v4399 = vrot.slane %v4356, %v4398
      %v4401 = vunpack.c.l.s4 1966171168
      %v4402 = vunpack.c.0.s8 %v4401
      %v4403 = vlaneseq
      %v4404 = vshrl.u32 %v4403, 7
      %v4405 = vsub.s32 %v4402, %v4404
      %v4406 = vrot.slane %v4355, %v4405
      %v4408 = vunpack.c.l.s4 1966171168
      %v4409 = vunpack.c.0.s8 %v4408
      %v4410 = vlaneseq
      %v4411 = vshrl.u32 %v4410, 7
      %v4412 = vsub.s32 %v4409, %v4411
      %v4413 = vrot.slane %v4357, %v4412
      %v4414 = vcombine.low %v4364, %v4392
      %v4415 = vcombine.high %v4364, %v4392
      %v4416 = vcombine.low %v4371, %v4399
      %v4417 = vcombine.high %v4371, %v4399
      %v4418 = vcombine.low %v4378, %v4406
      %v4419 = vcombine.high %v4378, %v4406
      %v4420 = vcombine.low %v4385, %v4413
      %v4421 = vcombine.high %v4385, %v4413
      %v4422 = vcombine.low %v2629, %v2630
      %v4423 = vcombine.high %v2629, %v2630
      %v4424 = vcombine.low %v2631, %v2632
      %v4425 = vcombine.high %v2631, %v2632
      %v4426 = vcombine.low %v2633, %v2634
      %v4427 = vcombine.high %v2633, %v2634
      %v4428 = vcombine.low %v2635, %v2636
      %v4429 = vcombine.high %v2635, %v2636
      %v4431 = vunpack.c.l.s4 1966171168
      %v4432 = vunpack.c.0.s8 %v4431
      %v4433 = vlaneseq
      %v4434 = vshrl.u32 %v4433, 7
      %v4435 = vsub.s32 %v4432, %v4434
      %v4436 = vrot.slane %v4422, %v4435
      %v4438 = vunpack.c.l.s4 1966171168
      %v4439 = vunpack.c.0.s8 %v4438
      %v4440 = vlaneseq
      %v4441 = vshrl.u32 %v4440, 7
      %v4442 = vsub.s32 %v4439, %v4441
      %v4443 = vrot.slane %v4423, %v4442
      %v4445 = vunpack.c.l.s4 1966171168
      %v4446 = vunpack.c.0.s8 %v4445
      %v4447 = vlaneseq
      %v4448 = vshrl.u32 %v4447, 7
      %v4449 = vsub.s32 %v4446, %v4448
      %v4450 = vrot.slane %v4424, %v4449
      %v4452 = vunpack.c.l.s4 1966171168
      %v4453 = vunpack.c.0.s8 %v4452
      %v4454 = vlaneseq
      %v4455 = vshrl.u32 %v4454, 7
      %v4456 = vsub.s32 %v4453, %v4455
      %v4457 = vrot.slane %v4425, %v4456
      %v4459 = vunpack.c.l.s4 1966171168
      %v4460 = vunpack.c.0.s8 %v4459
      %v4461 = vlaneseq
      %v4462 = vshrl.u32 %v4461, 7
      %v4463 = vsub.s32 %v4460, %v4462
      %v4464 = vrot.slane %v4426, %v4463
      %v4466 = vunpack.c.l.s4 1966171168
      %v4467 = vunpack.c.0.s8 %v4466
      %v4468 = vlaneseq
      %v4469 = vshrl.u32 %v4468, 7
      %v4470 = vsub.s32 %v4467, %v4469
      %v4471 = vrot.slane %v4427, %v4470
      %v4473 = vunpack.c.l.s4 1966171168
      %v4474 = vunpack.c.0.s8 %v4473
      %v4475 = vlaneseq
      %v4476 = vshrl.u32 %v4475, 7
      %v4477 = vsub.s32 %v4474, %v4476
      %v4478 = vrot.slane %v4428, %v4477
      %v4480 = vunpack.c.l.s4 1966171168
      %v4481 = vunpack.c.0.s8 %v4480
      %v4482 = vlaneseq
      %v4483 = vshrl.u32 %v4482, 7
      %v4484 = vsub.s32 %v4481, %v4483
      %v4485 = vrot.slane %v4429, %v4484
      %v4486 = vcombine.low %v4436, %v4450
      %v4487 = vcombine.high %v4436, %v4450
      %v4488 = vcombine.low %v4443, %v4457
      %v4489 = vcombine.high %v4443, %v4457
      %v4490 = vcombine.low %v4464, %v4478
      %v4491 = vcombine.high %v4464, %v4478
      %v4492 = vcombine.low %v4471, %v4485
      %v4493 = vcombine.high %v4471, %v4485
      %v4495 = vunpack.c.l.s4 1966171168
      %v4496 = vunpack.c.0.s8 %v4495
      %v4497 = vlaneseq
      %v4498 = vshrl.u32 %v4497, 7
      %v4499 = vsub.s32 %v4496, %v4498
      %v4500 = vrot.slane %v4486, %v4499
      %v4502 = vunpack.c.l.s4 1966171168
      %v4503 = vunpack.c.0.s8 %v4502
      %v4504 = vlaneseq
      %v4505 = vshrl.u32 %v4504, 7
      %v4506 = vsub.s32 %v4503, %v4505
      %v4507 = vrot.slane %v4488, %v4506
      %v4509 = vunpack.c.l.s4 1966171168
      %v4510 = vunpack.c.0.s8 %v4509
      %v4511 = vlaneseq
      %v4512 = vshrl.u32 %v4511, 7
      %v4513 = vsub.s32 %v4510, %v4512
      %v4514 = vrot.slane %v4487, %v4513
      %v4516 = vunpack.c.l.s4 1966171168
      %v4517 = vunpack.c.0.s8 %v4516
      %v4518 = vlaneseq
      %v4519 = vshrl.u32 %v4518, 7
      %v4520 = vsub.s32 %v4517, %v4519
      %v4521 = vrot.slane %v4489, %v4520
      %v4523 = vunpack.c.l.s4 1966171168
      %v4524 = vunpack.c.0.s8 %v4523
      %v4525 = vlaneseq
      %v4526 = vshrl.u32 %v4525, 7
      %v4527 = vsub.s32 %v4524, %v4526
      %v4528 = vrot.slane %v4490, %v4527
      %v4530 = vunpack.c.l.s4 1966171168
      %v4531 = vunpack.c.0.s8 %v4530
      %v4532 = vlaneseq
      %v4533 = vshrl.u32 %v4532, 7
      %v4534 = vsub.s32 %v4531, %v4533
      %v4535 = vrot.slane %v4492, %v4534
      %v4537 = vunpack.c.l.s4 1966171168
      %v4538 = vunpack.c.0.s8 %v4537
      %v4539 = vlaneseq
      %v4540 = vshrl.u32 %v4539, 7
      %v4541 = vsub.s32 %v4538, %v4540
      %v4542 = vrot.slane %v4491, %v4541
      %v4544 = vunpack.c.l.s4 1966171168
      %v4545 = vunpack.c.0.s8 %v4544
      %v4546 = vlaneseq
      %v4547 = vshrl.u32 %v4546, 7
      %v4548 = vsub.s32 %v4545, %v4547
      %v4549 = vrot.slane %v4493, %v4548
      %v4550 = vcombine.low %v4500, %v4528
      %v4551 = vcombine.high %v4500, %v4528
      %v4552 = vcombine.low %v4507, %v4535
      %v4553 = vcombine.high %v4507, %v4535
      %v4554 = vcombine.low %v4514, %v4542
      %v4555 = vcombine.high %v4514, %v4542
      %v4556 = vcombine.low %v4521, %v4549
      %v4557 = vcombine.high %v4521, %v4549
      %v4558 = vcombine.low %v2637, %v2638
      %v4559 = vcombine.high %v2637, %v2638
      %v4560 = vcombine.low %v2639, %v2640
      %v4561 = vcombine.high %v2639, %v2640
      %v4562 = vcombine.low %v2641, %v2642
      %v4563 = vcombine.high %v2641, %v2642
      %v4564 = vcombine.low %v2643, %v2644
      %v4565 = vcombine.high %v2643, %v2644
      %v4567 = vunpack.c.l.s4 1966171168
      %v4568 = vunpack.c.0.s8 %v4567
      %v4569 = vlaneseq
      %v4570 = vshrl.u32 %v4569, 7
      %v4571 = vsub.s32 %v4568, %v4570
      %v4572 = vrot.slane %v4558, %v4571
      %v4574 = vunpack.c.l.s4 1966171168
      %v4575 = vunpack.c.0.s8 %v4574
      %v4576 = vlaneseq
      %v4577 = vshrl.u32 %v4576, 7
      %v4578 = vsub.s32 %v4575, %v4577
      %v4579 = vrot.slane %v4559, %v4578
      %v4581 = vunpack.c.l.s4 1966171168
      %v4582 = vunpack.c.0.s8 %v4581
      %v4583 = vlaneseq
      %v4584 = vshrl.u32 %v4583, 7
      %v4585 = vsub.s32 %v4582, %v4584
      %v4586 = vrot.slane %v4560, %v4585
      %v4588 = vunpack.c.l.s4 1966171168
      %v4589 = vunpack.c.0.s8 %v4588
      %v4590 = vlaneseq
      %v4591 = vshrl.u32 %v4590, 7
      %v4592 = vsub.s32 %v4589, %v4591
      %v4593 = vrot.slane %v4561, %v4592
      %v4595 = vunpack.c.l.s4 1966171168
      %v4596 = vunpack.c.0.s8 %v4595
      %v4597 = vlaneseq
      %v4598 = vshrl.u32 %v4597, 7
      %v4599 = vsub.s32 %v4596, %v4598
      %v4600 = vrot.slane %v4562, %v4599
      %v4602 = vunpack.c.l.s4 1966171168
      %v4603 = vunpack.c.0.s8 %v4602
      %v4604 = vlaneseq
      %v4605 = vshrl.u32 %v4604, 7
      %v4606 = vsub.s32 %v4603, %v4605
      %v4607 = vrot.slane %v4563, %v4606
      %v4609 = vunpack.c.l.s4 1966171168
      %v4610 = vunpack.c.0.s8 %v4609
      %v4611 = vlaneseq
      %v4612 = vshrl.u32 %v4611, 7
      %v4613 = vsub.s32 %v4610, %v4612
      %v4614 = vrot.slane %v4564, %v4613
      %v4616 = vunpack.c.l.s4 1966171168
      %v4617 = vunpack.c.0.s8 %v4616
      %v4618 = vlaneseq
      %v4619 = vshrl.u32 %v4618, 7
      %v4620 = vsub.s32 %v4617, %v4619
      %v4621 = vrot.slane %v4565, %v4620
      %v4622 = vcombine.low %v4572, %v4586
      %v4623 = vcombine.high %v4572, %v4586
      %v4624 = vcombine.low %v4579, %v4593
      %v4625 = vcombine.high %v4579, %v4593
      %v4626 = vcombine.low %v4600, %v4614
      %v4627 = vcombine.high %v4600, %v4614
      %v4628 = vcombine.low %v4607, %v4621
      %v4629 = vcombine.high %v4607, %v4621
      %v4631 = vunpack.c.l.s4 1966171168
      %v4632 = vunpack.c.0.s8 %v4631
      %v4633 = vlaneseq
      %v4634 = vshrl.u32 %v4633, 7
      %v4635 = vsub.s32 %v4632, %v4634
      %v4636 = vrot.slane %v4622, %v4635
      %v4638 = vunpack.c.l.s4 1966171168
      %v4639 = vunpack.c.0.s8 %v4638
      %v4640 = vlaneseq
      %v4641 = vshrl.u32 %v4640, 7
      %v4642 = vsub.s32 %v4639, %v4641
      %v4643 = vrot.slane %v4624, %v4642
      %v4645 = vunpack.c.l.s4 1966171168
      %v4646 = vunpack.c.0.s8 %v4645
      %v4647 = vlaneseq
      %v4648 = vshrl.u32 %v4647, 7
      %v4649 = vsub.s32 %v4646, %v4648
      %v4650 = vrot.slane %v4623, %v4649
      %v4652 = vunpack.c.l.s4 1966171168
      %v4653 = vunpack.c.0.s8 %v4652
      %v4654 = vlaneseq
      %v4655 = vshrl.u32 %v4654, 7
      %v4656 = vsub.s32 %v4653, %v4655
      %v4657 = vrot.slane %v4625, %v4656
      %v4659 = vunpack.c.l.s4 1966171168
      %v4660 = vunpack.c.0.s8 %v4659
      %v4661 = vlaneseq
      %v4662 = vshrl.u32 %v4661, 7
      %v4663 = vsub.s32 %v4660, %v4662
      %v4664 = vrot.slane %v4626, %v4663
      %v4666 = vunpack.c.l.s4 1966171168
      %v4667 = vunpack.c.0.s8 %v4666
      %v4668 = vlaneseq
      %v4669 = vshrl.u32 %v4668, 7
      %v4670 = vsub.s32 %v4667, %v4669
      %v4671 = vrot.slane %v4628, %v4670
      %v4673 = vunpack.c.l.s4 1966171168
      %v4674 = vunpack.c.0.s8 %v4673
      %v4675 = vlaneseq
      %v4676 = vshrl.u32 %v4675, 7
      %v4677 = vsub.s32 %v4674, %v4676
      %v4678 = vrot.slane %v4627, %v4677
      %v4680 = vunpack.c.l.s4 1966171168
      %v4681 = vunpack.c.0.s8 %v4680
      %v4682 = vlaneseq
      %v4683 = vshrl.u32 %v4682, 7
      %v4684 = vsub.s32 %v4681, %v4683
      %v4685 = vrot.slane %v4629, %v4684
      %v4686 = vcombine.low %v4636, %v4664
      %v4687 = vcombine.high %v4636, %v4664
      %v4688 = vcombine.low %v4643, %v4671
      %v4689 = vcombine.high %v4643, %v4671
      %v4690 = vcombine.low %v4650, %v4678
      %v4691 = vcombine.high %v4650, %v4678
      %v4692 = vcombine.low %v4657, %v4685
      %v4693 = vcombine.high %v4657, %v4685
      %v4694 = vcombine.low %v2645, %v2646
      %v4695 = vcombine.high %v2645, %v2646
      %v4696 = vcombine.low %v2647, %v2648
      %v4697 = vcombine.high %v2647, %v2648
      %v4698 = vcombine.low %v2649, %v2650
      %v4699 = vcombine.high %v2649, %v2650
      %v4700 = vcombine.low %v2651, %v2652
      %v4701 = vcombine.high %v2651, %v2652
      %v4703 = vunpack.c.l.s4 1966171168
      %v4704 = vunpack.c.0.s8 %v4703
      %v4705 = vlaneseq
      %v4706 = vshrl.u32 %v4705, 7
      %v4707 = vsub.s32 %v4704, %v4706
      %v4708 = vrot.slane %v4694, %v4707
      %v4710 = vunpack.c.l.s4 1966171168
      %v4711 = vunpack.c.0.s8 %v4710
      %v4712 = vlaneseq
      %v4713 = vshrl.u32 %v4712, 7
      %v4714 = vsub.s32 %v4711, %v4713
      %v4715 = vrot.slane %v4695, %v4714
      %v4717 = vunpack.c.l.s4 1966171168
      %v4718 = vunpack.c.0.s8 %v4717
      %v4719 = vlaneseq
      %v4720 = vshrl.u32 %v4719, 7
      %v4721 = vsub.s32 %v4718, %v4720
      %v4722 = vrot.slane %v4696, %v4721
      %v4724 = vunpack.c.l.s4 1966171168
      %v4725 = vunpack.c.0.s8 %v4724
      %v4726 = vlaneseq
      %v4727 = vshrl.u32 %v4726, 7
      %v4728 = vsub.s32 %v4725, %v4727
      %v4729 = vrot.slane %v4697, %v4728
      %v4731 = vunpack.c.l.s4 1966171168
      %v4732 = vunpack.c.0.s8 %v4731
      %v4733 = vlaneseq
      %v4734 = vshrl.u32 %v4733, 7
      %v4735 = vsub.s32 %v4732, %v4734
      %v4736 = vrot.slane %v4698, %v4735
      %v4738 = vunpack.c.l.s4 1966171168
      %v4739 = vunpack.c.0.s8 %v4738
      %v4740 = vlaneseq
      %v4741 = vshrl.u32 %v4740, 7
      %v4742 = vsub.s32 %v4739, %v4741
      %v4743 = vrot.slane %v4699, %v4742
      %v4745 = vunpack.c.l.s4 1966171168
      %v4746 = vunpack.c.0.s8 %v4745
      %v4747 = vlaneseq
      %v4748 = vshrl.u32 %v4747, 7
      %v4749 = vsub.s32 %v4746, %v4748
      %v4750 = vrot.slane %v4700, %v4749
      %v4752 = vunpack.c.l.s4 1966171168
      %v4753 = vunpack.c.0.s8 %v4752
      %v4754 = vlaneseq
      %v4755 = vshrl.u32 %v4754, 7
      %v4756 = vsub.s32 %v4753, %v4755
      %v4757 = vrot.slane %v4701, %v4756
      %v4758 = vcombine.low %v4708, %v4722
      %v4759 = vcombine.high %v4708, %v4722
      %v4760 = vcombine.low %v4715, %v4729
      %v4761 = vcombine.high %v4715, %v4729
      %v4762 = vcombine.low %v4736, %v4750
      %v4763 = vcombine.high %v4736, %v4750
      %v4764 = vcombine.low %v4743, %v4757
      %v4765 = vcombine.high %v4743, %v4757
      %v4767 = vunpack.c.l.s4 1966171168
      %v4768 = vunpack.c.0.s8 %v4767
      %v4769 = vlaneseq
      %v4770 = vshrl.u32 %v4769, 7
      %v4771 = vsub.s32 %v4768, %v4770
      %v4772 = vrot.slane %v4758, %v4771
      %v4774 = vunpack.c.l.s4 1966171168
      %v4775 = vunpack.c.0.s8 %v4774
      %v4776 = vlaneseq
      %v4777 = vshrl.u32 %v4776, 7
      %v4778 = vsub.s32 %v4775, %v4777
      %v4779 = vrot.slane %v4760, %v4778
      %v4781 = vunpack.c.l.s4 1966171168
      %v4782 = vunpack.c.0.s8 %v4781
      %v4783 = vlaneseq
      %v4784 = vshrl.u32 %v4783, 7
      %v4785 = vsub.s32 %v4782, %v4784
      %v4786 = vrot.slane %v4759, %v4785
      %v4788 = vunpack.c.l.s4 1966171168
      %v4789 = vunpack.c.0.s8 %v4788
      %v4790 = vlaneseq
      %v4791 = vshrl.u32 %v4790, 7
      %v4792 = vsub.s32 %v4789, %v4791
      %v4793 = vrot.slane %v4761, %v4792
      %v4795 = vunpack.c.l.s4 1966171168
      %v4796 = vunpack.c.0.s8 %v4795
      %v4797 = vlaneseq
      %v4798 = vshrl.u32 %v4797, 7
      %v4799 = vsub.s32 %v4796, %v4798
      %v4800 = vrot.slane %v4762, %v4799
      %v4802 = vunpack.c.l.s4 1966171168
      %v4803 = vunpack.c.0.s8 %v4802
      %v4804 = vlaneseq
      %v4805 = vshrl.u32 %v4804, 7
      %v4806 = vsub.s32 %v4803, %v4805
      %v4807 = vrot.slane %v4764, %v4806
      %v4809 = vunpack.c.l.s4 1966171168
      %v4810 = vunpack.c.0.s8 %v4809
      %v4811 = vlaneseq
      %v4812 = vshrl.u32 %v4811, 7
      %v4813 = vsub.s32 %v4810, %v4812
      %v4814 = vrot.slane %v4763, %v4813
      %v4816 = vunpack.c.l.s4 1966171168
      %v4817 = vunpack.c.0.s8 %v4816
      %v4818 = vlaneseq
      %v4819 = vshrl.u32 %v4818, 7
      %v4820 = vsub.s32 %v4817, %v4819
      %v4821 = vrot.slane %v4765, %v4820
      %v4822 = vcombine.low %v4772, %v4800
      %v4823 = vcombine.high %v4772, %v4800
      %v4824 = vcombine.low %v4779, %v4807
      %v4825 = vcombine.high %v4779, %v4807
      %v4826 = vcombine.low %v4786, %v4814
      %v4827 = vcombine.high %v4786, %v4814
      %v4828 = vcombine.low %v4793, %v4821
      %v4829 = vcombine.high %v4793, %v4821
      %v4830 = vcombine.low %v2653, %v2654
      %v4831 = vcombine.high %v2653, %v2654
      %v4832 = vcombine.low %v2655, %v2656
      %v4833 = vcombine.high %v2655, %v2656
      %v4834 = vcombine.low %v2657, %v2658
      %v4835 = vcombine.high %v2657, %v2658
      %v4836 = vcombine.low %v2659, %v2660
      %v4837 = vcombine.high %v2659, %v2660
      %v4839 = vunpack.c.l.s4 1966171168
      %v4840 = vunpack.c.0.s8 %v4839
      %v4841 = vlaneseq
      %v4842 = vshrl.u32 %v4841, 7
      %v4843 = vsub.s32 %v4840, %v4842
      %v4844 = vrot.slane %v4830, %v4843
      %v4846 = vunpack.c.l.s4 1966171168
      %v4847 = vunpack.c.0.s8 %v4846
      %v4848 = vlaneseq
      %v4849 = vshrl.u32 %v4848, 7
      %v4850 = vsub.s32 %v4847, %v4849
      %v4851 = vrot.slane %v4831, %v4850
      %v4853 = vunpack.c.l.s4 1966171168
      %v4854 = vunpack.c.0.s8 %v4853
      %v4855 = vlaneseq
      %v4856 = vshrl.u32 %v4855, 7
      %v4857 = vsub.s32 %v4854, %v4856
      %v4858 = vrot.slane %v4832, %v4857
      %v4860 = vunpack.c.l.s4 1966171168
      %v4861 = vunpack.c.0.s8 %v4860
      %v4862 = vlaneseq
      %v4863 = vshrl.u32 %v4862, 7
      %v4864 = vsub.s32 %v4861, %v4863
      %v4865 = vrot.slane %v4833, %v4864
      %v4867 = vunpack.c.l.s4 1966171168
      %v4868 = vunpack.c.0.s8 %v4867
      %v4869 = vlaneseq
      %v4870 = vshrl.u32 %v4869, 7
      %v4871 = vsub.s32 %v4868, %v4870
      %v4872 = vrot.slane %v4834, %v4871
      %v4874 = vunpack.c.l.s4 1966171168
      %v4875 = vunpack.c.0.s8 %v4874
      %v4876 = vlaneseq
      %v4877 = vshrl.u32 %v4876, 7
      %v4878 = vsub.s32 %v4875, %v4877
      %v4879 = vrot.slane %v4835, %v4878
      %v4881 = vunpack.c.l.s4 1966171168
      %v4882 = vunpack.c.0.s8 %v4881
      %v4883 = vlaneseq
      %v4884 = vshrl.u32 %v4883, 7
      %v4885 = vsub.s32 %v4882, %v4884
      %v4886 = vrot.slane %v4836, %v4885
      %v4888 = vunpack.c.l.s4 1966171168
      %v4889 = vunpack.c.0.s8 %v4888
      %v4890 = vlaneseq
      %v4891 = vshrl.u32 %v4890, 7
      %v4892 = vsub.s32 %v4889, %v4891
      %v4893 = vrot.slane %v4837, %v4892
      %v4894 = vcombine.low %v4844, %v4858
      %v4895 = vcombine.high %v4844, %v4858
      %v4896 = vcombine.low %v4851, %v4865
      %v4897 = vcombine.high %v4851, %v4865
      %v4898 = vcombine.low %v4872, %v4886
      %v4899 = vcombine.high %v4872, %v4886
      %v4900 = vcombine.low %v4879, %v4893
      %v4901 = vcombine.high %v4879, %v4893
      %v4903 = vunpack.c.l.s4 1966171168
      %v4904 = vunpack.c.0.s8 %v4903
      %v4905 = vlaneseq
      %v4906 = vshrl.u32 %v4905, 7
      %v4907 = vsub.s32 %v4904, %v4906
      %v4908 = vrot.slane %v4894, %v4907
      %v4910 = vunpack.c.l.s4 1966171168
      %v4911 = vunpack.c.0.s8 %v4910
      %v4912 = vlaneseq
      %v4913 = vshrl.u32 %v4912, 7
      %v4914 = vsub.s32 %v4911, %v4913
      %v4915 = vrot.slane %v4896, %v4914
      %v4917 = vunpack.c.l.s4 1966171168
      %v4918 = vunpack.c.0.s8 %v4917
      %v4919 = vlaneseq
      %v4920 = vshrl.u32 %v4919, 7
      %v4921 = vsub.s32 %v4918, %v4920
      %v4922 = vrot.slane %v4895, %v4921
      %v4924 = vunpack.c.l.s4 1966171168
      %v4925 = vunpack.c.0.s8 %v4924
      %v4926 = vlaneseq
      %v4927 = vshrl.u32 %v4926, 7
      %v4928 = vsub.s32 %v4925, %v4927
      %v4929 = vrot.slane %v4897, %v4928
      %v4931 = vunpack.c.l.s4 1966171168
      %v4932 = vunpack.c.0.s8 %v4931
      %v4933 = vlaneseq
      %v4934 = vshrl.u32 %v4933, 7
      %v4935 = vsub.s32 %v4932, %v4934
      %v4936 = vrot.slane %v4898, %v4935
      %v4938 = vunpack.c.l.s4 1966171168
      %v4939 = vunpack.c.0.s8 %v4938
      %v4940 = vlaneseq
      %v4941 = vshrl.u32 %v4940, 7
      %v4942 = vsub.s32 %v4939, %v4941
      %v4943 = vrot.slane %v4900, %v4942
      %v4945 = vunpack.c.l.s4 1966171168
      %v4946 = vunpack.c.0.s8 %v4945
      %v4947 = vlaneseq
      %v4948 = vshrl.u32 %v4947, 7
      %v4949 = vsub.s32 %v4946, %v4948
      %v4950 = vrot.slane %v4899, %v4949
      %v4952 = vunpack.c.l.s4 1966171168
      %v4953 = vunpack.c.0.s8 %v4952
      %v4954 = vlaneseq
      %v4955 = vshrl.u32 %v4954, 7
      %v4956 = vsub.s32 %v4953, %v4955
      %v4957 = vrot.slane %v4901, %v4956
      %v4958 = vcombine.low %v4908, %v4936
      %v4959 = vcombine.high %v4908, %v4936
      %v4960 = vcombine.low %v4915, %v4943
      %v4961 = vcombine.high %v4915, %v4943
      %v4962 = vcombine.low %v4922, %v4950
      %v4963 = vcombine.high %v4922, %v4950
      %v4964 = vcombine.low %v4929, %v4957
      %v4965 = vcombine.high %v4929, %v4957
      %v5094 = vadd.f32 %v2918, %v3054
      %v5095 = vadd.f32 %v5094, %v2922
      %v5096 = vadd.f32 %v5095, %v3058
      %v5097 = vadd.f32 %v5096, %v2919
      %v5098 = vadd.f32 %v5097, %v3055
      %v5099 = vadd.f32 %v5098, %v2923
      %v5100 = vadd.f32 %v5099, %v3059
      %v5101 = vadd.f32 %v5100, %v2920
      %v5102 = vadd.f32 %v5101, %v3056
      %v5103 = vadd.f32 %v5102, %v2924
      %v5104 = vadd.f32 %v5103, %v3060
      %v5105 = vadd.f32 %v5104, %v2921
      %v5106 = vadd.f32 %v5105, %v3057
      %v5107 = vadd.f32 %v5106, %v2925
      %v5108 = vadd.f32 %v5107, %v3061
      %v5109 = vrot.slane %v5108, 4
      %v5110 = vadd.f32 %v5108, %v5109
      %v5111 = vrot.slane %v5110, 2
      %v5112 = vadd.f32 %v5110, %v5111
      %v5113 = vrot.slane %v5112, 1
      %v5114 = vadd.f32 %v5112, %v5113
      %v5115 = vadd.f32 %v3190, %v3326
      %v5116 = vadd.f32 %v5115, %v3194
      %v5117 = vadd.f32 %v5116, %v3330
      %v5118 = vadd.f32 %v5117, %v3191
      %v5119 = vadd.f32 %v5118, %v3327
      %v5120 = vadd.f32 %v5119, %v3195
      %v5121 = vadd.f32 %v5120, %v3331
      %v5122 = vadd.f32 %v5121, %v3192
      %v5123 = vadd.f32 %v5122, %v3328
      %v5124 = vadd.f32 %v5123, %v3196
      %v5125 = vadd.f32 %v5124, %v3332
      %v5126 = vadd.f32 %v5125, %v3193
      %v5127 = vadd.f32 %v5126, %v3329
      %v5128 = vadd.f32 %v5127, %v3197
      %v5129 = vadd.f32 %v5128, %v3333
      %v5130 = vrot.slane %v5129, 4
      %v5131 = vadd.f32 %v5129, %v5130
      %v5132 = vrot.slane %v5131, 2
      %v5133 = vadd.f32 %v5131, %v5132
      %v5134 = vrot.slane %v5133, 1
      %v5135 = vadd.f32 %v5133, %v5134
      %v5136 = vadd.f32 %v3462, %v3598
      %v5137 = vadd.f32 %v5136, %v3466
      %v5138 = vadd.f32 %v5137, %v3602
      %v5139 = vadd.f32 %v5138, %v3463
      %v5140 = vadd.f32 %v5139, %v3599
      %v5141 = vadd.f32 %v5140, %v3467
      %v5142 = vadd.f32 %v5141, %v3603
      %v5143 = vadd.f32 %v5142, %v3464
      %v5144 = vadd.f32 %v5143, %v3600
      %v5145 = vadd.f32 %v5144, %v3468
      %v5146 = vadd.f32 %v5145, %v3604
      %v5147 = vadd.f32 %v5146, %v3465
      %v5148 = vadd.f32 %v5147, %v3601
      %v5149 = vadd.f32 %v5148, %v3469
      %v5150 = vadd.f32 %v5149, %v3605
      %v5151 = vrot.slane %v5150, 4
      %v5152 = vadd.f32 %v5150, %v5151
      %v5153 = vrot.slane %v5152, 2
      %v5154 = vadd.f32 %v5152, %v5153
      %v5155 = vrot.slane %v5154, 1
      %v5156 = vadd.f32 %v5154, %v5155
      %v5157 = vadd.f32 %v3734, %v3870
      %v5158 = vadd.f32 %v5157, %v3738
      %v5159 = vadd.f32 %v5158, %v3874
      %v5160 = vadd.f32 %v5159, %v3735
      %v5161 = vadd.f32 %v5160, %v3871
      %v5162 = vadd.f32 %v5161, %v3739
      %v5163 = vadd.f32 %v5162, %v3875
      %v5164 = vadd.f32 %v5163, %v3736
      %v5165 = vadd.f32 %v5164, %v3872
      %v5166 = vadd.f32 %v5165, %v3740
      %v5167 = vadd.f32 %v5166, %v3876
      %v5168 = vadd.f32 %v5167, %v3737
      %v5169 = vadd.f32 %v5168, %v3873
      %v5170 = vadd.f32 %v5169, %v3741
      %v5171 = vadd.f32 %v5170, %v3877
      %v5172 = vrot.slane %v5171, 4
      %v5173 = vadd.f32 %v5171, %v5172
      %v5174 = vrot.slane %v5173, 2
      %v5175 = vadd.f32 %v5173, %v5174
      %v5176 = vrot.slane %v5175, 1
      %v5177 = vadd.f32 %v5175, %v5176
      %v5178 = vadd.f32 %v4006, %v4142
      %v5179 = vadd.f32 %v5178, %v4010
      %v5180 = vadd.f32 %v5179, %v4146
      %v5181 = vadd.f32 %v5180, %v4007
      %v5182 = vadd.f32 %v5181, %v4143
      %v5183 = vadd.f32 %v5182, %v4011
      %v5184 = vadd.f32 %v5183, %v4147
      %v5185 = vadd.f32 %v5184, %v4008
      %v5186 = vadd.f32 %v5185, %v4144
      %v5187 = vadd.f32 %v5186, %v4012
      %v5188 = vadd.f32 %v5187, %v4148
      %v5189 = vadd.f32 %v5188, %v4009
      %v5190 = vadd.f32 %v5189, %v4145
      %v5191 = vadd.f32 %v5190, %v4013
      %v5192 = vadd.f32 %v5191, %v4149
      %v5193 = vrot.slane %v5192, 4
      %v5194 = vadd.f32 %v5192, %v5193
      %v5195 = vrot.slane %v5194, 2
      %v5196 = vadd.f32 %v5194, %v5195
      %v5197 = vrot.slane %v5196, 1
      %v5198 = vadd.f32 %v5196, %v5197
      %v5199 = vadd.f32 %v4278, %v4414
      %v5200 = vadd.f32 %v5199, %v4282
      %v5201 = vadd.f32 %v5200, %v4418
      %v5202 = vadd.f32 %v5201, %v4279
      %v5203 = vadd.f32 %v5202, %v4415
      %v5204 = vadd.f32 %v5203, %v4283
      %v5205 = vadd.f32 %v5204, %v4419
      %v5206 = vadd.f32 %v5205, %v4280
      %v5207 = vadd.f32 %v5206, %v4416
      %v5208 = vadd.f32 %v5207, %v4284
      %v5209 = vadd.f32 %v5208, %v4420
      %v5210 = vadd.f32 %v5209, %v4281
      %v5211 = vadd.f32 %v5210, %v4417
      %v5212 = vadd.f32 %v5211, %v4285
      %v5213 = vadd.f32 %v5212, %v4421
      %v5214 = vrot.slane %v5213, 4
      %v5215 = vadd.f32 %v5213, %v5214
      %v5216 = vrot.slane %v5215, 2
      %v5217 = vadd.f32 %v5215, %v5216
      %v5218 = vrot.slane %v5217, 1
      %v5219 = vadd.f32 %v5217, %v5218
      %v5220 = vadd.f32 %v4550, %v4686
      %v5221 = vadd.f32 %v5220, %v4554
      %v5222 = vadd.f32 %v5221, %v4690
      %v5223 = vadd.f32 %v5222, %v4551
      %v5224 = vadd.f32 %v5223, %v4687
      %v5225 = vadd.f32 %v5224, %v4555
      %v5226 = vadd.f32 %v5225, %v4691
      %v5227 = vadd.f32 %v5226, %v4552
      %v5228 = vadd.f32 %v5227, %v4688
      %v5229 = vadd.f32 %v5228, %v4556
      %v5230 = vadd.f32 %v5229, %v4692
      %v5231 = vadd.f32 %v5230, %v4553
      %v5232 = vadd.f32 %v5231, %v4689
      %v5233 = vadd.f32 %v5232, %v4557
      %v5234 = vadd.f32 %v5233, %v4693
      %v5235 = vrot.slane %v5234, 4
      %v5236 = vadd.f32 %v5234, %v5235
      %v5237 = vrot.slane %v5236, 2
      %v5238 = vadd.f32 %v5236, %v5237
      %v5239 = vrot.slane %v5238, 1
      %v5240 = vadd.f32 %v5238, %v5239
      %v5241 = vadd.f32 %v4822, %v4958
      %v5242 = vadd.f32 %v5241, %v4826
      %v5243 = vadd.f32 %v5242, %v4962
      %v5244 = vadd.f32 %v5243, %v4823
      %v5245 = vadd.f32 %v5244, %v4959
      %v5246 = vadd.f32 %v5245, %v4827
      %v5247 = vadd.f32 %v5246, %v4963
      %v5248 = vadd.f32 %v5247, %v4824
      %v5249 = vadd.f32 %v5248, %v4960
      %v5250 = vadd.f32 %v5249, %v4828
      %v5251 = vadd.f32 %v5250, %v4964
      %v5252 = vadd.f32 %v5251, %v4825
      %v5253 = vadd.f32 %v5252, %v4961
      %v5254 = vadd.f32 %v5253, %v4829
      %v5255 = vadd.f32 %v5254, %v4965
      %v5256 = vrot.slane %v5255, 4
      %v5257 = vadd.f32 %v5255, %v5256
      %v5258 = vrot.slane %v5257, 2
      %v5259 = vadd.f32 %v5257, %v5258
      %v5260 = vrot.slane %v5259, 1
      %v5261 = vadd.f32 %v5259, %v5260
      %vm5270 = vcmask 1041409
      %v5271 = vsel %vm5270, %v5135, %v5114
      %vm5272 = vcmask 1042434
      %v5273 = vsel %vm5272, %v5156, %v5271
      %vm5274 = vcmask 1043459
      %v5275 = vsel %vm5274, %v5177, %v5273
      %vm5276 = vcmask 1044484
      %v5277 = vsel %vm5276, %v5198, %v5275
      %vm5278 = vcmask 1045509
      %v5279 = vsel %vm5278, %v5219, %v5277
      %vm5280 = vcmask 1046534
      %v5281 = vsel %vm5280, %v5240, %v5279
      %vm5282 = vcmask 1047559
      %v5283 = vsel %vm5282, %v5261, %v5281
      %v5285 = vadd.f32 %v2661, %v5283
      %5286 = vst [vmem:[#allocation2] sm:$0xff] %v5285
      %p5287 = scmp.eq.s32.totalorder %s21, 1
      // Predicated region
      $region45: #{model_transform_wrapper_forward.1} parent=39 // pred_check
        %p5288 = pneg %p5287
      $region46: #{model_transform_wrapper_forward.1} parent=39 // pred_check_branch
        %5290 = sbr.rel (%p5288) target = $region48
      $region47: #{model_transform_wrapper_forward.1} parent=39 // pred_region
        %v5291 = vld [vmem:[#allocation2] sm:$0xff]
        %v5292 = vmul.f32 %v5291, 0.00390625
        %v5293 = vpack.c.bf16 %v5292, %v5292
        %v5294 = vld [vmem:[%s3] sm:$0xf]
        %v5295 = vld [vmem:[%s3 + $0x4] sm:$0xf]
        %v5296 = vld [vmem:[%s3 + $0x8] sm:$0xf]
        %v5297 = vld [vmem:[%s3 + $0xc] sm:$0xf]
        %v5298 = vld [vmem:[%s3 + $0x10] sm:$0xf]
        %v5299 = vld [vmem:[%s3 + $0x14] sm:$0xf]
        %v5300 = vld [vmem:[%s3 + $0x18] sm:$0xf]
        %v5301 = vld [vmem:[%s3 + $0x1c] sm:$0xf]
        %v5302 = vld [vmem:[%s3 + $0x20] sm:$0xf]
        %v5303 = vld [vmem:[%s3 + $0x24] sm:$0xf]
        %v5304 = vld [vmem:[%s3 + $0x28] sm:$0xf]
        %v5305 = vld [vmem:[%s3 + $0x2c] sm:$0xf]
        %v5306 = vld [vmem:[%s3 + $0x30] sm:$0xf]
        %v5307 = vld [vmem:[%s3 + $0x34] sm:$0xf]
        %v5308 = vld [vmem:[%s3 + $0x38] sm:$0xf]
        %v5309 = vld [vmem:[%s3 + $0x3c] sm:$0xf]
        %v5310 = vld [vmem:[%s4] sm:$0x1]
        %v5312 = vlaneseq
        %v5313 = vshrl.u32 %v5312, 7
        %v5314 = vsub.s32 0, %v5313
        %v5315 = vrot.slane %v5310, %v5314
        %v5333 = vunpack.c.l.b16 %v5294
        %v5334 = vunpack.c.l.b16 %v5295
        %v5335 = vunpack.c.l.b16 %v5296
        %v5336 = vunpack.c.l.b16 %v5297
        %v5337 = vunpack.c.l.b16 %v5298
        %v5338 = vunpack.c.l.b16 %v5299
        %v5339 = vunpack.c.l.b16 %v5300
        %v5340 = vunpack.c.l.b16 %v5301
        %v5341 = vunpack.c.l.b16 %v5302
        %v5342 = vunpack.c.l.b16 %v5303
        %v5343 = vunpack.c.l.b16 %v5304
        %v5344 = vunpack.c.l.b16 %v5305
        %v5345 = vunpack.c.l.b16 %v5306
        %v5346 = vunpack.c.l.b16 %v5307
        %v5347 = vunpack.c.l.b16 %v5308
        %v5348 = vunpack.c.l.b16 %v5309
        %v5349 = vpack.c.b16 %v5334, %v5333
        %v5350 = vpack.c.b16 %v5336, %v5335
        %v5351 = vpack.c.b16 %v5338, %v5337
        %v5352 = vpack.c.b16 %v5340, %v5339
        %v5353 = vpack.c.b16 %v5342, %v5341
        %v5354 = vpack.c.b16 %v5344, %v5343
        %v5355 = vpack.c.b16 %v5346, %v5345
        %v5356 = vpack.c.b16 %v5348, %v5347
        %5365 = vmatprep.subr.bf16.mxu0 0
        %5366 = vmatpush1.bf16.msra.mxu0 %v5356
        %5367 = vmatprep.subr.bf16.mxu0 0
        %5368 = vmatpush1.bf16.msra.mxu0 %v5355
        %5369 = vmatprep.subr.bf16.mxu0 0
        %5370 = vmatpush1.bf16.msra.mxu0 %v5354
        %5371 = vmatprep.subr.bf16.mxu0 0
        %5372 = vmatpush1.bf16.msra.mxu0 %v5353
        %5373 = vmatprep.subr.bf16.mxu0 0
        %5374 = vmatpush1.bf16.msra.mxu0 %v5352
        %5375 = vmatprep.subr.bf16.mxu0 0
        %5376 = vmatpush1.bf16.msra.mxu0 %v5351
        %5377 = vmatprep.subr.bf16.mxu0 0
        %5378 = vmatpush1.bf16.msra.mxu0 %v5350
        %5379 = vmatprep.subr.bf16.mxu0 0
        %5380 = vmatpush1.bf16.msra.mxu0 %v5349
        %5381 = vmatprep.subr.bf16.mxu0 0
        %5382 = vmatpush2.bf16.msra.mxu0 0
        %5383 = vmatprep.subr.bf16.mxu0 0
        %5384 = vmatpush2.bf16.msra.mxu0 0
        %5385 = vmatprep.subr.bf16.mxu0 0
        %5386 = vmatpush2.bf16.msra.mxu0 0
        %5387 = vmatprep.subr.bf16.mxu0 0
        %5388 = vmatpush2.bf16.msra.mxu0 0
        %5389 = vmatprep.subr.bf16.mxu0 0
        %5390 = vmatpush2.bf16.msra.mxu0 0
        %5391 = vmatprep.subr.bf16.mxu0 0
        %5392 = vmatpush2.bf16.msra.mxu0 0
        %5393 = vmatprep.subr.bf16.mxu0 0
        %5394 = vmatpush2.bf16.msra.mxu0 0
        %5395 = vmatprep.subr.bf16.mxu0 0
        %5396 = vmatpush2.bf16.msra.mxu0 0
        %5397 = vmatprep.mubr.bf16.mxu0 0
        %5398 = vmatmul.mubr.bf16.gmra.mxu0 %v5293
        %v5399 = vpop.f32.mrf.mxu0
        %v5400 = vadd.f32 %v5315, %v5399
        %v5401 = vpop.f32.mrf.mxu0
        %v5402 = vpop.f32.mrf.mxu0
        %v5403 = vpop.f32.mrf.mxu0
        %5404 = vdwg.mxu0
        %5405 = vst [vmem:[%s239] sm:$0xff] %v5400
      $region48: #{model_transform_wrapper_forward.1} parent=39 // pred_fallthru
        _
      %p5406 = scmp.lt.s32.totalorder %s20, 1
      %s5407 = scalar_select %p5406, %s20, 1
      %s5408 = smul.addr %s5407, 8
      %s5409 = scalar_lea.vmem %s5, %s5408
      // Predicated region
      $region49: #{model_transform_wrapper_forward.1} parent=39 // pred_check
        %p5410 = pneg %p156
      $region50: #{model_transform_wrapper_forward.1} parent=39 // pred_check_branch
        %5412 = sbr.rel (%p5410) target = $region52
      $region51: #{model_transform_wrapper_forward.1} parent=39 // pred_region
        _
      $region52: #{model_transform_wrapper_forward.1} parent=39 // pred_fallthru
        _
    $region40: #{model_transform_wrapper_forward.1} parent=5 // pred_fallthru
      _
    %p5413 = scmp.le.s32.totalorder 2, %s11
    // Predicated region
    $region53: #{model_transform_wrapper_forward.1} parent=5 // pred_check
      %p5414 = pneg %p5413
    $region54: #{model_transform_wrapper_forward.1} parent=5 // pred_check_branch
      %5416 = sbr.rel (%p5414) target = $region56
    $region55: #{model_transform_wrapper_forward.1} parent=5 // pred_region
      %s5417 = ssub.s32 %s11, 2
      // Predicated region
      $region57: #{model_transform_wrapper_forward.1} parent=55 // pred_check
        %p5418 = pneg %p162
      $region58: #{model_transform_wrapper_forward.1} parent=55 // pred_check_branch
        %5420 = sbr.rel (%p5418) target = $region60
      $region59: #{model_transform_wrapper_forward.1} parent=55 // pred_region
        %p5421 = scmp.lt.s32.totalorder %s22, 1
        %s5422 = scalar_select %p5421, %s22, 1
        %s5423 = smul.addr %s5422, 8
        %s5424 = scalar_lea.vmem %s5, %s5423
      $region60: #{model_transform_wrapper_forward.1} parent=55 // pred_fallthru
        _
    $region56: #{model_transform_wrapper_forward.1} parent=5 // pred_fallthru
      _
  $region6: #{model_transform_wrapper_forward.1} parent=0 // loop_footer
    %s15 = sadd.s32 1, %s11
  $region7: #{model_transform_wrapper_forward.1} parent=0 // loop_footer_branch
    %10 = sbr.rel target = $region3
  $region8: #{model_transform_wrapper_forward.1} parent=0 // loop_exit
    _

</llo_original>
